<compile_context>
chip_gen: v7x
topology: tpu7x:2x2x1
jax: 0.10.0
libtpu: 0.0.40
codegen_flags: <defaults>
</compile_context>

<pallas_src>
import jax
import jax.numpy as jnp
from jax.experimental import pallas as pl
from jax.experimental.pallas import tpu as pltpu


def trunk_net_kernel(xt_ref,
                     w1_ref, b1_ref,
                     w2_ref, b2_ref, eps1_ref,
                     w3_ref, b3_ref, eps2_ref,
                     w4_ref, b4_ref,
                     w5_ref, b5_ref,
                     out_ref):
    xt = xt_ref[...]                                       # (2, TM) feature-major tile
    w1 = w1_ref[...]                                       # (256, 2)

    # layer1 (K=2): two VPU broadcast FMAs instead of an MXU matmul.
    h = w1[:, 0:1] * xt[0:1, :] + w1[:, 1:2] * xt[1:2, :] + b1_ref[...]
    h = jnp.maximum(h, 0.0)                                # (256, TM), lane-dense

    # layer2 (MXU): (8, 256) @ (256, TM) -> (8, TM), lane-dense.
    z2 = jnp.dot(w2_ref[...], h, preferred_element_type=jnp.float32) + b2_ref[...]
    # relu(z) + eps * heaviside(z, 0)  ==  where(z > 0, z + eps, 0)
    h = jnp.where(z2 > 0.0, z2 + eps1_ref[...], 0.0)       # (8, TM)

    # layer3 (8x8): kept OFF the MXU -- 8 VPU broadcast FMAs (frees the
    # vector-extended slot, avoids MXU fill/drain for ~0.1 MFLOP).
    w3 = w3_ref[...]                                       # (8, 8)
    z3 = b3_ref[...] + w3[:, 0:1] * h[0:1, :]
    for k in range(1, 8):
        z3 = z3 + w3[:, k:k + 1] * h[k:k + 1, :]
    h = jnp.where(z3 > 0.0, z3 + eps2_ref[...], 0.0)       # (8, TM)

    # layer4 (MXU): (256, 8) @ (8, TM) -> (256, TM).
    h = jnp.dot(w4_ref[...], h, preferred_element_type=jnp.float32) + b4_ref[...]
    h = jnp.maximum(h, 0.0)                                # (256, TM)

    # layer5: (1, 256) @ (256, TM) -> (1, TM) lane-dense row -> unmasked vst.
    out = jnp.dot(w5_ref[...], h, preferred_element_type=jnp.float32) + b5_ref[...]
    out_ref[...] = out.astype(out_ref.dtype)               # (1, TM)


def trunk_net_forward(x, params, *, tm=2048, vmem_limit_bytes=None):
    """x: (N, 2) float32, params in PyTorch layout.  Returns (N, 1) float32.

    tm is the batch tile (lane axis), must be a multiple of 128.  Defaults to
    2048; on v5e/v7x keep tm <= ~4096, on v6e it can go to ~8192 (the scoped
    VMEM limit is raised automatically for large tiles).
    """
    (w1, b1, w2, b2, eps1, w3, b3, eps2, w4, b4, w5, b5) = params
    N = x.shape[0]
    assert x.shape[1] == 2
    assert tm % 128 == 0, "batch tile must be a multiple of the lane width (128)"

    num_tiles = pl.cdiv(N, tm)
    n_pad = num_tiles * tm

    # Feature-major layout: (2, N); zero-pad the batch (lane) axis to the tile.
    xt = x.T
    if n_pad != N:
        xt = jnp.pad(xt, ((0, 0), (0, n_pad - N)))

    # Biases / epsilons as (out, 1) columns so they broadcast along the lane
    # (batch) axis inside the kernel.  Weights stay in PyTorch (out, in) layout.
    b1c = b1.reshape(-1, 1)
    b2c = b2.reshape(-1, 1)
    b3c = b3.reshape(-1, 1)
    b4c = b4.reshape(-1, 1)
    b5c = b5.reshape(-1, 1)
    e1c = eps1.reshape(-1, 1)
    e2c = eps2.reshape(-1, 1)

    if vmem_limit_bytes is None and tm > 4096:
        # The (256, tm) f32 intermediates are tm KiB each; raise the default
        # scoped VMEM limit (32 MiB v6e/v7x, 16 MiB v5e) for very large tiles.
        vmem_limit_bytes = 96 * 1024 * 1024

    def full_spec(a):
        shape = a.shape
        # Whole array resident in VMEM; constant index map -> fetched once.
        return pl.BlockSpec(shape, lambda i: (0,) * len(shape))

    out = pl.pallas_call(
        trunk_net_kernel,
        out_shape=jax.ShapeDtypeStruct((1, n_pad), jnp.float32),
        grid_spec=pltpu.PrefetchScalarGridSpec(
            num_scalar_prefetch=0,
            grid=(num_tiles,),
            in_specs=[
                pl.BlockSpec((2, tm), lambda i: (0, i)),   # x tile (lane-dense)
                full_spec(w1), full_spec(b1c),
                full_spec(w2), full_spec(b2c), full_spec(e1c),
                full_spec(w3), full_spec(b3c), full_spec(e2c),
                full_spec(w4), full_spec(b4c),
                full_spec(w5), full_spec(b5c),
            ],
            out_specs=pl.BlockSpec((1, tm), lambda i: (0, i)),  # lane-dense row
        ),
        compiler_params=pltpu.CompilerParams(
            dimension_semantics=("parallel",),             # batch axis -> megacore/v7x
            vmem_limit_bytes=vmem_limit_bytes),
    )(xt, w1, b1c, w2, b2c, e1c, w3, b3c, e2c, w4, b4c, w5, b5c)

    return out[0, :N][:, None]


def xavier_normal(key, shape):
    # nn.init.xavier_normal_ with gain=1 on a PyTorch (out, in) tensor:
    # std = sqrt(2 / (fan_in + fan_out)).
    fan_out, fan_in = shape
    std = jnp.sqrt(2.0 / (fan_in + fan_out))
    return std * jax.random.normal(key, shape, dtype=jnp.float32)


def init_params(key):
    ks = jax.random.split(key, 7)
    # PyTorch layout: weights (out, in), biases zero.
    w1 = xavier_normal(ks[0], (256, 2));   b1 = jnp.zeros((256,), jnp.float32)
    w2 = xavier_normal(ks[1], (8, 256));   b2 = jnp.zeros((8,), jnp.float32)
    w3 = xavier_normal(ks[2], (8, 8));     b3 = jnp.zeros((8,), jnp.float32)
    w4 = xavier_normal(ks[3], (256, 8));   b4 = jnp.zeros((256,), jnp.float32)
    w5 = xavier_normal(ks[4], (1, 256));   b5 = jnp.zeros((1,), jnp.float32)
    eps1 = xavier_normal(ks[5], (1, 8))
    eps2 = xavier_normal(ks[6], (1, 8))
    return (w1, b1, w2, b2, eps1, w3, b3, eps2, w4, b4, w5, b5)


def reference_forward(x, params):
    (w1, b1, w2, b2, eps1, w3, b3, eps2, w4, b4, w5, b5) = params
    h = jnp.maximum(x @ w1.T + b1, 0.0)
    z2 = h @ w2.T + b2
    h = jnp.maximum(z2, 0.0) + eps1 * (z2 > 0.0).astype(jnp.float32)
    z3 = h @ w3.T + b3
    h = jnp.maximum(z3, 0.0) + eps2 * (z3 > 0.0).astype(jnp.float32)
    h = jnp.maximum(h @ w4.T + b4, 0.0)
    return h @ w5.T + b5


if __name__ == "__main__":
    key = jax.random.PRNGKey(0)
    k_param, k_x = jax.random.split(key)

    params = init_params(k_param)

    # Small demo: non-multiple N exercises the padded tail; tm=512 is used
    # only so this tiny problem still produces an even 2-step grid (feeds both
    # v7x TensorCores).  Production default is tm=2048.
    N = 1000
    x = jax.random.normal(k_x, (N, 2), dtype=jnp.float32)

    out = trunk_net_forward(x, params, tm=512)
    out = jax.block_until_ready(out)

    ref = reference_forward(x, params)
    assert out.shape == (N, 1)
    assert jnp.allclose(out, ref, atol=1e-4, rtol=1e-3), "mismatch vs reference"

    print("KERNEL_OK")
</pallas_src>

<mosaic_0001>
module attributes {stable_mosaic.version = 11 : i64} {
  func.func @trunk_net_kernel(%arg0: i32, %arg1: memref<2x512xf32, #tpu.memory_space<vmem>>, %arg2: memref<256x2xf32, #tpu.memory_space<vmem>>, %arg3: memref<256x1xf32, #tpu.memory_space<vmem>>, %arg4: memref<8x256xf32, #tpu.memory_space<vmem>>, %arg5: memref<8x1xf32, #tpu.memory_space<vmem>>, %arg6: memref<8x1xf32, #tpu.memory_space<vmem>>, %arg7: memref<8x8xf32, #tpu.memory_space<vmem>>, %arg8: memref<8x1xf32, #tpu.memory_space<vmem>>, %arg9: memref<8x1xf32, #tpu.memory_space<vmem>>, %arg10: memref<256x8xf32, #tpu.memory_space<vmem>>, %arg11: memref<256x1xf32, #tpu.memory_space<vmem>>, %arg12: memref<1x256xf32, #tpu.memory_space<vmem>>, %arg13: memref<1x1xf32, #tpu.memory_space<vmem>>, %arg14: memref<1x512xf32, #tpu.memory_space<vmem>>) attributes {dimension_semantics = [#tpu.dimension_semantics<parallel>], iteration_bounds = array<i64: 2>, scalar_prefetch = 0 : i64, scratch_operands = 0 : i64, tpu.core_type = #tpu.core_type<tc>, window_params = [{transform_indices = @transform_0, window_bounds = array<i64: 2, 512>}, {pipeline_mode = #tpu.pipeline_mode<synchronous>, transform_indices = @transform_1, window_bounds = array<i64: 256, 2>}, {pipeline_mode = #tpu.pipeline_mode<synchronous>, transform_indices = @transform_2, window_bounds = array<i64: 256, 1>}, {pipeline_mode = #tpu.pipeline_mode<synchronous>, transform_indices = @transform_3, window_bounds = array<i64: 8, 256>}, {pipeline_mode = #tpu.pipeline_mode<synchronous>, transform_indices = @transform_4, window_bounds = array<i64: 8, 1>}, {pipeline_mode = #tpu.pipeline_mode<synchronous>, transform_indices = @transform_5, window_bounds = array<i64: 8, 1>}, {pipeline_mode = #tpu.pipeline_mode<synchronous>, transform_indices = @transform_6, window_bounds = array<i64: 8, 8>}, {pipeline_mode = #tpu.pipeline_mode<synchronous>, transform_indices = @transform_7, window_bounds = array<i64: 8, 1>}, {pipeline_mode = #tpu.pipeline_mode<synchronous>, transform_indices = @transform_8, window_bounds = array<i64: 8, 1>}, {pipeline_mode = #tpu.pipeline_mode<synchronous>, transform_indices = @transform_9, window_bounds = array<i64: 256, 8>}, {pipeline_mode = #tpu.pipeline_mode<synchronous>, transform_indices = @transform_10, window_bounds = array<i64: 256, 1>}, {pipeline_mode = #tpu.pipeline_mode<synchronous>, transform_indices = @transform_11, window_bounds = array<i64: 1, 256>}, {pipeline_mode = #tpu.pipeline_mode<synchronous>, transform_indices = @transform_12, window_bounds = array<i64: 1, 1>}, {transform_indices = @transform_13, window_bounds = array<i64: 1, 512>}]} {
    %c0 = arith.constant 0 : index
    %c0_0 = arith.constant 0 : index
    %0 = vector.load %arg1[%c0, %c0_0] : memref<2x512xf32, #tpu.memory_space<vmem>>, vector<2x512xf32>
    %c0_1 = arith.constant 0 : index
    %c0_2 = arith.constant 0 : index
    %1 = vector.load %arg2[%c0_1, %c0_2] : memref<256x2xf32, #tpu.memory_space<vmem>>, vector<256x2xf32>
    %2 = vector.extract_strided_slice %1 {offsets = [0, 0], sizes = [256, 1], strides = [1, 1]} : vector<256x2xf32> to vector<256x1xf32>
    %3 = vector.extract_strided_slice %0 {offsets = [0, 0], sizes = [1, 512], strides = [1, 1]} : vector<2x512xf32> to vector<1x512xf32>
    %4 = vector.broadcast %2 : vector<256x1xf32> to vector<256x512xf32>
    %5 = vector.broadcast %3 : vector<1x512xf32> to vector<256x512xf32>
    %6 = arith.mulf %4, %5 : vector<256x512xf32>
    %7 = vector.extract_strided_slice %1 {offsets = [0, 1], sizes = [256, 1], strides = [1, 1]} : vector<256x2xf32> to vector<256x1xf32>
    %8 = vector.extract_strided_slice %0 {offsets = [1, 0], sizes = [1, 512], strides = [1, 1]} : vector<2x512xf32> to vector<1x512xf32>
    %9 = vector.broadcast %7 : vector<256x1xf32> to vector<256x512xf32>
    %10 = vector.broadcast %8 : vector<1x512xf32> to vector<256x512xf32>
    %11 = arith.mulf %9, %10 : vector<256x512xf32>
    %12 = arith.addf %6, %11 : vector<256x512xf32>
    %c0_3 = arith.constant 0 : index
    %c0_4 = arith.constant 0 : index
    %13 = vector.load %arg3[%c0_3, %c0_4] : memref<256x1xf32, #tpu.memory_space<vmem>>, vector<256x1xf32>
    %14 = vector.broadcast %13 : vector<256x1xf32> to vector<256x512xf32>
    %15 = arith.addf %12, %14 : vector<256x512xf32>
    %cst = arith.constant 0.000000e+00 : f32
    %16 = vector.broadcast %cst : f32 to vector<256x512xf32>
    %17 = arith.maximumf %15, %16 : vector<256x512xf32>
    %c0_5 = arith.constant 0 : index
    %c0_6 = arith.constant 0 : index
    %18 = vector.load %arg4[%c0_5, %c0_6] : memref<8x256xf32, #tpu.memory_space<vmem>>, vector<8x256xf32>
    %cst_7 = arith.constant dense<0.000000e+00> : vector<8x512xf32>
    %19 = tpu.matmul %18, %17, %cst_7 {dimension_numbers = #tpu.dot_dimension_numbers<[1], [0], [0], [1], [0, 0, 1, 1], [], []>} : vector<8x256xf32>, vector<256x512xf32>, vector<8x512xf32> -> vector<8x512xf32>
    %c0_8 = arith.constant 0 : index
    %c0_9 = arith.constant 0 : index
    %20 = vector.load %arg5[%c0_8, %c0_9] : memref<8x1xf32, #tpu.memory_space<vmem>>, vector<8x1xf32>
    %21 = vector.broadcast %20 : vector<8x1xf32> to vector<8x512xf32>
    %22 = arith.addf %19, %21 : vector<8x512xf32>
    %cst_10 = arith.constant 0.000000e+00 : f32
    %23 = vector.broadcast %cst_10 : f32 to vector<8x512xf32>
    %24 = arith.cmpf ogt, %22, %23 : vector<8x512xf32>
    %c0_11 = arith.constant 0 : index
    %c0_12 = arith.constant 0 : index
    %25 = vector.load %arg6[%c0_11, %c0_12] : memref<8x1xf32, #tpu.memory_space<vmem>>, vector<8x1xf32>
    %26 = vector.broadcast %25 : vector<8x1xf32> to vector<8x512xf32>
    %27 = arith.addf %22, %26 : vector<8x512xf32>
    %cst_13 = arith.constant 0.000000e+00 : f32
    %28 = vector.broadcast %cst_13 : f32 to vector<8x512xf32>
    %29 = arith.select %24, %27, %28 : vector<8x512xi1>, vector<8x512xf32>
    %c0_14 = arith.constant 0 : index
    %c0_15 = arith.constant 0 : index
    %30 = vector.load %arg7[%c0_14, %c0_15] : memref<8x8xf32, #tpu.memory_space<vmem>>, vector<8x8xf32>
    %c0_16 = arith.constant 0 : index
    %c0_17 = arith.constant 0 : index
    %31 = vector.load %arg8[%c0_16, %c0_17] : memref<8x1xf32, #tpu.memory_space<vmem>>, vector<8x1xf32>
    %32 = vector.extract_strided_slice %30 {offsets = [0, 0], sizes = [8, 1], strides = [1, 1]} : vector<8x8xf32> to vector<8x1xf32>
    %33 = vector.extract_strided_slice %29 {offsets = [0, 0], sizes = [1, 512], strides = [1, 1]} : vector<8x512xf32> to vector<1x512xf32>
    %34 = vector.broadcast %32 : vector<8x1xf32> to vector<8x512xf32>
    %35 = vector.broadcast %33 : vector<1x512xf32> to vector<8x512xf32>
    %36 = arith.mulf %34, %35 : vector<8x512xf32>
    %37 = vector.broadcast %31 : vector<8x1xf32> to vector<8x512xf32>
    %38 = arith.addf %37, %36 : vector<8x512xf32>
    %39 = vector.extract_strided_slice %30 {offsets = [0, 1], sizes = [8, 1], strides = [1, 1]} : vector<8x8xf32> to vector<8x1xf32>
    %40 = vector.extract_strided_slice %29 {offsets = [1, 0], sizes = [1, 512], strides = [1, 1]} : vector<8x512xf32> to vector<1x512xf32>
    %41 = vector.broadcast %39 : vector<8x1xf32> to vector<8x512xf32>
    %42 = vector.broadcast %40 : vector<1x512xf32> to vector<8x512xf32>
    %43 = arith.mulf %41, %42 : vector<8x512xf32>
    %44 = arith.addf %38, %43 : vector<8x512xf32>
    %45 = vector.extract_strided_slice %30 {offsets = [0, 2], sizes = [8, 1], strides = [1, 1]} : vector<8x8xf32> to vector<8x1xf32>
    %46 = vector.extract_strided_slice %29 {offsets = [2, 0], sizes = [1, 512], strides = [1, 1]} : vector<8x512xf32> to vector<1x512xf32>
    %47 = vector.broadcast %45 : vector<8x1xf32> to vector<8x512xf32>
    %48 = vector.broadcast %46 : vector<1x512xf32> to vector<8x512xf32>
    %49 = arith.mulf %47, %48 : vector<8x512xf32>
    %50 = arith.addf %44, %49 : vector<8x512xf32>
    %51 = vector.extract_strided_slice %30 {offsets = [0, 3], sizes = [8, 1], strides = [1, 1]} : vector<8x8xf32> to vector<8x1xf32>
    %52 = vector.extract_strided_slice %29 {offsets = [3, 0], sizes = [1, 512], strides = [1, 1]} : vector<8x512xf32> to vector<1x512xf32>
    %53 = vector.broadcast %51 : vector<8x1xf32> to vector<8x512xf32>
    %54 = vector.broadcast %52 : vector<1x512xf32> to vector<8x512xf32>
    %55 = arith.mulf %53, %54 : vector<8x512xf32>
    %56 = arith.addf %50, %55 : vector<8x512xf32>
    %57 = vector.extract_strided_slice %30 {offsets = [0, 4], sizes = [8, 1], strides = [1, 1]} : vector<8x8xf32> to vector<8x1xf32>
    %58 = vector.extract_strided_slice %29 {offsets = [4, 0], sizes = [1, 512], strides = [1, 1]} : vector<8x512xf32> to vector<1x512xf32>
    %59 = vector.broadcast %57 : vector<8x1xf32> to vector<8x512xf32>
    %60 = vector.broadcast %58 : vector<1x512xf32> to vector<8x512xf32>
    %61 = arith.mulf %59, %60 : vector<8x512xf32>
    %62 = arith.addf %56, %61 : vector<8x512xf32>
    %63 = vector.extract_strided_slice %30 {offsets = [0, 5], sizes = [8, 1], strides = [1, 1]} : vector<8x8xf32> to vector<8x1xf32>
    %64 = vector.extract_strided_slice %29 {offsets = [5, 0], sizes = [1, 512], strides = [1, 1]} : vector<8x512xf32> to vector<1x512xf32>
    %65 = vector.broadcast %63 : vector<8x1xf32> to vector<8x512xf32>
    %66 = vector.broadcast %64 : vector<1x512xf32> to vector<8x512xf32>
    %67 = arith.mulf %65, %66 : vector<8x512xf32>
    %68 = arith.addf %62, %67 : vector<8x512xf32>
    %69 = vector.extract_strided_slice %30 {offsets = [0, 6], sizes = [8, 1], strides = [1, 1]} : vector<8x8xf32> to vector<8x1xf32>
    %70 = vector.extract_strided_slice %29 {offsets = [6, 0], sizes = [1, 512], strides = [1, 1]} : vector<8x512xf32> to vector<1x512xf32>
    %71 = vector.broadcast %69 : vector<8x1xf32> to vector<8x512xf32>
    %72 = vector.broadcast %70 : vector<1x512xf32> to vector<8x512xf32>
    %73 = arith.mulf %71, %72 : vector<8x512xf32>
    %74 = arith.addf %68, %73 : vector<8x512xf32>
    %75 = vector.extract_strided_slice %30 {offsets = [0, 7], sizes = [8, 1], strides = [1, 1]} : vector<8x8xf32> to vector<8x1xf32>
    %76 = vector.extract_strided_slice %29 {offsets = [7, 0], sizes = [1, 512], strides = [1, 1]} : vector<8x512xf32> to vector<1x512xf32>
    %77 = vector.broadcast %75 : vector<8x1xf32> to vector<8x512xf32>
    %78 = vector.broadcast %76 : vector<1x512xf32> to vector<8x512xf32>
    %79 = arith.mulf %77, %78 : vector<8x512xf32>
    %80 = arith.addf %74, %79 : vector<8x512xf32>
    %cst_18 = arith.constant 0.000000e+00 : f32
    %81 = vector.broadcast %cst_18 : f32 to vector<8x512xf32>
    %82 = arith.cmpf ogt, %80, %81 : vector<8x512xf32>
    %c0_19 = arith.constant 0 : index
    %c0_20 = arith.constant 0 : index
    %83 = vector.load %arg9[%c0_19, %c0_20] : memref<8x1xf32, #tpu.memory_space<vmem>>, vector<8x1xf32>
    %84 = vector.broadcast %83 : vector<8x1xf32> to vector<8x512xf32>
    %85 = arith.addf %80, %84 : vector<8x512xf32>
    %cst_21 = arith.constant 0.000000e+00 : f32
    %86 = vector.broadcast %cst_21 : f32 to vector<8x512xf32>
    %87 = arith.select %82, %85, %86 : vector<8x512xi1>, vector<8x512xf32>
    %c0_22 = arith.constant 0 : index
    %c0_23 = arith.constant 0 : index
    %88 = vector.load %arg10[%c0_22, %c0_23] : memref<256x8xf32, #tpu.memory_space<vmem>>, vector<256x8xf32>
    %cst_24 = arith.constant dense<0.000000e+00> : vector<256x512xf32>
    %89 = tpu.matmul %88, %87, %cst_24 {dimension_numbers = #tpu.dot_dimension_numbers<[1], [0], [0], [1], [0, 0, 1, 1], [], []>} : vector<256x8xf32>, vector<8x512xf32>, vector<256x512xf32> -> vector<256x512xf32>
    %c0_25 = arith.constant 0 : index
    %c0_26 = arith.constant 0 : index
    %90 = vector.load %arg11[%c0_25, %c0_26] : memref<256x1xf32, #tpu.memory_space<vmem>>, vector<256x1xf32>
    %91 = vector.broadcast %90 : vector<256x1xf32> to vector<256x512xf32>
    %92 = arith.addf %89, %91 : vector<256x512xf32>
    %cst_27 = arith.constant 0.000000e+00 : f32
    %93 = vector.broadcast %cst_27 : f32 to vector<256x512xf32>
    %94 = arith.maximumf %92, %93 : vector<256x512xf32>
    %c0_28 = arith.constant 0 : index
    %c0_29 = arith.constant 0 : index
    %95 = vector.load %arg12[%c0_28, %c0_29] : memref<1x256xf32, #tpu.memory_space<vmem>>, vector<1x256xf32>
    %cst_30 = arith.constant dense<0.000000e+00> : vector<1x512xf32>
    %96 = tpu.matmul %95, %94, %cst_30 {dimension_numbers = #tpu.dot_dimension_numbers<[1], [0], [0], [1], [0, 0, 1, 1], [], []>} : vector<1x256xf32>, vector<256x512xf32>, vector<1x512xf32> -> vector<1x512xf32>
    %c0_31 = arith.constant 0 : index
    %c0_32 = arith.constant 0 : index
    %97 = vector.load %arg13[%c0_31, %c0_32] : memref<1x1xf32, #tpu.memory_space<vmem>>, vector<1x1xf32>
    %98 = vector.broadcast %97 : vector<1x1xf32> to vector<1x512xf32>
    %99 = arith.addf %96, %98 : vector<1x512xf32>
    %c0_33 = arith.constant 0 : index
    %c0_34 = arith.constant 0 : index
    %100 = vector.load %arg14[%c0_33, %c0_34] : memref<1x512xf32, #tpu.memory_space<vmem>>, vector<1x512xf32>
    tpu.vector_store %arg14[%c0_33, %c0_34], %99 {strides = array<i32>} : memref<1x512xf32, #tpu.memory_space<vmem>>, vector<1x512xf32>,
    return
  }
  func.func @transform_0(%arg0: i32) -> (i32, i32) {
    %c0_i32 = arith.constant 0 : i32
    %c0_i32_0 = arith.constant 0 : i32
    return %c0_i32, %arg0 : i32, i32
  }
  func.func @transform_1(%arg0: i32) -> (i32, i32) {
    %c0_i32 = arith.constant 0 : i32
    %c0_i32_0 = arith.constant 0 : i32
    %c0_i32_1 = arith.constant 0 : i32
    return %c0_i32, %c0_i32_0 : i32, i32
  }
  func.func @transform_2(%arg0: i32) -> (i32, i32) {
    %c0_i32 = arith.constant 0 : i32
    %c0_i32_0 = arith.constant 0 : i32
    %c0_i32_1 = arith.constant 0 : i32
    return %c0_i32, %c0_i32_0 : i32, i32
  }
  func.func @transform_3(%arg0: i32) -> (i32, i32) {
    %c0_i32 = arith.constant 0 : i32
    %c0_i32_0 = arith.constant 0 : i32
    %c0_i32_1 = arith.constant 0 : i32
    return %c0_i32, %c0_i32_0 : i32, i32
  }
  func.func @transform_4(%arg0: i32) -> (i32, i32) {
    %c0_i32 = arith.constant 0 : i32
    %c0_i32_0 = arith.constant 0 : i32
    %c0_i32_1 = arith.constant 0 : i32
    return %c0_i32, %c0_i32_0 : i32, i32
  }
  func.func @transform_5(%arg0: i32) -> (i32, i32) {
    %c0_i32 = arith.constant 0 : i32
    %c0_i32_0 = arith.constant 0 : i32
    %c0_i32_1 = arith.constant 0 : i32
    return %c0_i32, %c0_i32_0 : i32, i32
  }
  func.func @transform_6(%arg0: i32) -> (i32, i32) {
    %c0_i32 = arith.constant 0 : i32
    %c0_i32_0 = arith.constant 0 : i32
    %c0_i32_1 = arith.constant 0 : i32
    return %c0_i32, %c0_i32_0 : i32, i32
  }
  func.func @transform_7(%arg0: i32) -> (i32, i32) {
    %c0_i32 = arith.constant 0 : i32
    %c0_i32_0 = arith.constant 0 : i32
    %c0_i32_1 = arith.constant 0 : i32
    return %c0_i32, %c0_i32_0 : i32, i32
  }
  func.func @transform_8(%arg0: i32) -> (i32, i32) {
    %c0_i32 = arith.constant 0 : i32
    %c0_i32_0 = arith.constant 0 : i32
    %c0_i32_1 = arith.constant 0 : i32
    return %c0_i32, %c0_i32_0 : i32, i32
  }
  func.func @transform_9(%arg0: i32) -> (i32, i32) {
    %c0_i32 = arith.constant 0 : i32
    %c0_i32_0 = arith.constant 0 : i32
    %c0_i32_1 = arith.constant 0 : i32
    return %c0_i32, %c0_i32_0 : i32, i32
  }
  func.func @transform_10(%arg0: i32) -> (i32, i32) {
    %c0_i32 = arith.constant 0 : i32
    %c0_i32_0 = arith.constant 0 : i32
    %c0_i32_1 = arith.constant 0 : i32
    return %c0_i32, %c0_i32_0 : i32, i32
  }
  func.func @transform_11(%arg0: i32) -> (i32, i32) {
    %c0_i32 = arith.constant 0 : i32
    %c0_i32_0 = arith.constant 0 : i32
    %c0_i32_1 = arith.constant 0 : i32
    return %c0_i32, %c0_i32_0 : i32, i32
  }
  func.func @transform_12(%arg0: i32) -> (i32, i32) {
    %c0_i32 = arith.constant 0 : i32
    %c0_i32_0 = arith.constant 0 : i32
    %c0_i32_1 = arith.constant 0 : i32
    return %c0_i32, %c0_i32_0 : i32, i32
  }
  func.func @transform_13(%arg0: i32) -> (i32, i32) {
    %c0_i32 = arith.constant 0 : i32
    %c0_i32_0 = arith.constant 0 : i32
    return %c0_i32, %arg0 : i32, i32
  }
}

</mosaic_0001>

<llo_original>
// kernel: tpu_custom_call.1
$region0: #{tpu_custom_call.1}
  #allocation0 [shape = 'u32[]', space=smem, size = 0x4, offset = 0x4, fixed_abs, tag = 'smem constant byte address 0x4 - core index']
  #allocation1 [shape = 'u32[144,128]{1,0:T(1,128)}', space=vmem, size = 0x12000, scoped, tag = 'internal scratch']
  #allocation2 [shape = 'f32[1,1]{1,0:T(1,128)S(1)}', space=vmem, size = 0x200, scoped, tag = 'scoped memory for tpu_custom_call.1']
  %s0 = inlined_call_operand.vmem [shape: f32[2,1024], index: 0, kind: input, shape index: {}]
  %s1 = inlined_call_operand.vmem [shape: f32[256,2], index: 1, kind: input, shape index: {}]
  %s2 = inlined_call_operand.vmem [shape: f32[256,1], index: 2, kind: input, shape index: {}]
  %s3 = inlined_call_operand.vmem [shape: f32[8,256], index: 3, kind: input, shape index: {}]
  %s4 = inlined_call_operand.vmem [shape: f32[8,1], index: 4, kind: input, shape index: {}]
  %s5 = inlined_call_operand.vmem [shape: f32[8,1], index: 5, kind: input, shape index: {}]
  %s6 = inlined_call_operand.vmem [shape: f32[8,8], index: 6, kind: input, shape index: {}]
  %s7 = inlined_call_operand.vmem [shape: f32[8,1], index: 7, kind: input, shape index: {}]
  %s8 = inlined_call_operand.vmem [shape: f32[8,1], index: 8, kind: input, shape index: {}]
  %s9 = inlined_call_operand.vmem [shape: f32[256,8], index: 9, kind: input, shape index: {}]
  %s10 = inlined_call_operand.vmem [shape: f32[256,1], index: 10, kind: input, shape index: {}]
  %s11 = inlined_call_operand.vmem [shape: f32[1,256], index: 11, kind: input, shape index: {}]
  %s12 = inlined_call_operand.<no memory space> [shape: f32[1,1], index: 12, kind: input, shape index: {}]
  %s13 = inlined_call_operand.hbm [shape: f32[1,1024], index: 13, kind: output, shape index: {}]
  %s14 = sld [smem:[#allocation0]]
  $region85: #{tpu_custom_call.1} parent=0
    _
  %s16 = ssub.s32 1, %s14
  %s17 = scalar_select 0, %s16, %s14
  %v18 = vstv %s12
  %19 = vst [vmem:[#allocation2] sm:$0x1] %v18
  $region1: #{tpu_custom_call.1} parent=0
    #allocation3 [shape = 'u8[4096]{0}', space=vmem, size = 0x1000, scoped, tag = 'output window, operand 0']
    #allocation4 [shape = 's32[2]{0}', space=sflag, size = 0x8, scoped, tag = 'scoped memory for tpu_custom_call.1']
    %20 = vsyncpa [#allocation4], 0
    %s21 = scalar_lea.sflag [#allocation4], 1
    %22 = vsyncpa %s21, 0
    loop: start=0, step=1, limit=4
    $region2: #{tpu_custom_call.1} parent=1 // loop_pre_header
      _
    $region3: #{tpu_custom_call.1} parent=1 // loop_header
      %s24 = sphi 0, %s28
      %p25 = scmp.ge.s32.totalorder %s24, 4
      %s34 = sphi 0, %s36
      %s37 = sphi 0, %s34
      %s38 = sphi 0, %s37
      %s54 = sphi 0, %s38
      %s58 = sphi 0, %s58
      %s60 = sphi 0, %s58
      %s61 = sphi 0, %s60
      %s75 = sphi 0, %s61
      %s79 = sphi 0, %s79
      %s81 = sphi 0, %s79
      %s82 = sphi 0, %s81
      %s96 = sphi 0, %s82
      %s100 = sphi 0, %s100
      %s102 = sphi 0, %s100
      %s103 = sphi 0, %s102
      %s117 = sphi 0, %s103
      %s121 = sphi 0, %s121
      %s123 = sphi 0, %s121
      %s124 = sphi 0, %s123
      %s138 = sphi 0, %s124
      %s142 = sphi 0, %s142
      %s144 = sphi 0, %s142
      %s145 = sphi 0, %s144
      %s159 = sphi 0, %s145
      %s163 = sphi 0, %s163
      %s165 = sphi 0, %s163
      %s166 = sphi 0, %s165
      %s180 = sphi 0, %s166
      %s184 = sphi 0, %s184
      %s186 = sphi 0, %s184
      %s187 = sphi 0, %s186
      %s201 = sphi 0, %s187
      %s205 = sphi 0, %s205
      %s207 = sphi 0, %s205
      %s208 = sphi 0, %s207
      %s222 = sphi 0, %s208
      %s226 = sphi 0, %s226
      %s228 = sphi 0, %s226
      %s229 = sphi 0, %s228
      %s243 = sphi 0, %s229
      %s247 = sphi 0, %s247
      %s249 = sphi 0, %s247
      %s250 = sphi 0, %s249
      %s264 = sphi 0, %s250
      %s268 = sphi 0, %s268
      %s270 = sphi 0, %s268
      %s271 = sphi 0, %s270
      %s285 = sphi 0, %s271
      %s289 = sphi 0, %s289
      %s291 = sphi 0, %s289
      %s292 = sphi 0, %s291
      %s306 = sphi 0, %s292
      %s312 = sphi 0, %s314
      %s315 = sphi 0, %s312
      %s316 = sphi 0, %s315
      %s332 = sphi 0, %s316
    $region4: #{tpu_custom_call.1} parent=1 // loop_header_branch
      %27 = sbr.rel (%p25) target = $region8
    $region5: #{tpu_custom_call.1} parent=1 // loop_body
      %s29 = ssub.s32 %s24, 1
      %s30 = ssub.s32 %s24, 2
      %s31 = sadd.s32 %s24, 1
      %s32 = ssub.s32 %s24, %s31
      %p33 = scmp.eq.s32.totalorder %s32, 0
      %s35 = sadd.s32 %s34, 1
      %s36 = scalar_select %p33, %s34, %s35
      %p39 = pneg %p33
      %p40 = scmp.eq.s32.totalorder %s24, 1
      %p41 = por %p39, %p40
      %p42 = scmp.ne.s32.totalorder %s34, %s37
      %p43 = scmp.eq.s32.totalorder %s24, 0
      %p44 = por %p42, %p43
      %p45 = scmp.ne.s32.totalorder %s34, %s37
      %p46 = scmp.eq.s32.totalorder %s29, 1
      %p47 = por %p45, %p46
      %p48 = scmp.ne.s32.totalorder %s37, %s38
      %p49 = scmp.eq.s32.totalorder %s29, 0
      %p50 = por %p48, %p49
      %p51 = scmp.ne.s32.totalorder %s37, %s38
      %p52 = scmp.eq.s32.totalorder %s30, 1
      %p53 = por %p51, %p52
      %p55 = scmp.ne.s32.totalorder %s38, %s54
      %p56 = scmp.eq.s32.totalorder %s30, 0
      %p57 = por %p55, %p56
      %s59 = sadd.s32 %s58, 1
      %p62 = scmp.eq.s32.totalorder %s24, 1
      %p63 = scmp.ne.s32.totalorder %s58, %s60
      %p64 = scmp.eq.s32.totalorder %s24, 0
      %p65 = por %p63, %p64
      %p66 = scmp.ne.s32.totalorder %s58, %s60
      %p67 = scmp.eq.s32.totalorder %s29, 1
      %p68 = por %p66, %p67
      %p69 = scmp.ne.s32.totalorder %s60, %s61
      %p70 = scmp.eq.s32.totalorder %s29, 0
      %p71 = por %p69, %p70
      %p72 = scmp.ne.s32.totalorder %s60, %s61
      %p73 = scmp.eq.s32.totalorder %s30, 1
      %p74 = por %p72, %p73
      %p76 = scmp.ne.s32.totalorder %s61, %s75
      %p77 = scmp.eq.s32.totalorder %s30, 0
      %p78 = por %p76, %p77
      %s80 = sadd.s32 %s79, 1
      %p83 = scmp.eq.s32.totalorder %s24, 1
      %p84 = scmp.ne.s32.totalorder %s79, %s81
      %p85 = scmp.eq.s32.totalorder %s24, 0
      %p86 = por %p84, %p85
      %p87 = scmp.ne.s32.totalorder %s79, %s81
      %p88 = scmp.eq.s32.totalorder %s29, 1
      %p89 = por %p87, %p88
      %p90 = scmp.ne.s32.totalorder %s81, %s82
      %p91 = scmp.eq.s32.totalorder %s29, 0
      %p92 = por %p90, %p91
      %p93 = scmp.ne.s32.totalorder %s81, %s82
      %p94 = scmp.eq.s32.totalorder %s30, 1
      %p95 = por %p93, %p94
      %p97 = scmp.ne.s32.totalorder %s82, %s96
      %p98 = scmp.eq.s32.totalorder %s30, 0
      %p99 = por %p97, %p98
      %s101 = sadd.s32 %s100, 1
      %p104 = scmp.eq.s32.totalorder %s24, 1
      %p105 = scmp.ne.s32.totalorder %s100, %s102
      %p106 = scmp.eq.s32.totalorder %s24, 0
      %p107 = por %p105, %p106
      %p108 = scmp.ne.s32.totalorder %s100, %s102
      %p109 = scmp.eq.s32.totalorder %s29, 1
      %p110 = por %p108, %p109
      %p111 = scmp.ne.s32.totalorder %s102, %s103
      %p112 = scmp.eq.s32.totalorder %s29, 0
      %p113 = por %p111, %p112
      %p114 = scmp.ne.s32.totalorder %s102, %s103
      %p115 = scmp.eq.s32.totalorder %s30, 1
      %p116 = por %p114, %p115
      %p118 = scmp.ne.s32.totalorder %s103, %s117
      %p119 = scmp.eq.s32.totalorder %s30, 0
      %p120 = por %p118, %p119
      %s122 = sadd.s32 %s121, 1
      %p125 = scmp.eq.s32.totalorder %s24, 1
      %p126 = scmp.ne.s32.totalorder %s121, %s123
      %p127 = scmp.eq.s32.totalorder %s24, 0
      %p128 = por %p126, %p127
      %p129 = scmp.ne.s32.totalorder %s121, %s123
      %p130 = scmp.eq.s32.totalorder %s29, 1
      %p131 = por %p129, %p130
      %p132 = scmp.ne.s32.totalorder %s123, %s124
      %p133 = scmp.eq.s32.totalorder %s29, 0
      %p134 = por %p132, %p133
      %p135 = scmp.ne.s32.totalorder %s123, %s124
      %p136 = scmp.eq.s32.totalorder %s30, 1
      %p137 = por %p135, %p136
      %p139 = scmp.ne.s32.totalorder %s124, %s138
      %p140 = scmp.eq.s32.totalorder %s30, 0
      %p141 = por %p139, %p140
      %s143 = sadd.s32 %s142, 1
      %p146 = scmp.eq.s32.totalorder %s24, 1
      %p147 = scmp.ne.s32.totalorder %s142, %s144
      %p148 = scmp.eq.s32.totalorder %s24, 0
      %p149 = por %p147, %p148
      %p150 = scmp.ne.s32.totalorder %s142, %s144
      %p151 = scmp.eq.s32.totalorder %s29, 1
      %p152 = por %p150, %p151
      %p153 = scmp.ne.s32.totalorder %s144, %s145
      %p154 = scmp.eq.s32.totalorder %s29, 0
      %p155 = por %p153, %p154
      %p156 = scmp.ne.s32.totalorder %s144, %s145
      %p157 = scmp.eq.s32.totalorder %s30, 1
      %p158 = por %p156, %p157
      %p160 = scmp.ne.s32.totalorder %s145, %s159
      %p161 = scmp.eq.s32.totalorder %s30, 0
      %p162 = por %p160, %p161
      %s164 = sadd.s32 %s163, 1
      %p167 = scmp.eq.s32.totalorder %s24, 1
      %p168 = scmp.ne.s32.totalorder %s163, %s165
      %p169 = scmp.eq.s32.totalorder %s24, 0
      %p170 = por %p168, %p169
      %p171 = scmp.ne.s32.totalorder %s163, %s165
      %p172 = scmp.eq.s32.totalorder %s29, 1
      %p173 = por %p171, %p172
      %p174 = scmp.ne.s32.totalorder %s165, %s166
      %p175 = scmp.eq.s32.totalorder %s29, 0
      %p176 = por %p174, %p175
      %p177 = scmp.ne.s32.totalorder %s165, %s166
      %p178 = scmp.eq.s32.totalorder %s30, 1
      %p179 = por %p177, %p178
      %p181 = scmp.ne.s32.totalorder %s166, %s180
      %p182 = scmp.eq.s32.totalorder %s30, 0
      %p183 = por %p181, %p182
      %s185 = sadd.s32 %s184, 1
      %p188 = scmp.eq.s32.totalorder %s24, 1
      %p189 = scmp.ne.s32.totalorder %s184, %s186
      %p190 = scmp.eq.s32.totalorder %s24, 0
      %p191 = por %p189, %p190
      %p192 = scmp.ne.s32.totalorder %s184, %s186
      %p193 = scmp.eq.s32.totalorder %s29, 1
      %p194 = por %p192, %p193
      %p195 = scmp.ne.s32.totalorder %s186, %s187
      %p196 = scmp.eq.s32.totalorder %s29, 0
      %p197 = por %p195, %p196
      %p198 = scmp.ne.s32.totalorder %s186, %s187
      %p199 = scmp.eq.s32.totalorder %s30, 1
      %p200 = por %p198, %p199
      %p202 = scmp.ne.s32.totalorder %s187, %s201
      %p203 = scmp.eq.s32.totalorder %s30, 0
      %p204 = por %p202, %p203
      %s206 = sadd.s32 %s205, 1
      %p209 = scmp.eq.s32.totalorder %s24, 1
      %p210 = scmp.ne.s32.totalorder %s205, %s207
      %p211 = scmp.eq.s32.totalorder %s24, 0
      %p212 = por %p210, %p211
      %p213 = scmp.ne.s32.totalorder %s205, %s207
      %p214 = scmp.eq.s32.totalorder %s29, 1
      %p215 = por %p213, %p214
      %p216 = scmp.ne.s32.totalorder %s207, %s208
      %p217 = scmp.eq.s32.totalorder %s29, 0
      %p218 = por %p216, %p217
      %p219 = scmp.ne.s32.totalorder %s207, %s208
      %p220 = scmp.eq.s32.totalorder %s30, 1
      %p221 = por %p219, %p220
      %p223 = scmp.ne.s32.totalorder %s208, %s222
      %p224 = scmp.eq.s32.totalorder %s30, 0
      %p225 = por %p223, %p224
      %s227 = sadd.s32 %s226, 1
      %p230 = scmp.eq.s32.totalorder %s24, 1
      %p231 = scmp.ne.s32.totalorder %s226, %s228
      %p232 = scmp.eq.s32.totalorder %s24, 0
      %p233 = por %p231, %p232
      %p234 = scmp.ne.s32.totalorder %s226, %s228
      %p235 = scmp.eq.s32.totalorder %s29, 1
      %p236 = por %p234, %p235
      %p237 = scmp.ne.s32.totalorder %s228, %s229
      %p238 = scmp.eq.s32.totalorder %s29, 0
      %p239 = por %p237, %p238
      %p240 = scmp.ne.s32.totalorder %s228, %s229
      %p241 = scmp.eq.s32.totalorder %s30, 1
      %p242 = por %p240, %p241
      %p244 = scmp.ne.s32.totalorder %s229, %s243
      %p245 = scmp.eq.s32.totalorder %s30, 0
      %p246 = por %p244, %p245
      %s248 = sadd.s32 %s247, 1
      %p251 = scmp.eq.s32.totalorder %s24, 1
      %p252 = scmp.ne.s32.totalorder %s247, %s249
      %p253 = scmp.eq.s32.totalorder %s24, 0
      %p254 = por %p252, %p253
      %p255 = scmp.ne.s32.totalorder %s247, %s249
      %p256 = scmp.eq.s32.totalorder %s29, 1
      %p257 = por %p255, %p256
      %p258 = scmp.ne.s32.totalorder %s249, %s250
      %p259 = scmp.eq.s32.totalorder %s29, 0
      %p260 = por %p258, %p259
      %p261 = scmp.ne.s32.totalorder %s249, %s250
      %p262 = scmp.eq.s32.totalorder %s30, 1
      %p263 = por %p261, %p262
      %p265 = scmp.ne.s32.totalorder %s250, %s264
      %p266 = scmp.eq.s32.totalorder %s30, 0
      %p267 = por %p265, %p266
      %s269 = sadd.s32 %s268, 1
      %p272 = scmp.eq.s32.totalorder %s24, 1
      %p273 = scmp.ne.s32.totalorder %s268, %s270
      %p274 = scmp.eq.s32.totalorder %s24, 0
      %p275 = por %p273, %p274
      %p276 = scmp.ne.s32.totalorder %s268, %s270
      %p277 = scmp.eq.s32.totalorder %s29, 1
      %p278 = por %p276, %p277
      %p279 = scmp.ne.s32.totalorder %s270, %s271
      %p280 = scmp.eq.s32.totalorder %s29, 0
      %p281 = por %p279, %p280
      %p282 = scmp.ne.s32.totalorder %s270, %s271
      %p283 = scmp.eq.s32.totalorder %s30, 1
      %p284 = por %p282, %p283
      %p286 = scmp.ne.s32.totalorder %s271, %s285
      %p287 = scmp.eq.s32.totalorder %s30, 0
      %p288 = por %p286, %p287
      %s290 = sadd.s32 %s289, 1
      %p293 = scmp.eq.s32.totalorder %s24, 1
      %p294 = scmp.ne.s32.totalorder %s289, %s291
      %p295 = scmp.eq.s32.totalorder %s24, 0
      %p296 = por %p294, %p295
      %p297 = scmp.ne.s32.totalorder %s289, %s291
      %p298 = scmp.eq.s32.totalorder %s29, 1
      %p299 = por %p297, %p298
      %p300 = scmp.ne.s32.totalorder %s291, %s292
      %p301 = scmp.eq.s32.totalorder %s29, 0
      %p302 = por %p300, %p301
      %p303 = scmp.ne.s32.totalorder %s291, %s292
      %p304 = scmp.eq.s32.totalorder %s30, 1
      %p305 = por %p303, %p304
      %p307 = scmp.ne.s32.totalorder %s292, %s306
      %p308 = scmp.eq.s32.totalorder %s30, 0
      %p309 = por %p307, %p308
      %s310 = ssub.s32 %s24, %s31
      %p311 = scmp.eq.s32.totalorder %s310, 0
      %s313 = sadd.s32 %s312, 1
      %s314 = scalar_select %p311, %s312, %s313
      %p317 = pneg %p311
      %p318 = scmp.eq.s32.totalorder %s24, 1
      %p319 = por %p317, %p318
      %p320 = scmp.ne.s32.totalorder %s312, %s315
      %p321 = scmp.eq.s32.totalorder %s24, 0
      %p322 = por %p320, %p321
      %p323 = scmp.ne.s32.totalorder %s312, %s315
      %p324 = scmp.eq.s32.totalorder %s29, 1
      %p325 = por %p323, %p324
      %p326 = scmp.ne.s32.totalorder %s315, %s316
      %p327 = scmp.eq.s32.totalorder %s29, 0
      %p328 = por %p326, %p327
      %p329 = scmp.ne.s32.totalorder %s315, %s316
      %p330 = scmp.eq.s32.totalorder %s30, 1
      %p331 = por %p329, %p330
      %p333 = scmp.ne.s32.totalorder %s316, %s332
      %p334 = scmp.eq.s32.totalorder %s30, 0
      %p335 = por %p333, %p334
      %p336 = scmp.le.s32.totalorder 1, %s24
      %p337 = scmp.lt.s32.totalorder %s24, 3
      %p338 = pnand %p336, %p337
      %p339 = pneg %p338
      // Predicated region
      $region9: #{tpu_custom_call.1} parent=5 // pred_check
        _
      $region10: #{tpu_custom_call.1} parent=5 // pred_check_branch
        %341 = sbr.rel (%p338) target = $region12
      $region11: #{tpu_custom_call.1} parent=5 // pred_region
        %s342 = ssub.s32 %s24, 1
        // Predicated region
        $region13: #{tpu_custom_call.1} parent=11 // pred_check
          %p343 = pneg %p71
        $region14: #{tpu_custom_call.1} parent=11 // pred_check_branch
          %345 = sbr.rel (%p343) target = $region16
        $region15: #{tpu_custom_call.1} parent=11 // pred_region
          _
        $region16: #{tpu_custom_call.1} parent=11 // pred_fallthru
          _
        // Predicated region
        $region17: #{tpu_custom_call.1} parent=11 // pred_check
          %p346 = pneg %p92
        $region18: #{tpu_custom_call.1} parent=11 // pred_check_branch
          %348 = sbr.rel (%p346) target = $region20
        $region19: #{tpu_custom_call.1} parent=11 // pred_region
          _
        $region20: #{tpu_custom_call.1} parent=11 // pred_fallthru
          _
        // Predicated region
        $region21: #{tpu_custom_call.1} parent=11 // pred_check
          %p349 = pneg %p113
        $region22: #{tpu_custom_call.1} parent=11 // pred_check_branch
          %351 = sbr.rel (%p349) target = $region24
        $region23: #{tpu_custom_call.1} parent=11 // pred_region
          _
        $region24: #{tpu_custom_call.1} parent=11 // pred_fallthru
          _
        // Predicated region
        $region25: #{tpu_custom_call.1} parent=11 // pred_check
          %p352 = pneg %p134
        $region26: #{tpu_custom_call.1} parent=11 // pred_check_branch
          %354 = sbr.rel (%p352) target = $region28
        $region27: #{tpu_custom_call.1} parent=11 // pred_region
          _
        $region28: #{tpu_custom_call.1} parent=11 // pred_fallthru
          _
        // Predicated region
        $region29: #{tpu_custom_call.1} parent=11 // pred_check
          %p355 = pneg %p155
        $region30: #{tpu_custom_call.1} parent=11 // pred_check_branch
          %357 = sbr.rel (%p355) target = $region32
        $region31: #{tpu_custom_call.1} parent=11 // pred_region
          _
        $region32: #{tpu_custom_call.1} parent=11 // pred_fallthru
          _
        // Predicated region
        $region33: #{tpu_custom_call.1} parent=11 // pred_check
          %p358 = pneg %p176
        $region34: #{tpu_custom_call.1} parent=11 // pred_check_branch
          %360 = sbr.rel (%p358) target = $region36
        $region35: #{tpu_custom_call.1} parent=11 // pred_region
          _
        $region36: #{tpu_custom_call.1} parent=11 // pred_fallthru
          _
        // Predicated region
        $region37: #{tpu_custom_call.1} parent=11 // pred_check
          %p361 = pneg %p197
        $region38: #{tpu_custom_call.1} parent=11 // pred_check_branch
          %363 = sbr.rel (%p361) target = $region40
        $region39: #{tpu_custom_call.1} parent=11 // pred_region
          _
        $region40: #{tpu_custom_call.1} parent=11 // pred_fallthru
          _
        // Predicated region
        $region41: #{tpu_custom_call.1} parent=11 // pred_check
          %p364 = pneg %p218
        $region42: #{tpu_custom_call.1} parent=11 // pred_check_branch
          %366 = sbr.rel (%p364) target = $region44
        $region43: #{tpu_custom_call.1} parent=11 // pred_region
          _
        $region44: #{tpu_custom_call.1} parent=11 // pred_fallthru
          _
        // Predicated region
        $region45: #{tpu_custom_call.1} parent=11 // pred_check
          %p367 = pneg %p239
        $region46: #{tpu_custom_call.1} parent=11 // pred_check_branch
          %369 = sbr.rel (%p367) target = $region48
        $region47: #{tpu_custom_call.1} parent=11 // pred_region
          _
        $region48: #{tpu_custom_call.1} parent=11 // pred_fallthru
          _
        // Predicated region
        $region49: #{tpu_custom_call.1} parent=11 // pred_check
          %p370 = pneg %p260
        $region50: #{tpu_custom_call.1} parent=11 // pred_check_branch
          %372 = sbr.rel (%p370) target = $region52
        $region51: #{tpu_custom_call.1} parent=11 // pred_region
          _
        $region52: #{tpu_custom_call.1} parent=11 // pred_fallthru
          _
        // Predicated region
        $region53: #{tpu_custom_call.1} parent=11 // pred_check
          %p373 = pneg %p281
        $region54: #{tpu_custom_call.1} parent=11 // pred_check_branch
          %375 = sbr.rel (%p373) target = $region56
        $region55: #{tpu_custom_call.1} parent=11 // pred_region
          _
        $region56: #{tpu_custom_call.1} parent=11 // pred_fallthru
          _
        // Predicated region
        $region57: #{tpu_custom_call.1} parent=11 // pred_check
          %p376 = pneg %p302
        $region58: #{tpu_custom_call.1} parent=11 // pred_check_branch
          %378 = sbr.rel (%p376) target = $region60
        $region59: #{tpu_custom_call.1} parent=11 // pred_region
          _
        $region60: #{tpu_custom_call.1} parent=11 // pred_fallthru
          _
      $region12: #{tpu_custom_call.1} parent=5 // pred_fallthru
        _
      %p379 = scmp.lt.s32.totalorder %s24, 2
      // Predicated region
      $region61: #{tpu_custom_call.1} parent=5 // pred_check
        %p380 = pneg %p379
      $region62: #{tpu_custom_call.1} parent=5 // pred_check_branch
        %382 = sbr.rel (%p380) target = $region64
      $region63: #{tpu_custom_call.1} parent=5 // pred_region
        // Predicated region
        $region65: #{tpu_custom_call.1} parent=63 // pred_check
          %p383 = pneg %p44
        $region66: #{tpu_custom_call.1} parent=63 // pred_check_branch
          %385 = sbr.rel (%p383) target = $region68
        $region67: #{tpu_custom_call.1} parent=63 // pred_region
          %s386 = smul.u32 4, %s24
          %p387 = scmp.lt.s32.totalorder %s386, 7
          %s388 = scalar_select %p387, %s386, 7
          %s389 = smul.addr %s388, 2
          %s390 = scalar_lea.vmem %s0, %s389
          %s391 = smul.u32 4, %s24
        $region68: #{tpu_custom_call.1} parent=63 // pred_fallthru
          _
      $region64: #{tpu_custom_call.1} parent=5 // pred_fallthru
        _
      %p392 = scmp.le.s32.totalorder 1, %s24
      %p393 = scmp.lt.s32.totalorder %s24, 3
      %p394 = pnand %p392, %p393
      %p395 = pneg %p394
      // Predicated region
      $region69: #{tpu_custom_call.1} parent=5 // pred_check
        _
      $region70: #{tpu_custom_call.1} parent=5 // pred_check_branch
        %397 = sbr.rel (%p394) target = $region72
      $region71: #{tpu_custom_call.1} parent=5 // pred_region
        %s398 = ssub.s32 %s24, 1
        %s399 = smul.u32 4, %s29
        %p400 = scmp.lt.s32.totalorder %s399, 7
        %s401 = scalar_select %p400, %s399, 7
        %s402 = smul.addr %s401, 2
        %s403 = scalar_lea.vmem %s0, %s402
        %p404 = pneg %p50
        %p405 = pneg %p47
        %p406 = pneg %p71
        %p407 = pneg %p68
        %p408 = pneg %p92
        %p409 = pneg %p89
        %p410 = pneg %p113
        %p411 = pneg %p110
        %p412 = pneg %p134
        %p413 = pneg %p131
        %p414 = pneg %p155
        %p415 = pneg %p152
        %p416 = pneg %p176
        %p417 = pneg %p173
        %p418 = pneg %p197
        %p419 = pneg %p194
        %p420 = pneg %p218
        %p421 = pneg %p215
        %p422 = pneg %p239
        %p423 = pneg %p236
        %p424 = pneg %p260
        %p425 = pneg %p257
        %p426 = pneg %p281
        %p427 = pneg %p278
        %p428 = pneg %p302
        %p429 = pneg %p299
        %p430 = pneg %p328
        %p431 = pneg %p325
        %s432 = sand.u32 %s315, 1
        %s433 = scalar_lea.sflag [#allocation4], %s432
        %s434 = sand.u32 %s315, 1
        %s435 = smul.addr %s434, 4
        %s436 = scalar_lea.vmem [#allocation3], %s435
        %s437 = smul.u32 4, %s29
        %p438 = scmp.lt.s32.totalorder %s437, 7
        %s439 = scalar_select %p438, %s437, 7
        %s440 = smul.addr %s439, 2
        %s441 = scalar_lea.vmem %s0, %s440
        %s442 = smul.u32 4, %s29
        %s443 = smul.u32 4, %s29
        %v444 = vld [vmem:[%s441] sm:$0xff]
        %v445 = vld [vmem:[%s1] sm:$0xff]
        %v446 = vld [vmem:[%s1 + $0x8] sm:$0xff]
        %v447 = vld [vmem:[%s1 + $0x10] sm:$0xff]
        %v448 = vld [vmem:[%s1 + $0x18] sm:$0xff]
        %v449 = vld [vmem:[%s1 + $0x20] sm:$0xff]
        %v450 = vld [vmem:[%s1 + $0x28] sm:$0xff]
        %v451 = vld [vmem:[%s1 + $0x30] sm:$0xff]
        %v452 = vld [vmem:[%s1 + $0x38] sm:$0xff]
        %v453 = vld [vmem:[%s1 + $0x40] sm:$0xff]
        %v454 = vld [vmem:[%s1 + $0x48] sm:$0xff]
        %v455 = vld [vmem:[%s1 + $0x50] sm:$0xff]
        %v456 = vld [vmem:[%s1 + $0x58] sm:$0xff]
        %v457 = vld [vmem:[%s1 + $0x60] sm:$0xff]
        %v458 = vld [vmem:[%s1 + $0x68] sm:$0xff]
        %v459 = vld [vmem:[%s1 + $0x70] sm:$0xff]
        %v460 = vld [vmem:[%s1 + $0x78] sm:$0xff]
        %v461 = vld [vmem:[%s1 + $0x80] sm:$0xff]
        %v462 = vld [vmem:[%s1 + $0x88] sm:$0xff]
        %v463 = vld [vmem:[%s1 + $0x90] sm:$0xff]
        %v464 = vld [vmem:[%s1 + $0x98] sm:$0xff]
        %v465 = vld [vmem:[%s1 + $0xa0] sm:$0xff]
        %v466 = vld [vmem:[%s1 + $0xa8] sm:$0xff]
        %v467 = vld [vmem:[%s1 + $0xb0] sm:$0xff]
        %v468 = vld [vmem:[%s1 + $0xb8] sm:$0xff]
        %v469 = vld [vmem:[%s1 + $0xc0] sm:$0xff]
        %v470 = vld [vmem:[%s1 + $0xc8] sm:$0xff]
        %v471 = vld [vmem:[%s1 + $0xd0] sm:$0xff]
        %v472 = vld [vmem:[%s1 + $0xd8] sm:$0xff]
        %v473 = vld [vmem:[%s1 + $0xe0] sm:$0xff]
        %v474 = vld [vmem:[%s1 + $0xe8] sm:$0xff]
        %v475 = vld [vmem:[%s1 + $0xf0] sm:$0xff]
        %v476 = vld [vmem:[%s1 + $0xf8] sm:$0xff]
        %478 = vset.pattern.permute.xlu0 0
        %479 = vperm.xlu0 %478, %v445
        %v480 = vpop.permute.xlu0 %479
        %483 = vset.pattern.permute.xlu0 0
        %484 = vperm.xlu0 %483, %v446
        %v485 = vpop.permute.xlu0 %484
        %488 = vset.pattern.permute.xlu0 0
        %489 = vperm.xlu0 %488, %v447
        %v490 = vpop.permute.xlu0 %489
        %493 = vset.pattern.permute.xlu0 0
        %494 = vperm.xlu0 %493, %v448
        %v495 = vpop.permute.xlu0 %494
        %498 = vset.pattern.permute.xlu0 0
        %499 = vperm.xlu0 %498, %v449
        %v500 = vpop.permute.xlu0 %499
        %503 = vset.pattern.permute.xlu0 0
        %504 = vperm.xlu0 %503, %v450
        %v505 = vpop.permute.xlu0 %504
        %508 = vset.pattern.permute.xlu0 0
        %509 = vperm.xlu0 %508, %v451
        %v510 = vpop.permute.xlu0 %509
        %513 = vset.pattern.permute.xlu0 0
        %514 = vperm.xlu0 %513, %v452
        %v515 = vpop.permute.xlu0 %514
        %518 = vset.pattern.permute.xlu0 0
        %519 = vperm.xlu0 %518, %v453
        %v520 = vpop.permute.xlu0 %519
        %523 = vset.pattern.permute.xlu0 0
        %524 = vperm.xlu0 %523, %v454
        %v525 = vpop.permute.xlu0 %524
        %528 = vset.pattern.permute.xlu0 0
        %529 = vperm.xlu0 %528, %v455
        %v530 = vpop.permute.xlu0 %529
        %533 = vset.pattern.permute.xlu0 0
        %534 = vperm.xlu0 %533, %v456
        %v535 = vpop.permute.xlu0 %534
        %538 = vset.pattern.permute.xlu0 0
        %539 = vperm.xlu0 %538, %v457
        %v540 = vpop.permute.xlu0 %539
        %543 = vset.pattern.permute.xlu0 0
        %544 = vperm.xlu0 %543, %v458
        %v545 = vpop.permute.xlu0 %544
        %548 = vset.pattern.permute.xlu0 0
        %549 = vperm.xlu0 %548, %v459
        %v550 = vpop.permute.xlu0 %549
        %553 = vset.pattern.permute.xlu0 0
        %554 = vperm.xlu0 %553, %v460
        %v555 = vpop.permute.xlu0 %554
        %558 = vset.pattern.permute.xlu0 0
        %559 = vperm.xlu0 %558, %v461
        %v560 = vpop.permute.xlu0 %559
        %563 = vset.pattern.permute.xlu0 0
        %564 = vperm.xlu0 %563, %v462
        %v565 = vpop.permute.xlu0 %564
        %568 = vset.pattern.permute.xlu0 0
        %569 = vperm.xlu0 %568, %v463
        %v570 = vpop.permute.xlu0 %569
        %573 = vset.pattern.permute.xlu0 0
        %574 = vperm.xlu0 %573, %v464
        %v575 = vpop.permute.xlu0 %574
        %578 = vset.pattern.permute.xlu0 0
        %579 = vperm.xlu0 %578, %v465
        %v580 = vpop.permute.xlu0 %579
        %583 = vset.pattern.permute.xlu0 0
        %584 = vperm.xlu0 %583, %v466
        %v585 = vpop.permute.xlu0 %584
        %588 = vset.pattern.permute.xlu0 0
        %589 = vperm.xlu0 %588, %v467
        %v590 = vpop.permute.xlu0 %589
        %593 = vset.pattern.permute.xlu0 0
        %594 = vperm.xlu0 %593, %v468
        %v595 = vpop.permute.xlu0 %594
        %598 = vset.pattern.permute.xlu0 0
        %599 = vperm.xlu0 %598, %v469
        %v600 = vpop.permute.xlu0 %599
        %603 = vset.pattern.permute.xlu0 0
        %604 = vperm.xlu0 %603, %v470
        %v605 = vpop.permute.xlu0 %604
        %608 = vset.pattern.permute.xlu0 0
        %609 = vperm.xlu0 %608, %v471
        %v610 = vpop.permute.xlu0 %609
        %613 = vset.pattern.permute.xlu0 0
        %614 = vperm.xlu0 %613, %v472
        %v615 = vpop.permute.xlu0 %614
        %618 = vset.pattern.permute.xlu0 0
        %619 = vperm.xlu0 %618, %v473
        %v620 = vpop.permute.xlu0 %619
        %623 = vset.pattern.permute.xlu0 0
        %624 = vperm.xlu0 %623, %v474
        %v625 = vpop.permute.xlu0 %624
        %628 = vset.pattern.permute.xlu0 0
        %629 = vperm.xlu0 %628, %v475
        %v630 = vpop.permute.xlu0 %629
        %633 = vset.pattern.permute.xlu0 0
        %634 = vperm.xlu0 %633, %v476
        %v635 = vpop.permute.xlu0 %634
        %v638 = vlaneseq
        %v639 = vshrl.u32 %v638, 7
        %v640 = vsub.s32 0, %v639
        %v641 = vrot.slane %v444, %v640
        %v642 = vlaneseq
        %v643 = vshrl.u32 %v642, 7
        %v644 = vsub.s32 2, %v643
        %v645 = vrot.slane %v444, %v644
        %v646 = vlaneseq
        %v647 = vshrl.u32 %v646, 7
        %v648 = vsub.s32 4, %v647
        %v649 = vrot.slane %v444, %v648
        %v650 = vlaneseq
        %v651 = vshrl.u32 %v650, 7
        %v652 = vsub.s32 6, %v651
        %v653 = vrot.slane %v444, %v652
        %v658 = vlaneseq
        %v659 = vshrl.u32 %v658, 7
        %v660 = vsub.s32 0, %v659
        %v661 = vrot.slane %v641, %v660
        %v662 = vlaneseq
        %v663 = vshrl.u32 %v662, 7
        %v664 = vsub.s32 0, %v663
        %v665 = vrot.slane %v645, %v664
        %v666 = vlaneseq
        %v667 = vshrl.u32 %v666, 7
        %v668 = vsub.s32 0, %v667
        %v669 = vrot.slane %v649, %v668
        %v670 = vlaneseq
        %v671 = vshrl.u32 %v670, 7
        %v672 = vsub.s32 0, %v671
        %v673 = vrot.slane %v653, %v672
        %v674 = vmul.f32 %v480, %v661
        %v675 = vmul.f32 %v480, %v665
        %v676 = vmul.f32 %v480, %v669
        %v677 = vmul.f32 %v480, %v673
        %v678 = vmul.f32 %v485, %v661
        %v679 = vmul.f32 %v485, %v665
        %v680 = vmul.f32 %v485, %v669
        %v681 = vmul.f32 %v485, %v673
        %v682 = vmul.f32 %v490, %v661
        %v683 = vmul.f32 %v490, %v665
        %v684 = vmul.f32 %v490, %v669
        %v685 = vmul.f32 %v490, %v673
        %v686 = vmul.f32 %v495, %v661
        %v687 = vmul.f32 %v495, %v665
        %v688 = vmul.f32 %v495, %v669
        %v689 = vmul.f32 %v495, %v673
        %v690 = vmul.f32 %v500, %v661
        %v691 = vmul.f32 %v500, %v665
        %v692 = vmul.f32 %v500, %v669
        %v693 = vmul.f32 %v500, %v673
        %v694 = vmul.f32 %v505, %v661
        %v695 = vmul.f32 %v505, %v665
        %v696 = vmul.f32 %v505, %v669
        %v697 = vmul.f32 %v505, %v673
        %v698 = vmul.f32 %v510, %v661
        %v699 = vmul.f32 %v510, %v665
        %v700 = vmul.f32 %v510, %v669
        %v701 = vmul.f32 %v510, %v673
        %v702 = vmul.f32 %v515, %v661
        %v703 = vmul.f32 %v515, %v665
        %v704 = vmul.f32 %v515, %v669
        %v705 = vmul.f32 %v515, %v673
        %v706 = vmul.f32 %v520, %v661
        %v707 = vmul.f32 %v520, %v665
        %v708 = vmul.f32 %v520, %v669
        %v709 = vmul.f32 %v520, %v673
        %v710 = vmul.f32 %v525, %v661
        %v711 = vmul.f32 %v525, %v665
        %v712 = vmul.f32 %v525, %v669
        %v713 = vmul.f32 %v525, %v673
        %v714 = vmul.f32 %v530, %v661
        %v715 = vmul.f32 %v530, %v665
        %v716 = vmul.f32 %v530, %v669
        %v717 = vmul.f32 %v530, %v673
        %v718 = vmul.f32 %v535, %v661
        %v719 = vmul.f32 %v535, %v665
        %v720 = vmul.f32 %v535, %v669
        %v721 = vmul.f32 %v535, %v673
        %v722 = vmul.f32 %v540, %v661
        %v723 = vmul.f32 %v540, %v665
        %v724 = vmul.f32 %v540, %v669
        %v725 = vmul.f32 %v540, %v673
        %v726 = vmul.f32 %v545, %v661
        %v727 = vmul.f32 %v545, %v665
        %v728 = vmul.f32 %v545, %v669
        %v729 = vmul.f32 %v545, %v673
        %v730 = vmul.f32 %v550, %v661
        %v731 = vmul.f32 %v550, %v665
        %v732 = vmul.f32 %v550, %v669
        %v733 = vmul.f32 %v550, %v673
        %v734 = vmul.f32 %v555, %v661
        %v735 = vmul.f32 %v555, %v665
        %v736 = vmul.f32 %v555, %v669
        %v737 = vmul.f32 %v555, %v673
        %v738 = vmul.f32 %v560, %v661
        %v739 = vmul.f32 %v560, %v665
        %v740 = vmul.f32 %v560, %v669
        %v741 = vmul.f32 %v560, %v673
        %v742 = vmul.f32 %v565, %v661
        %v743 = vmul.f32 %v565, %v665
        %v744 = vmul.f32 %v565, %v669
        %v745 = vmul.f32 %v565, %v673
        %v746 = vmul.f32 %v570, %v661
        %v747 = vmul.f32 %v570, %v665
        %v748 = vmul.f32 %v570, %v669
        %v749 = vmul.f32 %v570, %v673
        %v750 = vmul.f32 %v575, %v661
        %v751 = vmul.f32 %v575, %v665
        %v752 = vmul.f32 %v575, %v669
        %v753 = vmul.f32 %v575, %v673
        %v754 = vmul.f32 %v580, %v661
        %v755 = vmul.f32 %v580, %v665
        %v756 = vmul.f32 %v580, %v669
        %v757 = vmul.f32 %v580, %v673
        %v758 = vmul.f32 %v585, %v661
        %v759 = vmul.f32 %v585, %v665
        %v760 = vmul.f32 %v585, %v669
        %v761 = vmul.f32 %v585, %v673
        %v762 = vmul.f32 %v590, %v661
        %v763 = vmul.f32 %v590, %v665
        %v764 = vmul.f32 %v590, %v669
        %v765 = vmul.f32 %v590, %v673
        %v766 = vmul.f32 %v595, %v661
        %v767 = vmul.f32 %v595, %v665
        %v768 = vmul.f32 %v595, %v669
        %v769 = vmul.f32 %v595, %v673
        %v770 = vmul.f32 %v600, %v661
        %v771 = vmul.f32 %v600, %v665
        %v772 = vmul.f32 %v600, %v669
        %v773 = vmul.f32 %v600, %v673
        %v774 = vmul.f32 %v605, %v661
        %v775 = vmul.f32 %v605, %v665
        %v776 = vmul.f32 %v605, %v669
        %v777 = vmul.f32 %v605, %v673
        %v778 = vmul.f32 %v610, %v661
        %v779 = vmul.f32 %v610, %v665
        %v780 = vmul.f32 %v610, %v669
        %v781 = vmul.f32 %v610, %v673
        %v782 = vmul.f32 %v615, %v661
        %v783 = vmul.f32 %v615, %v665
        %v784 = vmul.f32 %v615, %v669
        %v785 = vmul.f32 %v615, %v673
        %v786 = vmul.f32 %v620, %v661
        %v787 = vmul.f32 %v620, %v665
        %v788 = vmul.f32 %v620, %v669
        %v789 = vmul.f32 %v620, %v673
        %v790 = vmul.f32 %v625, %v661
        %v791 = vmul.f32 %v625, %v665
        %v792 = vmul.f32 %v625, %v669
        %v793 = vmul.f32 %v625, %v673
        %v794 = vmul.f32 %v630, %v661
        %v795 = vmul.f32 %v630, %v665
        %v796 = vmul.f32 %v630, %v669
        %v797 = vmul.f32 %v630, %v673
        %v798 = vmul.f32 %v635, %v661
        %v799 = vmul.f32 %v635, %v665
        %v800 = vmul.f32 %v635, %v669
        %v801 = vmul.f32 %v635, %v673
        %802 = vset.pattern.permute.xlu0 1
        %803 = vperm.xlu0 %802, %v445
        %v804 = vpop.permute.xlu0 %803
        %806 = vset.pattern.permute.xlu0 1
        %807 = vperm.xlu0 %806, %v446
        %v808 = vpop.permute.xlu0 %807
        %810 = vset.pattern.permute.xlu0 1
        %811 = vperm.xlu0 %810, %v447
        %v812 = vpop.permute.xlu0 %811
        %814 = vset.pattern.permute.xlu0 1
        %815 = vperm.xlu0 %814, %v448
        %v816 = vpop.permute.xlu0 %815
        %818 = vset.pattern.permute.xlu0 1
        %819 = vperm.xlu0 %818, %v449
        %v820 = vpop.permute.xlu0 %819
        %822 = vset.pattern.permute.xlu0 1
        %823 = vperm.xlu0 %822, %v450
        %v824 = vpop.permute.xlu0 %823
        %826 = vset.pattern.permute.xlu0 1
        %827 = vperm.xlu0 %826, %v451
        %v828 = vpop.permute.xlu0 %827
        %830 = vset.pattern.permute.xlu0 1
        %831 = vperm.xlu0 %830, %v452
        %v832 = vpop.permute.xlu0 %831
        %834 = vset.pattern.permute.xlu0 1
        %835 = vperm.xlu0 %834, %v453
        %v836 = vpop.permute.xlu0 %835
        %838 = vset.pattern.permute.xlu0 1
        %839 = vperm.xlu0 %838, %v454
        %v840 = vpop.permute.xlu0 %839
        %842 = vset.pattern.permute.xlu0 1
        %843 = vperm.xlu0 %842, %v455
        %v844 = vpop.permute.xlu0 %843
        %846 = vset.pattern.permute.xlu0 1
        %847 = vperm.xlu0 %846, %v456
        %v848 = vpop.permute.xlu0 %847
        %850 = vset.pattern.permute.xlu0 1
        %851 = vperm.xlu0 %850, %v457
        %v852 = vpop.permute.xlu0 %851
        %854 = vset.pattern.permute.xlu0 1
        %855 = vperm.xlu0 %854, %v458
        %v856 = vpop.permute.xlu0 %855
        %858 = vset.pattern.permute.xlu0 1
        %859 = vperm.xlu0 %858, %v459
        %v860 = vpop.permute.xlu0 %859
        %862 = vset.pattern.permute.xlu0 1
        %863 = vperm.xlu0 %862, %v460
        %v864 = vpop.permute.xlu0 %863
        %866 = vset.pattern.permute.xlu0 1
        %867 = vperm.xlu0 %866, %v461
        %v868 = vpop.permute.xlu0 %867
        %870 = vset.pattern.permute.xlu0 1
        %871 = vperm.xlu0 %870, %v462
        %v872 = vpop.permute.xlu0 %871
        %874 = vset.pattern.permute.xlu0 1
        %875 = vperm.xlu0 %874, %v463
        %v876 = vpop.permute.xlu0 %875
        %878 = vset.pattern.permute.xlu0 1
        %879 = vperm.xlu0 %878, %v464
        %v880 = vpop.permute.xlu0 %879
        %882 = vset.pattern.permute.xlu0 1
        %883 = vperm.xlu0 %882, %v465
        %v884 = vpop.permute.xlu0 %883
        %886 = vset.pattern.permute.xlu0 1
        %887 = vperm.xlu0 %886, %v466
        %v888 = vpop.permute.xlu0 %887
        %890 = vset.pattern.permute.xlu0 1
        %891 = vperm.xlu0 %890, %v467
        %v892 = vpop.permute.xlu0 %891
        %894 = vset.pattern.permute.xlu0 1
        %895 = vperm.xlu0 %894, %v468
        %v896 = vpop.permute.xlu0 %895
        %898 = vset.pattern.permute.xlu0 1
        %899 = vperm.xlu0 %898, %v469
        %v900 = vpop.permute.xlu0 %899
        %902 = vset.pattern.permute.xlu0 1
        %903 = vperm.xlu0 %902, %v470
        %v904 = vpop.permute.xlu0 %903
        %906 = vset.pattern.permute.xlu0 1
        %907 = vperm.xlu0 %906, %v471
        %v908 = vpop.permute.xlu0 %907
        %910 = vset.pattern.permute.xlu0 1
        %911 = vperm.xlu0 %910, %v472
        %v912 = vpop.permute.xlu0 %911
        %914 = vset.pattern.permute.xlu0 1
        %915 = vperm.xlu0 %914, %v473
        %v916 = vpop.permute.xlu0 %915
        %918 = vset.pattern.permute.xlu0 1
        %919 = vperm.xlu0 %918, %v474
        %v920 = vpop.permute.xlu0 %919
        %922 = vset.pattern.permute.xlu0 1
        %923 = vperm.xlu0 %922, %v475
        %v924 = vpop.permute.xlu0 %923
        %926 = vset.pattern.permute.xlu0 1
        %927 = vperm.xlu0 %926, %v476
        %v928 = vpop.permute.xlu0 %927
        %v930 = vlaneseq
        %v931 = vshrl.u32 %v930, 7
        %v932 = vsub.s32 1, %v931
        %v933 = vrot.slane %v444, %v932
        %v934 = vlaneseq
        %v935 = vshrl.u32 %v934, 7
        %v936 = vsub.s32 3, %v935
        %v937 = vrot.slane %v444, %v936
        %v938 = vlaneseq
        %v939 = vshrl.u32 %v938, 7
        %v940 = vsub.s32 5, %v939
        %v941 = vrot.slane %v444, %v940
        %v942 = vlaneseq
        %v943 = vshrl.u32 %v942, 7
        %v944 = vsub.s32 7, %v943
        %v945 = vrot.slane %v444, %v944
        %v950 = vlaneseq
        %v951 = vshrl.u32 %v950, 7
        %v952 = vsub.s32 1, %v951
        %v953 = vrot.slane %v933, %v952
        %v954 = vlaneseq
        %v955 = vshrl.u32 %v954, 7
        %v956 = vsub.s32 1, %v955
        %v957 = vrot.slane %v937, %v956
        %v958 = vlaneseq
        %v959 = vshrl.u32 %v958, 7
        %v960 = vsub.s32 1, %v959
        %v961 = vrot.slane %v941, %v960
        %v962 = vlaneseq
        %v963 = vshrl.u32 %v962, 7
        %v964 = vsub.s32 1, %v963
        %v965 = vrot.slane %v945, %v964
        %v966 = vmul.f32 %v804, %v953
        %v967 = vmul.f32 %v804, %v957
        %v968 = vmul.f32 %v804, %v961
        %v969 = vmul.f32 %v804, %v965
        %v970 = vmul.f32 %v808, %v953
        %v971 = vmul.f32 %v808, %v957
        %v972 = vmul.f32 %v808, %v961
        %v973 = vmul.f32 %v808, %v965
        %v974 = vmul.f32 %v812, %v953
        %v975 = vmul.f32 %v812, %v957
        %v976 = vmul.f32 %v812, %v961
        %v977 = vmul.f32 %v812, %v965
        %v978 = vmul.f32 %v816, %v953
        %v979 = vmul.f32 %v816, %v957
        %v980 = vmul.f32 %v816, %v961
        %v981 = vmul.f32 %v816, %v965
        %v982 = vmul.f32 %v820, %v953
        %v983 = vmul.f32 %v820, %v957
        %v984 = vmul.f32 %v820, %v961
        %v985 = vmul.f32 %v820, %v965
        %v986 = vmul.f32 %v824, %v953
        %v987 = vmul.f32 %v824, %v957
        %v988 = vmul.f32 %v824, %v961
        %v989 = vmul.f32 %v824, %v965
        %v990 = vmul.f32 %v828, %v953
        %v991 = vmul.f32 %v828, %v957
        %v992 = vmul.f32 %v828, %v961
        %v993 = vmul.f32 %v828, %v965
        %v994 = vmul.f32 %v832, %v953
        %v995 = vmul.f32 %v832, %v957
        %v996 = vmul.f32 %v832, %v961
        %v997 = vmul.f32 %v832, %v965
        %v998 = vmul.f32 %v836, %v953
        %v999 = vmul.f32 %v836, %v957
        %v1000 = vmul.f32 %v836, %v961
        %v1001 = vmul.f32 %v836, %v965
        %v1002 = vmul.f32 %v840, %v953
        %v1003 = vmul.f32 %v840, %v957
        %v1004 = vmul.f32 %v840, %v961
        %v1005 = vmul.f32 %v840, %v965
        %v1006 = vmul.f32 %v844, %v953
        %v1007 = vmul.f32 %v844, %v957
        %v1008 = vmul.f32 %v844, %v961
        %v1009 = vmul.f32 %v844, %v965
        %v1010 = vmul.f32 %v848, %v953
        %v1011 = vmul.f32 %v848, %v957
        %v1012 = vmul.f32 %v848, %v961
        %v1013 = vmul.f32 %v848, %v965
        %v1014 = vmul.f32 %v852, %v953
        %v1015 = vmul.f32 %v852, %v957
        %v1016 = vmul.f32 %v852, %v961
        %v1017 = vmul.f32 %v852, %v965
        %v1018 = vmul.f32 %v856, %v953
        %v1019 = vmul.f32 %v856, %v957
        %v1020 = vmul.f32 %v856, %v961
        %v1021 = vmul.f32 %v856, %v965
        %v1022 = vmul.f32 %v860, %v953
        %v1023 = vmul.f32 %v860, %v957
        %v1024 = vmul.f32 %v860, %v961
        %v1025 = vmul.f32 %v860, %v965
        %v1026 = vmul.f32 %v864, %v953
        %v1027 = vmul.f32 %v864, %v957
        %v1028 = vmul.f32 %v864, %v961
        %v1029 = vmul.f32 %v864, %v965
        %v1030 = vmul.f32 %v868, %v953
        %v1031 = vmul.f32 %v868, %v957
        %v1032 = vmul.f32 %v868, %v961
        %v1033 = vmul.f32 %v868, %v965
        %v1034 = vmul.f32 %v872, %v953
        %v1035 = vmul.f32 %v872, %v957
        %v1036 = vmul.f32 %v872, %v961
        %v1037 = vmul.f32 %v872, %v965
        %v1038 = vmul.f32 %v876, %v953
        %v1039 = vmul.f32 %v876, %v957
        %v1040 = vmul.f32 %v876, %v961
        %v1041 = vmul.f32 %v876, %v965
        %v1042 = vmul.f32 %v880, %v953
        %v1043 = vmul.f32 %v880, %v957
        %v1044 = vmul.f32 %v880, %v961
        %v1045 = vmul.f32 %v880, %v965
        %v1046 = vmul.f32 %v884, %v953
        %v1047 = vmul.f32 %v884, %v957
        %v1048 = vmul.f32 %v884, %v961
        %v1049 = vmul.f32 %v884, %v965
        %v1050 = vmul.f32 %v888, %v953
        %v1051 = vmul.f32 %v888, %v957
        %v1052 = vmul.f32 %v888, %v961
        %v1053 = vmul.f32 %v888, %v965
        %v1054 = vmul.f32 %v892, %v953
        %v1055 = vmul.f32 %v892, %v957
        %v1056 = vmul.f32 %v892, %v961
        %v1057 = vmul.f32 %v892, %v965
        %v1058 = vmul.f32 %v896, %v953
        %v1059 = vmul.f32 %v896, %v957
        %v1060 = vmul.f32 %v896, %v961
        %v1061 = vmul.f32 %v896, %v965
        %v1062 = vmul.f32 %v900, %v953
        %v1063 = vmul.f32 %v900, %v957
        %v1064 = vmul.f32 %v900, %v961
        %v1065 = vmul.f32 %v900, %v965
        %v1066 = vmul.f32 %v904, %v953
        %v1067 = vmul.f32 %v904, %v957
        %v1068 = vmul.f32 %v904, %v961
        %v1069 = vmul.f32 %v904, %v965
        %v1070 = vmul.f32 %v908, %v953
        %v1071 = vmul.f32 %v908, %v957
        %v1072 = vmul.f32 %v908, %v961
        %v1073 = vmul.f32 %v908, %v965
        %v1074 = vmul.f32 %v912, %v953
        %v1075 = vmul.f32 %v912, %v957
        %v1076 = vmul.f32 %v912, %v961
        %v1077 = vmul.f32 %v912, %v965
        %v1078 = vmul.f32 %v916, %v953
        %v1079 = vmul.f32 %v916, %v957
        %v1080 = vmul.f32 %v916, %v961
        %v1081 = vmul.f32 %v916, %v965
        %v1082 = vmul.f32 %v920, %v953
        %v1083 = vmul.f32 %v920, %v957
        %v1084 = vmul.f32 %v920, %v961
        %v1085 = vmul.f32 %v920, %v965
        %v1086 = vmul.f32 %v924, %v953
        %v1087 = vmul.f32 %v924, %v957
        %v1088 = vmul.f32 %v924, %v961
        %v1089 = vmul.f32 %v924, %v965
        %v1090 = vmul.f32 %v928, %v953
        %v1091 = vmul.f32 %v928, %v957
        %v1092 = vmul.f32 %v928, %v961
        %v1093 = vmul.f32 %v928, %v965
        %v1094 = vadd.f32 %v674, %v966
        %v1095 = vadd.f32 %v675, %v967
        %v1096 = vadd.f32 %v676, %v968
        %v1097 = vadd.f32 %v677, %v969
        %v1098 = vadd.f32 %v678, %v970
        %v1099 = vadd.f32 %v679, %v971
        %v1100 = vadd.f32 %v680, %v972
        %v1101 = vadd.f32 %v681, %v973
        %v1102 = vadd.f32 %v682, %v974
        %v1103 = vadd.f32 %v683, %v975
        %v1104 = vadd.f32 %v684, %v976
        %v1105 = vadd.f32 %v685, %v977
        %v1106 = vadd.f32 %v686, %v978
        %v1107 = vadd.f32 %v687, %v979
        %v1108 = vadd.f32 %v688, %v980
        %v1109 = vadd.f32 %v689, %v981
        %v1110 = vadd.f32 %v690, %v982
        %v1111 = vadd.f32 %v691, %v983
        %v1112 = vadd.f32 %v692, %v984
        %v1113 = vadd.f32 %v693, %v985
        %v1114 = vadd.f32 %v694, %v986
        %v1115 = vadd.f32 %v695, %v987
        %v1116 = vadd.f32 %v696, %v988
        %v1117 = vadd.f32 %v697, %v989
        %v1118 = vadd.f32 %v698, %v990
        %v1119 = vadd.f32 %v699, %v991
        %v1120 = vadd.f32 %v700, %v992
        %v1121 = vadd.f32 %v701, %v993
        %v1122 = vadd.f32 %v702, %v994
        %v1123 = vadd.f32 %v703, %v995
        %v1124 = vadd.f32 %v704, %v996
        %v1125 = vadd.f32 %v705, %v997
        %v1126 = vadd.f32 %v706, %v998
        %v1127 = vadd.f32 %v707, %v999
        %v1128 = vadd.f32 %v708, %v1000
        %v1129 = vadd.f32 %v709, %v1001
        %v1130 = vadd.f32 %v710, %v1002
        %v1131 = vadd.f32 %v711, %v1003
        %v1132 = vadd.f32 %v712, %v1004
        %v1133 = vadd.f32 %v713, %v1005
        %v1134 = vadd.f32 %v714, %v1006
        %v1135 = vadd.f32 %v715, %v1007
        %v1136 = vadd.f32 %v716, %v1008
        %v1137 = vadd.f32 %v717, %v1009
        %v1138 = vadd.f32 %v718, %v1010
        %v1139 = vadd.f32 %v719, %v1011
        %v1140 = vadd.f32 %v720, %v1012
        %v1141 = vadd.f32 %v721, %v1013
        %v1142 = vadd.f32 %v722, %v1014
        %v1143 = vadd.f32 %v723, %v1015
        %v1144 = vadd.f32 %v724, %v1016
        %v1145 = vadd.f32 %v725, %v1017
        %v1146 = vadd.f32 %v726, %v1018
        %v1147 = vadd.f32 %v727, %v1019
        %v1148 = vadd.f32 %v728, %v1020
        %v1149 = vadd.f32 %v729, %v1021
        %v1150 = vadd.f32 %v730, %v1022
        %v1151 = vadd.f32 %v731, %v1023
        %v1152 = vadd.f32 %v732, %v1024
        %v1153 = vadd.f32 %v733, %v1025
        %v1154 = vadd.f32 %v734, %v1026
        %v1155 = vadd.f32 %v735, %v1027
        %v1156 = vadd.f32 %v736, %v1028
        %v1157 = vadd.f32 %v737, %v1029
        %v1158 = vadd.f32 %v738, %v1030
        %v1159 = vadd.f32 %v739, %v1031
        %v1160 = vadd.f32 %v740, %v1032
        %v1161 = vadd.f32 %v741, %v1033
        %v1162 = vadd.f32 %v742, %v1034
        %v1163 = vadd.f32 %v743, %v1035
        %v1164 = vadd.f32 %v744, %v1036
        %v1165 = vadd.f32 %v745, %v1037
        %v1166 = vadd.f32 %v746, %v1038
        %v1167 = vadd.f32 %v747, %v1039
        %v1168 = vadd.f32 %v748, %v1040
        %v1169 = vadd.f32 %v749, %v1041
        %v1170 = vadd.f32 %v750, %v1042
        %v1171 = vadd.f32 %v751, %v1043
        %v1172 = vadd.f32 %v752, %v1044
        %v1173 = vadd.f32 %v753, %v1045
        %v1174 = vadd.f32 %v754, %v1046
        %v1175 = vadd.f32 %v755, %v1047
        %v1176 = vadd.f32 %v756, %v1048
        %v1177 = vadd.f32 %v757, %v1049
        %v1178 = vadd.f32 %v758, %v1050
        %v1179 = vadd.f32 %v759, %v1051
        %v1180 = vadd.f32 %v760, %v1052
        %v1181 = vadd.f32 %v761, %v1053
        %v1182 = vadd.f32 %v762, %v1054
        %v1183 = vadd.f32 %v763, %v1055
        %v1184 = vadd.f32 %v764, %v1056
        %v1185 = vadd.f32 %v765, %v1057
        %v1186 = vadd.f32 %v766, %v1058
        %v1187 = vadd.f32 %v767, %v1059
        %v1188 = vadd.f32 %v768, %v1060
        %v1189 = vadd.f32 %v769, %v1061
        %v1190 = vadd.f32 %v770, %v1062
        %v1191 = vadd.f32 %v771, %v1063
        %v1192 = vadd.f32 %v772, %v1064
        %v1193 = vadd.f32 %v773, %v1065
        %v1194 = vadd.f32 %v774, %v1066
        %v1195 = vadd.f32 %v775, %v1067
        %v1196 = vadd.f32 %v776, %v1068
        %v1197 = vadd.f32 %v777, %v1069
        %v1198 = vadd.f32 %v778, %v1070
        %v1199 = vadd.f32 %v779, %v1071
        %v1200 = vadd.f32 %v780, %v1072
        %v1201 = vadd.f32 %v781, %v1073
        %v1202 = vadd.f32 %v782, %v1074
        %v1203 = vadd.f32 %v783, %v1075
        %v1204 = vadd.f32 %v784, %v1076
        %v1205 = vadd.f32 %v785, %v1077
        %v1206 = vadd.f32 %v786, %v1078
        %v1207 = vadd.f32 %v787, %v1079
        %v1208 = vadd.f32 %v788, %v1080
        %v1209 = vadd.f32 %v789, %v1081
        %v1210 = vadd.f32 %v790, %v1082
        %v1211 = vadd.f32 %v791, %v1083
        %v1212 = vadd.f32 %v792, %v1084
        %v1213 = vadd.f32 %v793, %v1085
        %v1214 = vadd.f32 %v794, %v1086
        %v1215 = vadd.f32 %v795, %v1087
        %v1216 = vadd.f32 %v796, %v1088
        %v1217 = vadd.f32 %v797, %v1089
        %v1218 = vadd.f32 %v798, %v1090
        %v1219 = vadd.f32 %v799, %v1091
        %v1220 = vadd.f32 %v800, %v1092
        %v1221 = vadd.f32 %v801, %v1093
        %v1222 = vld [vmem:[%s2] sm:$0xff]
        %v1223 = vld [vmem:[%s2 + $0x8] sm:$0xff]
        %v1224 = vld [vmem:[%s2 + $0x10] sm:$0xff]
        %v1225 = vld [vmem:[%s2 + $0x18] sm:$0xff]
        %v1226 = vld [vmem:[%s2 + $0x20] sm:$0xff]
        %v1227 = vld [vmem:[%s2 + $0x28] sm:$0xff]
        %v1228 = vld [vmem:[%s2 + $0x30] sm:$0xff]
        %v1229 = vld [vmem:[%s2 + $0x38] sm:$0xff]
        %v1230 = vld [vmem:[%s2 + $0x40] sm:$0xff]
        %v1231 = vld [vmem:[%s2 + $0x48] sm:$0xff]
        %v1232 = vld [vmem:[%s2 + $0x50] sm:$0xff]
        %v1233 = vld [vmem:[%s2 + $0x58] sm:$0xff]
        %v1234 = vld [vmem:[%s2 + $0x60] sm:$0xff]
        %v1235 = vld [vmem:[%s2 + $0x68] sm:$0xff]
        %v1236 = vld [vmem:[%s2 + $0x70] sm:$0xff]
        %v1237 = vld [vmem:[%s2 + $0x78] sm:$0xff]
        %v1238 = vld [vmem:[%s2 + $0x80] sm:$0xff]
        %v1239 = vld [vmem:[%s2 + $0x88] sm:$0xff]
        %v1240 = vld [vmem:[%s2 + $0x90] sm:$0xff]
        %v1241 = vld [vmem:[%s2 + $0x98] sm:$0xff]
        %v1242 = vld [vmem:[%s2 + $0xa0] sm:$0xff]
        %v1243 = vld [vmem:[%s2 + $0xa8] sm:$0xff]
        %v1244 = vld [vmem:[%s2 + $0xb0] sm:$0xff]
        %v1245 = vld [vmem:[%s2 + $0xb8] sm:$0xff]
        %v1246 = vld [vmem:[%s2 + $0xc0] sm:$0xff]
        %v1247 = vld [vmem:[%s2 + $0xc8] sm:$0xff]
        %v1248 = vld [vmem:[%s2 + $0xd0] sm:$0xff]
        %v1249 = vld [vmem:[%s2 + $0xd8] sm:$0xff]
        %v1250 = vld [vmem:[%s2 + $0xe0] sm:$0xff]
        %v1251 = vld [vmem:[%s2 + $0xe8] sm:$0xff]
        %v1252 = vld [vmem:[%s2 + $0xf0] sm:$0xff]
        %v1253 = vld [vmem:[%s2 + $0xf8] sm:$0xff]
        %1255 = vset.pattern.permute.xlu0 0
        %1256 = vperm.xlu0 %1255, %v1222
        %v1257 = vpop.permute.xlu0 %1256
        %1260 = vset.pattern.permute.xlu0 0
        %1261 = vperm.xlu0 %1260, %v1223
        %v1262 = vpop.permute.xlu0 %1261
        %1265 = vset.pattern.permute.xlu0 0
        %1266 = vperm.xlu0 %1265, %v1224
        %v1267 = vpop.permute.xlu0 %1266
        %1270 = vset.pattern.permute.xlu0 0
        %1271 = vperm.xlu0 %1270, %v1225
        %v1272 = vpop.permute.xlu0 %1271
        %1275 = vset.pattern.permute.xlu0 0
        %1276 = vperm.xlu0 %1275, %v1226
        %v1277 = vpop.permute.xlu0 %1276
        %1280 = vset.pattern.permute.xlu0 0
        %1281 = vperm.xlu0 %1280, %v1227
        %v1282 = vpop.permute.xlu0 %1281
        %1285 = vset.pattern.permute.xlu0 0
        %1286 = vperm.xlu0 %1285, %v1228
        %v1287 = vpop.permute.xlu0 %1286
        %1290 = vset.pattern.permute.xlu0 0
        %1291 = vperm.xlu0 %1290, %v1229
        %v1292 = vpop.permute.xlu0 %1291
        %1295 = vset.pattern.permute.xlu0 0
        %1296 = vperm.xlu0 %1295, %v1230
        %v1297 = vpop.permute.xlu0 %1296
        %1300 = vset.pattern.permute.xlu0 0
        %1301 = vperm.xlu0 %1300, %v1231
        %v1302 = vpop.permute.xlu0 %1301
        %1305 = vset.pattern.permute.xlu0 0
        %1306 = vperm.xlu0 %1305, %v1232
        %v1307 = vpop.permute.xlu0 %1306
        %1310 = vset.pattern.permute.xlu0 0
        %1311 = vperm.xlu0 %1310, %v1233
        %v1312 = vpop.permute.xlu0 %1311
        %1315 = vset.pattern.permute.xlu0 0
        %1316 = vperm.xlu0 %1315, %v1234
        %v1317 = vpop.permute.xlu0 %1316
        %1320 = vset.pattern.permute.xlu0 0
        %1321 = vperm.xlu0 %1320, %v1235
        %v1322 = vpop.permute.xlu0 %1321
        %1325 = vset.pattern.permute.xlu0 0
        %1326 = vperm.xlu0 %1325, %v1236
        %v1327 = vpop.permute.xlu0 %1326
        %1330 = vset.pattern.permute.xlu0 0
        %1331 = vperm.xlu0 %1330, %v1237
        %v1332 = vpop.permute.xlu0 %1331
        %1335 = vset.pattern.permute.xlu0 0
        %1336 = vperm.xlu0 %1335, %v1238
        %v1337 = vpop.permute.xlu0 %1336
        %1340 = vset.pattern.permute.xlu0 0
        %1341 = vperm.xlu0 %1340, %v1239
        %v1342 = vpop.permute.xlu0 %1341
        %1345 = vset.pattern.permute.xlu0 0
        %1346 = vperm.xlu0 %1345, %v1240
        %v1347 = vpop.permute.xlu0 %1346
        %1350 = vset.pattern.permute.xlu0 0
        %1351 = vperm.xlu0 %1350, %v1241
        %v1352 = vpop.permute.xlu0 %1351
        %1355 = vset.pattern.permute.xlu0 0
        %1356 = vperm.xlu0 %1355, %v1242
        %v1357 = vpop.permute.xlu0 %1356
        %1360 = vset.pattern.permute.xlu0 0
        %1361 = vperm.xlu0 %1360, %v1243
        %v1362 = vpop.permute.xlu0 %1361
        %1365 = vset.pattern.permute.xlu0 0
        %1366 = vperm.xlu0 %1365, %v1244
        %v1367 = vpop.permute.xlu0 %1366
        %1370 = vset.pattern.permute.xlu0 0
        %1371 = vperm.xlu0 %1370, %v1245
        %v1372 = vpop.permute.xlu0 %1371
        %1375 = vset.pattern.permute.xlu0 0
        %1376 = vperm.xlu0 %1375, %v1246
        %v1377 = vpop.permute.xlu0 %1376
        %1380 = vset.pattern.permute.xlu0 0
        %1381 = vperm.xlu0 %1380, %v1247
        %v1382 = vpop.permute.xlu0 %1381
        %1385 = vset.pattern.permute.xlu0 0
        %1386 = vperm.xlu0 %1385, %v1248
        %v1387 = vpop.permute.xlu0 %1386
        %1390 = vset.pattern.permute.xlu0 0
        %1391 = vperm.xlu0 %1390, %v1249
        %v1392 = vpop.permute.xlu0 %1391
        %1395 = vset.pattern.permute.xlu0 0
        %1396 = vperm.xlu0 %1395, %v1250
        %v1397 = vpop.permute.xlu0 %1396
        %1400 = vset.pattern.permute.xlu0 0
        %1401 = vperm.xlu0 %1400, %v1251
        %v1402 = vpop.permute.xlu0 %1401
        %1405 = vset.pattern.permute.xlu0 0
        %1406 = vperm.xlu0 %1405, %v1252
        %v1407 = vpop.permute.xlu0 %1406
        %1410 = vset.pattern.permute.xlu0 0
        %1411 = vperm.xlu0 %1410, %v1253
        %v1412 = vpop.permute.xlu0 %1411
        %v1414 = vadd.f32 %v1094, %v1257
        %v1415 = vadd.f32 %v1095, %v1257
        %v1416 = vadd.f32 %v1096, %v1257
        %v1417 = vadd.f32 %v1097, %v1257
        %v1418 = vadd.f32 %v1098, %v1262
        %v1419 = vadd.f32 %v1099, %v1262
        %v1420 = vadd.f32 %v1100, %v1262
        %v1421 = vadd.f32 %v1101, %v1262
        %v1422 = vadd.f32 %v1102, %v1267
        %v1423 = vadd.f32 %v1103, %v1267
        %v1424 = vadd.f32 %v1104, %v1267
        %v1425 = vadd.f32 %v1105, %v1267
        %v1426 = vadd.f32 %v1106, %v1272
        %v1427 = vadd.f32 %v1107, %v1272
        %v1428 = vadd.f32 %v1108, %v1272
        %v1429 = vadd.f32 %v1109, %v1272
        %v1430 = vadd.f32 %v1110, %v1277
        %v1431 = vadd.f32 %v1111, %v1277
        %v1432 = vadd.f32 %v1112, %v1277
        %v1433 = vadd.f32 %v1113, %v1277
        %v1434 = vadd.f32 %v1114, %v1282
        %v1435 = vadd.f32 %v1115, %v1282
        %v1436 = vadd.f32 %v1116, %v1282
        %v1437 = vadd.f32 %v1117, %v1282
        %v1438 = vadd.f32 %v1118, %v1287
        %v1439 = vadd.f32 %v1119, %v1287
        %v1440 = vadd.f32 %v1120, %v1287
        %v1441 = vadd.f32 %v1121, %v1287
        %v1442 = vadd.f32 %v1122, %v1292
        %v1443 = vadd.f32 %v1123, %v1292
        %v1444 = vadd.f32 %v1124, %v1292
        %v1445 = vadd.f32 %v1125, %v1292
        %v1446 = vadd.f32 %v1126, %v1297
        %v1447 = vadd.f32 %v1127, %v1297
        %v1448 = vadd.f32 %v1128, %v1297
        %v1449 = vadd.f32 %v1129, %v1297
        %v1450 = vadd.f32 %v1130, %v1302
        %v1451 = vadd.f32 %v1131, %v1302
        %v1452 = vadd.f32 %v1132, %v1302
        %v1453 = vadd.f32 %v1133, %v1302
        %v1454 = vadd.f32 %v1134, %v1307
        %v1455 = vadd.f32 %v1135, %v1307
        %v1456 = vadd.f32 %v1136, %v1307
        %v1457 = vadd.f32 %v1137, %v1307
        %v1458 = vadd.f32 %v1138, %v1312
        %v1459 = vadd.f32 %v1139, %v1312
        %v1460 = vadd.f32 %v1140, %v1312
        %v1461 = vadd.f32 %v1141, %v1312
        %v1462 = vadd.f32 %v1142, %v1317
        %v1463 = vadd.f32 %v1143, %v1317
        %v1464 = vadd.f32 %v1144, %v1317
        %v1465 = vadd.f32 %v1145, %v1317
        %v1466 = vadd.f32 %v1146, %v1322
        %v1467 = vadd.f32 %v1147, %v1322
        %v1468 = vadd.f32 %v1148, %v1322
        %v1469 = vadd.f32 %v1149, %v1322
        %v1470 = vadd.f32 %v1150, %v1327
        %v1471 = vadd.f32 %v1151, %v1327
        %v1472 = vadd.f32 %v1152, %v1327
        %v1473 = vadd.f32 %v1153, %v1327
        %v1474 = vadd.f32 %v1154, %v1332
        %v1475 = vadd.f32 %v1155, %v1332
        %v1476 = vadd.f32 %v1156, %v1332
        %v1477 = vadd.f32 %v1157, %v1332
        %v1478 = vadd.f32 %v1158, %v1337
        %v1479 = vadd.f32 %v1159, %v1337
        %v1480 = vadd.f32 %v1160, %v1337
        %v1481 = vadd.f32 %v1161, %v1337
        %v1482 = vadd.f32 %v1162, %v1342
        %v1483 = vadd.f32 %v1163, %v1342
        %v1484 = vadd.f32 %v1164, %v1342
        %v1485 = vadd.f32 %v1165, %v1342
        %v1486 = vadd.f32 %v1166, %v1347
        %v1487 = vadd.f32 %v1167, %v1347
        %v1488 = vadd.f32 %v1168, %v1347
        %v1489 = vadd.f32 %v1169, %v1347
        %v1490 = vadd.f32 %v1170, %v1352
        %v1491 = vadd.f32 %v1171, %v1352
        %v1492 = vadd.f32 %v1172, %v1352
        %v1493 = vadd.f32 %v1173, %v1352
        %v1494 = vadd.f32 %v1174, %v1357
        %v1495 = vadd.f32 %v1175, %v1357
        %v1496 = vadd.f32 %v1176, %v1357
        %v1497 = vadd.f32 %v1177, %v1357
        %v1498 = vadd.f32 %v1178, %v1362
        %v1499 = vadd.f32 %v1179, %v1362
        %v1500 = vadd.f32 %v1180, %v1362
        %v1501 = vadd.f32 %v1181, %v1362
        %v1502 = vadd.f32 %v1182, %v1367
        %v1503 = vadd.f32 %v1183, %v1367
        %v1504 = vadd.f32 %v1184, %v1367
        %v1505 = vadd.f32 %v1185, %v1367
        %v1506 = vadd.f32 %v1186, %v1372
        %v1507 = vadd.f32 %v1187, %v1372
        %v1508 = vadd.f32 %v1188, %v1372
        %v1509 = vadd.f32 %v1189, %v1372
        %v1510 = vadd.f32 %v1190, %v1377
        %v1511 = vadd.f32 %v1191, %v1377
        %v1512 = vadd.f32 %v1192, %v1377
        %v1513 = vadd.f32 %v1193, %v1377
        %v1514 = vadd.f32 %v1194, %v1382
        %v1515 = vadd.f32 %v1195, %v1382
        %v1516 = vadd.f32 %v1196, %v1382
        %v1517 = vadd.f32 %v1197, %v1382
        %v1518 = vadd.f32 %v1198, %v1387
        %v1519 = vadd.f32 %v1199, %v1387
        %v1520 = vadd.f32 %v1200, %v1387
        %v1521 = vadd.f32 %v1201, %v1387
        %v1522 = vadd.f32 %v1202, %v1392
        %v1523 = vadd.f32 %v1203, %v1392
        %v1524 = vadd.f32 %v1204, %v1392
        %v1525 = vadd.f32 %v1205, %v1392
        %v1526 = vadd.f32 %v1206, %v1397
        %v1527 = vadd.f32 %v1207, %v1397
        %v1528 = vadd.f32 %v1208, %v1397
        %v1529 = vadd.f32 %v1209, %v1397
        %v1530 = vadd.f32 %v1210, %v1402
        %v1531 = vadd.f32 %v1211, %v1402
        %v1532 = vadd.f32 %v1212, %v1402
        %v1533 = vadd.f32 %v1213, %v1402
        %v1534 = vadd.f32 %v1214, %v1407
        %v1535 = vadd.f32 %v1215, %v1407
        %v1536 = vadd.f32 %v1216, %v1407
        %v1537 = vadd.f32 %v1217, %v1407
        %v1538 = vadd.f32 %v1218, %v1412
        %v1539 = vadd.f32 %v1219, %v1412
        %v1540 = vadd.f32 %v1220, %v1412
        %v1541 = vadd.f32 %v1221, %v1412
        %v1542 = vmax.f32 %v1414, 0.0
        %v1543 = vmax.f32 %v1415, 0.0
        %v1544 = vmax.f32 %v1416, 0.0
        %v1545 = vmax.f32 %v1417, 0.0
        %v1546 = vmax.f32 %v1418, 0.0
        %v1547 = vmax.f32 %v1419, 0.0
        %v1548 = vmax.f32 %v1420, 0.0
        %v1549 = vmax.f32 %v1421, 0.0
        %v1550 = vmax.f32 %v1422, 0.0
        %v1551 = vmax.f32 %v1423, 0.0
        %v1552 = vmax.f32 %v1424, 0.0
        %v1553 = vmax.f32 %v1425, 0.0
        %v1554 = vmax.f32 %v1426, 0.0
        %v1555 = vmax.f32 %v1427, 0.0
        %v1556 = vmax.f32 %v1428, 0.0
        %v1557 = vmax.f32 %v1429, 0.0
        %v1558 = vmax.f32 %v1430, 0.0
        %v1559 = vmax.f32 %v1431, 0.0
        %v1560 = vmax.f32 %v1432, 0.0
        %v1561 = vmax.f32 %v1433, 0.0
        %v1562 = vmax.f32 %v1434, 0.0
        %v1563 = vmax.f32 %v1435, 0.0
        %v1564 = vmax.f32 %v1436, 0.0
        %v1565 = vmax.f32 %v1437, 0.0
        %v1566 = vmax.f32 %v1438, 0.0
        %v1567 = vmax.f32 %v1439, 0.0
        %v1568 = vmax.f32 %v1440, 0.0
        %v1569 = vmax.f32 %v1441, 0.0
        %v1570 = vmax.f32 %v1442, 0.0
        %v1571 = vmax.f32 %v1443, 0.0
        %v1572 = vmax.f32 %v1444, 0.0
        %v1573 = vmax.f32 %v1445, 0.0
        %v1574 = vmax.f32 %v1446, 0.0
        %v1575 = vmax.f32 %v1447, 0.0
        %v1576 = vmax.f32 %v1448, 0.0
        %v1577 = vmax.f32 %v1449, 0.0
        %v1578 = vmax.f32 %v1450, 0.0
        %v1579 = vmax.f32 %v1451, 0.0
        %v1580 = vmax.f32 %v1452, 0.0
        %v1581 = vmax.f32 %v1453, 0.0
        %v1582 = vmax.f32 %v1454, 0.0
        %v1583 = vmax.f32 %v1455, 0.0
        %v1584 = vmax.f32 %v1456, 0.0
        %v1585 = vmax.f32 %v1457, 0.0
        %v1586 = vmax.f32 %v1458, 0.0
        %v1587 = vmax.f32 %v1459, 0.0
        %v1588 = vmax.f32 %v1460, 0.0
        %v1589 = vmax.f32 %v1461, 0.0
        %v1590 = vmax.f32 %v1462, 0.0
        %v1591 = vmax.f32 %v1463, 0.0
        %v1592 = vmax.f32 %v1464, 0.0
        %v1593 = vmax.f32 %v1465, 0.0
        %v1594 = vmax.f32 %v1466, 0.0
        %v1595 = vmax.f32 %v1467, 0.0
        %v1596 = vmax.f32 %v1468, 0.0
        %v1597 = vmax.f32 %v1469, 0.0
        %v1598 = vmax.f32 %v1470, 0.0
        %v1599 = vmax.f32 %v1471, 0.0
        %v1600 = vmax.f32 %v1472, 0.0
        %v1601 = vmax.f32 %v1473, 0.0
        %v1602 = vmax.f32 %v1474, 0.0
        %v1603 = vmax.f32 %v1475, 0.0
        %v1604 = vmax.f32 %v1476, 0.0
        %v1605 = vmax.f32 %v1477, 0.0
        %v1606 = vmax.f32 %v1478, 0.0
        %v1607 = vmax.f32 %v1479, 0.0
        %v1608 = vmax.f32 %v1480, 0.0
        %v1609 = vmax.f32 %v1481, 0.0
        %v1610 = vmax.f32 %v1482, 0.0
        %v1611 = vmax.f32 %v1483, 0.0
        %v1612 = vmax.f32 %v1484, 0.0
        %v1613 = vmax.f32 %v1485, 0.0
        %v1614 = vmax.f32 %v1486, 0.0
        %v1615 = vmax.f32 %v1487, 0.0
        %v1616 = vmax.f32 %v1488, 0.0
        %v1617 = vmax.f32 %v1489, 0.0
        %v1618 = vmax.f32 %v1490, 0.0
        %v1619 = vmax.f32 %v1491, 0.0
        %v1620 = vmax.f32 %v1492, 0.0
        %v1621 = vmax.f32 %v1493, 0.0
        %v1622 = vmax.f32 %v1494, 0.0
        %v1623 = vmax.f32 %v1495, 0.0
        %v1624 = vmax.f32 %v1496, 0.0
        %v1625 = vmax.f32 %v1497, 0.0
        %v1626 = vmax.f32 %v1498, 0.0
        %v1627 = vmax.f32 %v1499, 0.0
        %v1628 = vmax.f32 %v1500, 0.0
        %v1629 = vmax.f32 %v1501, 0.0
        %v1630 = vmax.f32 %v1502, 0.0
        %v1631 = vmax.f32 %v1503, 0.0
        %v1632 = vmax.f32 %v1504, 0.0
        %v1633 = vmax.f32 %v1505, 0.0
        %v1634 = vmax.f32 %v1506, 0.0
        %v1635 = vmax.f32 %v1507, 0.0
        %v1636 = vmax.f32 %v1508, 0.0
        %v1637 = vmax.f32 %v1509, 0.0
        %v1638 = vmax.f32 %v1510, 0.0
        %v1639 = vmax.f32 %v1511, 0.0
        %v1640 = vmax.f32 %v1512, 0.0
        %v1641 = vmax.f32 %v1513, 0.0
        %v1642 = vmax.f32 %v1514, 0.0
        %v1643 = vmax.f32 %v1515, 0.0
        %v1644 = vmax.f32 %v1516, 0.0
        %v1645 = vmax.f32 %v1517, 0.0
        %v1646 = vmax.f32 %v1518, 0.0
        %v1647 = vmax.f32 %v1519, 0.0
        %v1648 = vmax.f32 %v1520, 0.0
        %v1649 = vmax.f32 %v1521, 0.0
        %v1650 = vmax.f32 %v1522, 0.0
        %v1651 = vmax.f32 %v1523, 0.0
        %v1652 = vmax.f32 %v1524, 0.0
        %v1653 = vmax.f32 %v1525, 0.0
        %v1654 = vmax.f32 %v1526, 0.0
        %v1655 = vmax.f32 %v1527, 0.0
        %v1656 = vmax.f32 %v1528, 0.0
        %v1657 = vmax.f32 %v1529, 0.0
        %v1658 = vmax.f32 %v1530, 0.0
        %v1659 = vmax.f32 %v1531, 0.0
        %v1660 = vmax.f32 %v1532, 0.0
        %v1661 = vmax.f32 %v1533, 0.0
        %v1662 = vmax.f32 %v1534, 0.0
        %v1663 = vmax.f32 %v1535, 0.0
        %v1664 = vmax.f32 %v1536, 0.0
        %v1665 = vmax.f32 %v1537, 0.0
        %v1666 = vmax.f32 %v1538, 0.0
        %v1667 = vmax.f32 %v1539, 0.0
        %v1668 = vmax.f32 %v1540, 0.0
        %v1669 = vmax.f32 %v1541, 0.0
        %v1670 = vld [vmem:[%s3] sm:$0xff]
        %v1671 = vld [vmem:[%s3 + $0x8] sm:$0xff]
        %v1672 = vld [vmem:[%s4] sm:$0xff]
        %1674 = vset.pattern.permute.xlu0 0
        %1675 = vperm.xlu0 %1674, %v1672
        %v1676 = vpop.permute.xlu0 %1675
        %1678 = vmatprep.subr.mxu0 %v1543
        %1679 = vmatpush1.msra.mxu0 %v1542
        %1680 = vmatprep.subr.mxu0 %v1547
        %1681 = vmatpush1.msra.mxu0 %v1546
        %1682 = vmatprep.subr.mxu0 %v1551
        %1683 = vmatpush1.msra.mxu0 %v1550
        %1684 = vmatprep.subr.mxu0 %v1555
        %1685 = vmatpush1.msra.mxu0 %v1554
        %1686 = vmatprep.subr.mxu0 %v1559
        %1687 = vmatpush1.msra.mxu0 %v1558
        %1688 = vmatprep.subr.mxu0 %v1563
        %1689 = vmatpush1.msra.mxu0 %v1562
        %1690 = vmatprep.subr.mxu0 %v1567
        %1691 = vmatpush1.msra.mxu0 %v1566
        %1692 = vmatprep.subr.mxu0 %v1571
        %1693 = vmatpush1.msra.mxu0 %v1570
        %1694 = vmatprep.subr.mxu0 %v1575
        %1695 = vmatpush1.msra.mxu0 %v1574
        %1696 = vmatprep.subr.mxu0 %v1579
        %1697 = vmatpush1.msra.mxu0 %v1578
        %1698 = vmatprep.subr.mxu0 %v1583
        %1699 = vmatpush1.msra.mxu0 %v1582
        %1700 = vmatprep.subr.mxu0 %v1587
        %1701 = vmatpush1.msra.mxu0 %v1586
        %1702 = vmatprep.subr.mxu0 %v1591
        %1703 = vmatpush1.msra.mxu0 %v1590
        %1704 = vmatprep.subr.mxu0 %v1595
        %1705 = vmatpush1.msra.mxu0 %v1594
        %1706 = vmatprep.subr.mxu0 %v1599
        %1707 = vmatpush1.msra.mxu0 %v1598
        %1708 = vmatprep.subr.mxu0 %v1603
        %1709 = vmatpush1.msra.mxu0 %v1602
        %1710 = vmatprep.subr.mxu0 %v1607
        %1711 = vmatpush1.msra.mxu0 %v1606
        %1712 = vmatprep.subr.mxu0 %v1611
        %1713 = vmatpush1.msra.mxu0 %v1610
        %1714 = vmatprep.subr.mxu0 %v1615
        %1715 = vmatpush1.msra.mxu0 %v1614
        %1716 = vmatprep.subr.mxu0 %v1619
        %1717 = vmatpush1.msra.mxu0 %v1618
        %1718 = vmatprep.subr.mxu0 %v1623
        %1719 = vmatpush1.msra.mxu0 %v1622
        %1720 = vmatprep.subr.mxu0 %v1627
        %1721 = vmatpush1.msra.mxu0 %v1626
        %1722 = vmatprep.subr.mxu0 %v1631
        %1723 = vmatpush1.msra.mxu0 %v1630
        %1724 = vmatprep.subr.mxu0 %v1635
        %1725 = vmatpush1.msra.mxu0 %v1634
        %1726 = vmatprep.subr.mxu0 %v1639
        %1727 = vmatpush1.msra.mxu0 %v1638
        %1728 = vmatprep.subr.mxu0 %v1643
        %1729 = vmatpush1.msra.mxu0 %v1642
        %1730 = vmatprep.subr.mxu0 %v1647
        %1731 = vmatpush1.msra.mxu0 %v1646
        %1732 = vmatprep.subr.mxu0 %v1651
        %1733 = vmatpush1.msra.mxu0 %v1650
        %1734 = vmatprep.subr.mxu0 %v1655
        %1735 = vmatpush1.msra.mxu0 %v1654
        %1736 = vmatprep.subr.mxu0 %v1659
        %1737 = vmatpush1.msra.mxu0 %v1658
        %1738 = vmatprep.subr.mxu0 %v1663
        %1739 = vmatpush1.msra.mxu0 %v1662
        %1740 = vmatprep.subr.mxu0 %v1667
        %1741 = vmatpush1.msra.mxu0 %v1666
        %1742 = vmatprep.mubr.f32.mxu0 %v1671
        %1743 = vmatmul.mubr.f32.gmra.mrb[0].mxu0 %v1670
        %v1744 = vpop.f32.mrb[0].mxu0
        %v1745 = vadd.f32 %v1676, %v1744
        %v1746 = vpop.f32.mrb[0].mxu0
        %v1747 = vadd.f32 %v1676, %v1746
        %1748 = vdwg.mxu0
        %1749 = vmatprep.subr.mxu0 %v1545
        %1750 = vmatpush1.msra.mxu0 %v1544
        %1751 = vmatprep.subr.mxu0 %v1549
        %1752 = vmatpush1.msra.mxu0 %v1548
        %1753 = vmatprep.subr.mxu0 %v1553
        %1754 = vmatpush1.msra.mxu0 %v1552
        %1755 = vmatprep.subr.mxu0 %v1557
        %1756 = vmatpush1.msra.mxu0 %v1556
        %1757 = vmatprep.subr.mxu0 %v1561
        %1758 = vmatpush1.msra.mxu0 %v1560
        %1759 = vmatprep.subr.mxu0 %v1565
        %1760 = vmatpush1.msra.mxu0 %v1564
        %1761 = vmatprep.subr.mxu0 %v1569
        %1762 = vmatpush1.msra.mxu0 %v1568
        %1763 = vmatprep.subr.mxu0 %v1573
        %1764 = vmatpush1.msra.mxu0 %v1572
        %1765 = vmatprep.subr.mxu0 %v1577
        %1766 = vmatpush1.msra.mxu0 %v1576
        %1767 = vmatprep.subr.mxu0 %v1581
        %1768 = vmatpush1.msra.mxu0 %v1580
        %1769 = vmatprep.subr.mxu0 %v1585
        %1770 = vmatpush1.msra.mxu0 %v1584
        %1771 = vmatprep.subr.mxu0 %v1589
        %1772 = vmatpush1.msra.mxu0 %v1588
        %1773 = vmatprep.subr.mxu0 %v1593
        %1774 = vmatpush1.msra.mxu0 %v1592
        %1775 = vmatprep.subr.mxu0 %v1597
        %1776 = vmatpush1.msra.mxu0 %v1596
        %1777 = vmatprep.subr.mxu0 %v1601
        %1778 = vmatpush1.msra.mxu0 %v1600
        %1779 = vmatprep.subr.mxu0 %v1605
        %1780 = vmatpush1.msra.mxu0 %v1604
        %1781 = vmatprep.subr.mxu0 %v1609
        %1782 = vmatpush1.msra.mxu0 %v1608
        %1783 = vmatprep.subr.mxu0 %v1613
        %1784 = vmatpush1.msra.mxu0 %v1612
        %1785 = vmatprep.subr.mxu0 %v1617
        %1786 = vmatpush1.msra.mxu0 %v1616
        %1787 = vmatprep.subr.mxu0 %v1621
        %1788 = vmatpush1.msra.mxu0 %v1620
        %1789 = vmatprep.subr.mxu0 %v1625
        %1790 = vmatpush1.msra.mxu0 %v1624
        %1791 = vmatprep.subr.mxu0 %v1629
        %1792 = vmatpush1.msra.mxu0 %v1628
        %1793 = vmatprep.subr.mxu0 %v1633
        %1794 = vmatpush1.msra.mxu0 %v1632
        %1795 = vmatprep.subr.mxu0 %v1637
        %1796 = vmatpush1.msra.mxu0 %v1636
        %1797 = vmatprep.subr.mxu0 %v1641
        %1798 = vmatpush1.msra.mxu0 %v1640
        %1799 = vmatprep.subr.mxu0 %v1645
        %1800 = vmatpush1.msra.mxu0 %v1644
        %1801 = vmatprep.subr.mxu0 %v1649
        %1802 = vmatpush1.msra.mxu0 %v1648
        %1803 = vmatprep.subr.mxu0 %v1653
        %1804 = vmatpush1.msra.mxu0 %v1652
        %1805 = vmatprep.subr.mxu0 %v1657
        %1806 = vmatpush1.msra.mxu0 %v1656
        %1807 = vmatprep.subr.mxu0 %v1661
        %1808 = vmatpush1.msra.mxu0 %v1660
        %1809 = vmatprep.subr.mxu0 %v1665
        %1810 = vmatpush1.msra.mxu0 %v1664
        %1811 = vmatprep.subr.mxu0 %v1669
        %1812 = vmatpush1.msra.mxu0 %v1668
        %1813 = vmatprep.mubr.f32.mxu0 %v1671
        %1814 = vmatmul.mubr.f32.gmra.mrb[0].mxu0 %v1670
        %v1815 = vpop.f32.mrb[0].mxu0
        %v1816 = vadd.f32 %v1676, %v1815
        %v1817 = vpop.f32.mrb[0].mxu0
        %v1818 = vadd.f32 %v1676, %v1817
        %1819 = vdwg.mxu0
        %vm1820 = vcmp.gt.f32.partialorder %v1745, 0.0
        %vm1821 = vcmp.gt.f32.partialorder %v1747, 0.0
        %vm1822 = vcmp.gt.f32.partialorder %v1816, 0.0
        %vm1823 = vcmp.gt.f32.partialorder %v1818, 0.0
        %v1824 = vld [vmem:[%s5] sm:$0xff]
        %1826 = vset.pattern.permute.xlu0 0
        %1827 = vperm.xlu0 %1826, %v1824
        %v1828 = vpop.permute.xlu0 %1827
        %v1830 = vadd.f32 %v1745, %v1828
        %v1831 = vadd.f32 %v1747, %v1828
        %v1832 = vadd.f32 %v1816, %v1828
        %v1833 = vadd.f32 %v1818, %v1828
        %v1834 = vsel %vm1820, %v1830, 0.0
        %v1835 = vsel %vm1821, %v1831, 0.0
        %v1836 = vsel %vm1822, %v1832, 0.0
        %v1837 = vsel %vm1823, %v1833, 0.0
        %v1838 = vld [vmem:[%s6] sm:$0xff]
        %v1839 = vld [vmem:[%s7] sm:$0xff]
        %1841 = vset.pattern.permute.xlu0 0
        %1842 = vperm.xlu0 %1841, %v1838
        %v1843 = vpop.permute.xlu0 %1842
        %v1845 = vlaneseq
        %v1846 = vshrl.u32 %v1845, 7
        %v1847 = vsub.s32 0, %v1846
        %v1848 = vrot.slane %v1834, %v1847
        %v1849 = vlaneseq
        %v1850 = vshrl.u32 %v1849, 7
        %v1851 = vsub.s32 0, %v1850
        %v1852 = vrot.slane %v1835, %v1851
        %v1853 = vlaneseq
        %v1854 = vshrl.u32 %v1853, 7
        %v1855 = vsub.s32 0, %v1854
        %v1856 = vrot.slane %v1836, %v1855
        %v1857 = vlaneseq
        %v1858 = vshrl.u32 %v1857, 7
        %v1859 = vsub.s32 0, %v1858
        %v1860 = vrot.slane %v1837, %v1859
        %v1861 = vmul.f32 %v1843, %v1848
        %v1862 = vmul.f32 %v1843, %v1852
        %v1863 = vmul.f32 %v1843, %v1856
        %v1864 = vmul.f32 %v1843, %v1860
        %1866 = vset.pattern.permute.xlu0 0
        %1867 = vperm.xlu0 %1866, %v1839
        %v1868 = vpop.permute.xlu0 %1867
        %v1870 = vadd.f32 %v1868, %v1861
        %v1871 = vadd.f32 %v1868, %v1862
        %v1872 = vadd.f32 %v1868, %v1863
        %v1873 = vadd.f32 %v1868, %v1864
        %1874 = vset.pattern.permute.xlu0 1
        %1875 = vperm.xlu0 %1874, %v1838
        %v1876 = vpop.permute.xlu0 %1875
        %v1878 = vlaneseq
        %v1879 = vshrl.u32 %v1878, 7
        %v1880 = vsub.s32 1, %v1879
        %v1881 = vrot.slane %v1834, %v1880
        %v1882 = vlaneseq
        %v1883 = vshrl.u32 %v1882, 7
        %v1884 = vsub.s32 1, %v1883
        %v1885 = vrot.slane %v1835, %v1884
        %v1886 = vlaneseq
        %v1887 = vshrl.u32 %v1886, 7
        %v1888 = vsub.s32 1, %v1887
        %v1889 = vrot.slane %v1836, %v1888
        %v1890 = vlaneseq
        %v1891 = vshrl.u32 %v1890, 7
        %v1892 = vsub.s32 1, %v1891
        %v1893 = vrot.slane %v1837, %v1892
        %v1894 = vmul.f32 %v1876, %v1881
        %v1895 = vmul.f32 %v1876, %v1885
        %v1896 = vmul.f32 %v1876, %v1889
        %v1897 = vmul.f32 %v1876, %v1893
        %v1898 = vadd.f32 %v1870, %v1894
        %v1899 = vadd.f32 %v1871, %v1895
        %v1900 = vadd.f32 %v1872, %v1896
        %v1901 = vadd.f32 %v1873, %v1897
        %1902 = vset.pattern.permute.xlu0 2
        %1903 = vperm.xlu0 %1902, %v1838
        %v1904 = vpop.permute.xlu0 %1903
        %v1906 = vlaneseq
        %v1907 = vshrl.u32 %v1906, 7
        %v1908 = vsub.s32 2, %v1907
        %v1909 = vrot.slane %v1834, %v1908
        %v1910 = vlaneseq
        %v1911 = vshrl.u32 %v1910, 7
        %v1912 = vsub.s32 2, %v1911
        %v1913 = vrot.slane %v1835, %v1912
        %v1914 = vlaneseq
        %v1915 = vshrl.u32 %v1914, 7
        %v1916 = vsub.s32 2, %v1915
        %v1917 = vrot.slane %v1836, %v1916
        %v1918 = vlaneseq
        %v1919 = vshrl.u32 %v1918, 7
        %v1920 = vsub.s32 2, %v1919
        %v1921 = vrot.slane %v1837, %v1920
        %v1922 = vmul.f32 %v1904, %v1909
        %v1923 = vmul.f32 %v1904, %v1913
        %v1924 = vmul.f32 %v1904, %v1917
        %v1925 = vmul.f32 %v1904, %v1921
        %v1926 = vadd.f32 %v1898, %v1922
        %v1927 = vadd.f32 %v1899, %v1923
        %v1928 = vadd.f32 %v1900, %v1924
        %v1929 = vadd.f32 %v1901, %v1925
        %1930 = vset.pattern.permute.xlu0 3
        %1931 = vperm.xlu0 %1930, %v1838
        %v1932 = vpop.permute.xlu0 %1931
        %v1934 = vlaneseq
        %v1935 = vshrl.u32 %v1934, 7
        %v1936 = vsub.s32 3, %v1935
        %v1937 = vrot.slane %v1834, %v1936
        %v1938 = vlaneseq
        %v1939 = vshrl.u32 %v1938, 7
        %v1940 = vsub.s32 3, %v1939
        %v1941 = vrot.slane %v1835, %v1940
        %v1942 = vlaneseq
        %v1943 = vshrl.u32 %v1942, 7
        %v1944 = vsub.s32 3, %v1943
        %v1945 = vrot.slane %v1836, %v1944
        %v1946 = vlaneseq
        %v1947 = vshrl.u32 %v1946, 7
        %v1948 = vsub.s32 3, %v1947
        %v1949 = vrot.slane %v1837, %v1948
        %v1950 = vmul.f32 %v1932, %v1937
        %v1951 = vmul.f32 %v1932, %v1941
        %v1952 = vmul.f32 %v1932, %v1945
        %v1953 = vmul.f32 %v1932, %v1949
        %v1954 = vadd.f32 %v1926, %v1950
        %v1955 = vadd.f32 %v1927, %v1951
        %v1956 = vadd.f32 %v1928, %v1952
        %v1957 = vadd.f32 %v1929, %v1953
        %1958 = vset.pattern.permute.xlu0 4
        %1959 = vperm.xlu0 %1958, %v1838
        %v1960 = vpop.permute.xlu0 %1959
        %v1962 = vlaneseq
        %v1963 = vshrl.u32 %v1962, 7
        %v1964 = vsub.s32 4, %v1963
        %v1965 = vrot.slane %v1834, %v1964
        %v1966 = vlaneseq
        %v1967 = vshrl.u32 %v1966, 7
        %v1968 = vsub.s32 4, %v1967
        %v1969 = vrot.slane %v1835, %v1968
        %v1970 = vlaneseq
        %v1971 = vshrl.u32 %v1970, 7
        %v1972 = vsub.s32 4, %v1971
        %v1973 = vrot.slane %v1836, %v1972
        %v1974 = vlaneseq
        %v1975 = vshrl.u32 %v1974, 7
        %v1976 = vsub.s32 4, %v1975
        %v1977 = vrot.slane %v1837, %v1976
        %v1978 = vmul.f32 %v1960, %v1965
        %v1979 = vmul.f32 %v1960, %v1969
        %v1980 = vmul.f32 %v1960, %v1973
        %v1981 = vmul.f32 %v1960, %v1977
        %v1982 = vadd.f32 %v1954, %v1978
        %v1983 = vadd.f32 %v1955, %v1979
        %v1984 = vadd.f32 %v1956, %v1980
        %v1985 = vadd.f32 %v1957, %v1981
        %1986 = vset.pattern.permute.xlu0 5
        %1987 = vperm.xlu0 %1986, %v1838
        %v1988 = vpop.permute.xlu0 %1987
        %v1990 = vlaneseq
        %v1991 = vshrl.u32 %v1990, 7
        %v1992 = vsub.s32 5, %v1991
        %v1993 = vrot.slane %v1834, %v1992
        %v1994 = vlaneseq
        %v1995 = vshrl.u32 %v1994, 7
        %v1996 = vsub.s32 5, %v1995
        %v1997 = vrot.slane %v1835, %v1996
        %v1998 = vlaneseq
        %v1999 = vshrl.u32 %v1998, 7
        %v2000 = vsub.s32 5, %v1999
        %v2001 = vrot.slane %v1836, %v2000
        %v2002 = vlaneseq
        %v2003 = vshrl.u32 %v2002, 7
        %v2004 = vsub.s32 5, %v2003
        %v2005 = vrot.slane %v1837, %v2004
        %v2006 = vmul.f32 %v1988, %v1993
        %v2007 = vmul.f32 %v1988, %v1997
        %v2008 = vmul.f32 %v1988, %v2001
        %v2009 = vmul.f32 %v1988, %v2005
        %v2010 = vadd.f32 %v1982, %v2006
        %v2011 = vadd.f32 %v1983, %v2007
        %v2012 = vadd.f32 %v1984, %v2008
        %v2013 = vadd.f32 %v1985, %v2009
        %2014 = vset.pattern.permute.xlu0 6
        %2015 = vperm.xlu0 %2014, %v1838
        %v2016 = vpop.permute.xlu0 %2015
        %v2018 = vlaneseq
        %v2019 = vshrl.u32 %v2018, 7
        %v2020 = vsub.s32 6, %v2019
        %v2021 = vrot.slane %v1834, %v2020
        %v2022 = vlaneseq
        %v2023 = vshrl.u32 %v2022, 7
        %v2024 = vsub.s32 6, %v2023
        %v2025 = vrot.slane %v1835, %v2024
        %v2026 = vlaneseq
        %v2027 = vshrl.u32 %v2026, 7
        %v2028 = vsub.s32 6, %v2027
        %v2029 = vrot.slane %v1836, %v2028
        %v2030 = vlaneseq
        %v2031 = vshrl.u32 %v2030, 7
        %v2032 = vsub.s32 6, %v2031
        %v2033 = vrot.slane %v1837, %v2032
        %v2034 = vmul.f32 %v2016, %v2021
        %v2035 = vmul.f32 %v2016, %v2025
        %v2036 = vmul.f32 %v2016, %v2029
        %v2037 = vmul.f32 %v2016, %v2033
        %v2038 = vadd.f32 %v2010, %v2034
        %v2039 = vadd.f32 %v2011, %v2035
        %v2040 = vadd.f32 %v2012, %v2036
        %v2041 = vadd.f32 %v2013, %v2037
        %2042 = vset.pattern.permute.xlu0 7
        %2043 = vperm.xlu0 %2042, %v1838
        %v2044 = vpop.permute.xlu0 %2043
        %v2046 = vlaneseq
        %v2047 = vshrl.u32 %v2046, 7
        %v2048 = vsub.s32 7, %v2047
        %v2049 = vrot.slane %v1834, %v2048
        %v2050 = vlaneseq
        %v2051 = vshrl.u32 %v2050, 7
        %v2052 = vsub.s32 7, %v2051
        %v2053 = vrot.slane %v1835, %v2052
        %v2054 = vlaneseq
        %v2055 = vshrl.u32 %v2054, 7
        %v2056 = vsub.s32 7, %v2055
        %v2057 = vrot.slane %v1836, %v2056
        %v2058 = vlaneseq
        %v2059 = vshrl.u32 %v2058, 7
        %v2060 = vsub.s32 7, %v2059
        %v2061 = vrot.slane %v1837, %v2060
        %v2062 = vmul.f32 %v2044, %v2049
        %v2063 = vmul.f32 %v2044, %v2053
        %v2064 = vmul.f32 %v2044, %v2057
        %v2065 = vmul.f32 %v2044, %v2061
        %v2066 = vadd.f32 %v2038, %v2062
        %v2067 = vadd.f32 %v2039, %v2063
        %v2068 = vadd.f32 %v2040, %v2064
        %v2069 = vadd.f32 %v2041, %v2065
        %vm2070 = vcmp.gt.f32.partialorder %v2066, 0.0
        %vm2071 = vcmp.gt.f32.partialorder %v2067, 0.0
        %vm2072 = vcmp.gt.f32.partialorder %v2068, 0.0
        %vm2073 = vcmp.gt.f32.partialorder %v2069, 0.0
        %v2074 = vld [vmem:[%s8] sm:$0xff]
        %2076 = vset.pattern.permute.xlu0 0
        %2077 = vperm.xlu0 %2076, %v2074
        %v2078 = vpop.permute.xlu0 %2077
        %v2080 = vadd.f32 %v2066, %v2078
        %v2081 = vadd.f32 %v2067, %v2078
        %v2082 = vadd.f32 %v2068, %v2078
        %v2083 = vadd.f32 %v2069, %v2078
        %v2084 = vsel %vm2070, %v2080, 0.0
        %v2085 = vsel %vm2071, %v2081, 0.0
        %v2086 = vsel %vm2072, %v2082, 0.0
        %v2087 = vsel %vm2073, %v2083, 0.0
        %v2088 = vld [vmem:[%s9] sm:$0xff]
        %v2089 = vld [vmem:[%s9 + $0x8] sm:$0xff]
        %v2090 = vld [vmem:[%s9 + $0x10] sm:$0xff]
        %v2091 = vld [vmem:[%s9 + $0x18] sm:$0xff]
        %v2092 = vld [vmem:[%s9 + $0x20] sm:$0xff]
        %v2093 = vld [vmem:[%s9 + $0x28] sm:$0xff]
        %v2094 = vld [vmem:[%s9 + $0x30] sm:$0xff]
        %v2095 = vld [vmem:[%s9 + $0x38] sm:$0xff]
        %v2096 = vld [vmem:[%s9 + $0x40] sm:$0xff]
        %v2097 = vld [vmem:[%s9 + $0x48] sm:$0xff]
        %v2098 = vld [vmem:[%s9 + $0x50] sm:$0xff]
        %v2099 = vld [vmem:[%s9 + $0x58] sm:$0xff]
        %v2100 = vld [vmem:[%s9 + $0x60] sm:$0xff]
        %v2101 = vld [vmem:[%s9 + $0x68] sm:$0xff]
        %v2102 = vld [vmem:[%s9 + $0x70] sm:$0xff]
        %v2103 = vld [vmem:[%s9 + $0x78] sm:$0xff]
        %v2104 = vld [vmem:[%s9 + $0x80] sm:$0xff]
        %v2105 = vld [vmem:[%s9 + $0x88] sm:$0xff]
        %v2106 = vld [vmem:[%s9 + $0x90] sm:$0xff]
        %v2107 = vld [vmem:[%s9 + $0x98] sm:$0xff]
        %v2108 = vld [vmem:[%s9 + $0xa0] sm:$0xff]
        %v2109 = vld [vmem:[%s9 + $0xa8] sm:$0xff]
        %v2110 = vld [vmem:[%s9 + $0xb0] sm:$0xff]
        %v2111 = vld [vmem:[%s9 + $0xb8] sm:$0xff]
        %v2112 = vld [vmem:[%s9 + $0xc0] sm:$0xff]
        %v2113 = vld [vmem:[%s9 + $0xc8] sm:$0xff]
        %v2114 = vld [vmem:[%s9 + $0xd0] sm:$0xff]
        %v2115 = vld [vmem:[%s9 + $0xd8] sm:$0xff]
        %v2116 = vld [vmem:[%s9 + $0xe0] sm:$0xff]
        %v2117 = vld [vmem:[%s9 + $0xe8] sm:$0xff]
        %v2118 = vld [vmem:[%s9 + $0xf0] sm:$0xff]
        %v2119 = vld [vmem:[%s9 + $0xf8] sm:$0xff]
        %v2120 = vld [vmem:[%s10] sm:$0xff]
        %v2121 = vld [vmem:[%s10 + $0x8] sm:$0xff]
        %v2122 = vld [vmem:[%s10 + $0x10] sm:$0xff]
        %v2123 = vld [vmem:[%s10 + $0x18] sm:$0xff]
        %v2124 = vld [vmem:[%s10 + $0x20] sm:$0xff]
        %v2125 = vld [vmem:[%s10 + $0x28] sm:$0xff]
        %v2126 = vld [vmem:[%s10 + $0x30] sm:$0xff]
        %v2127 = vld [vmem:[%s10 + $0x38] sm:$0xff]
        %v2128 = vld [vmem:[%s10 + $0x40] sm:$0xff]
        %v2129 = vld [vmem:[%s10 + $0x48] sm:$0xff]
        %v2130 = vld [vmem:[%s10 + $0x50] sm:$0xff]
        %v2131 = vld [vmem:[%s10 + $0x58] sm:$0xff]
        %v2132 = vld [vmem:[%s10 + $0x60] sm:$0xff]
        %v2133 = vld [vmem:[%s10 + $0x68] sm:$0xff]
        %v2134 = vld [vmem:[%s10 + $0x70] sm:$0xff]
        %v2135 = vld [vmem:[%s10 + $0x78] sm:$0xff]
        %v2136 = vld [vmem:[%s10 + $0x80] sm:$0xff]
        %v2137 = vld [vmem:[%s10 + $0x88] sm:$0xff]
        %v2138 = vld [vmem:[%s10 + $0x90] sm:$0xff]
        %v2139 = vld [vmem:[%s10 + $0x98] sm:$0xff]
        %v2140 = vld [vmem:[%s10 + $0xa0] sm:$0xff]
        %v2141 = vld [vmem:[%s10 + $0xa8] sm:$0xff]
        %v2142 = vld [vmem:[%s10 + $0xb0] sm:$0xff]
        %v2143 = vld [vmem:[%s10 + $0xb8] sm:$0xff]
        %v2144 = vld [vmem:[%s10 + $0xc0] sm:$0xff]
        %v2145 = vld [vmem:[%s10 + $0xc8] sm:$0xff]
        %v2146 = vld [vmem:[%s10 + $0xd0] sm:$0xff]
        %v2147 = vld [vmem:[%s10 + $0xd8] sm:$0xff]
        %v2148 = vld [vmem:[%s10 + $0xe0] sm:$0xff]
        %v2149 = vld [vmem:[%s10 + $0xe8] sm:$0xff]
        %v2150 = vld [vmem:[%s10 + $0xf0] sm:$0xff]
        %v2151 = vld [vmem:[%s10 + $0xf8] sm:$0xff]
        %2153 = vset.pattern.permute.xlu0 0
        %2154 = vperm.xlu0 %2153, %v2120
        %v2155 = vpop.permute.xlu0 %2154
        %2158 = vset.pattern.permute.xlu0 0
        %2159 = vperm.xlu0 %2158, %v2121
        %v2160 = vpop.permute.xlu0 %2159
        %2163 = vset.pattern.permute.xlu0 0
        %2164 = vperm.xlu0 %2163, %v2122
        %v2165 = vpop.permute.xlu0 %2164
        %2168 = vset.pattern.permute.xlu0 0
        %2169 = vperm.xlu0 %2168, %v2123
        %v2170 = vpop.permute.xlu0 %2169
        %2173 = vset.pattern.permute.xlu0 0
        %2174 = vperm.xlu0 %2173, %v2124
        %v2175 = vpop.permute.xlu0 %2174
        %2178 = vset.pattern.permute.xlu0 0
        %2179 = vperm.xlu0 %2178, %v2125
        %v2180 = vpop.permute.xlu0 %2179
        %2183 = vset.pattern.permute.xlu0 0
        %2184 = vperm.xlu0 %2183, %v2126
        %v2185 = vpop.permute.xlu0 %2184
        %2188 = vset.pattern.permute.xlu0 0
        %2189 = vperm.xlu0 %2188, %v2127
        %v2190 = vpop.permute.xlu0 %2189
        %2193 = vset.pattern.permute.xlu0 0
        %2194 = vperm.xlu0 %2193, %v2128
        %v2195 = vpop.permute.xlu0 %2194
        %2198 = vset.pattern.permute.xlu0 0
        %2199 = vperm.xlu0 %2198, %v2129
        %v2200 = vpop.permute.xlu0 %2199
        %2203 = vset.pattern.permute.xlu0 0
        %2204 = vperm.xlu0 %2203, %v2130
        %v2205 = vpop.permute.xlu0 %2204
        %2208 = vset.pattern.permute.xlu0 0
        %2209 = vperm.xlu0 %2208, %v2131
        %v2210 = vpop.permute.xlu0 %2209
        %2213 = vset.pattern.permute.xlu0 0
        %2214 = vperm.xlu0 %2213, %v2132
        %v2215 = vpop.permute.xlu0 %2214
        %2218 = vset.pattern.permute.xlu0 0
        %2219 = vperm.xlu0 %2218, %v2133
        %v2220 = vpop.permute.xlu0 %2219
        %2223 = vset.pattern.permute.xlu0 0
        %2224 = vperm.xlu0 %2223, %v2134
        %v2225 = vpop.permute.xlu0 %2224
        %2228 = vset.pattern.permute.xlu0 0
        %2229 = vperm.xlu0 %2228, %v2135
        %v2230 = vpop.permute.xlu0 %2229
        %2233 = vset.pattern.permute.xlu0 0
        %2234 = vperm.xlu0 %2233, %v2136
        %v2235 = vpop.permute.xlu0 %2234
        %2238 = vset.pattern.permute.xlu0 0
        %2239 = vperm.xlu0 %2238, %v2137
        %v2240 = vpop.permute.xlu0 %2239
        %2243 = vset.pattern.permute.xlu0 0
        %2244 = vperm.xlu0 %2243, %v2138
        %v2245 = vpop.permute.xlu0 %2244
        %2248 = vset.pattern.permute.xlu0 0
        %2249 = vperm.xlu0 %2248, %v2139
        %v2250 = vpop.permute.xlu0 %2249
        %2253 = vset.pattern.permute.xlu0 0
        %2254 = vperm.xlu0 %2253, %v2140
        %v2255 = vpop.permute.xlu0 %2254
        %2258 = vset.pattern.permute.xlu0 0
        %2259 = vperm.xlu0 %2258, %v2141
        %v2260 = vpop.permute.xlu0 %2259
        %2263 = vset.pattern.permute.xlu0 0
        %2264 = vperm.xlu0 %2263, %v2142
        %v2265 = vpop.permute.xlu0 %2264
        %2268 = vset.pattern.permute.xlu0 0
        %2269 = vperm.xlu0 %2268, %v2143
        %v2270 = vpop.permute.xlu0 %2269
        %2273 = vset.pattern.permute.xlu0 0
        %2274 = vperm.xlu0 %2273, %v2144
        %v2275 = vpop.permute.xlu0 %2274
        %2278 = vset.pattern.permute.xlu0 0
        %2279 = vperm.xlu0 %2278, %v2145
        %v2280 = vpop.permute.xlu0 %2279
        %2283 = vset.pattern.permute.xlu0 0
        %2284 = vperm.xlu0 %2283, %v2146
        %v2285 = vpop.permute.xlu0 %2284
        %2288 = vset.pattern.permute.xlu0 0
        %2289 = vperm.xlu0 %2288, %v2147
        %v2290 = vpop.permute.xlu0 %2289
        %2293 = vset.pattern.permute.xlu0 0
        %2294 = vperm.xlu0 %2293, %v2148
        %v2295 = vpop.permute.xlu0 %2294
        %2298 = vset.pattern.permute.xlu0 0
        %2299 = vperm.xlu0 %2298, %v2149
        %v2300 = vpop.permute.xlu0 %2299
        %2303 = vset.pattern.permute.xlu0 0
        %2304 = vperm.xlu0 %2303, %v2150
        %v2305 = vpop.permute.xlu0 %2304
        %2308 = vset.pattern.permute.xlu0 0
        %2309 = vperm.xlu0 %2308, %v2151
        %v2310 = vpop.permute.xlu0 %2309
        %vm2312 = vcmask 64512
        %v2314 = vsel %vm2312, %v2088, 0
        %v2317 = vsel %vm2312, %v2089, 0
        %v2320 = vsel %vm2312, %v2090, 0
        %v2323 = vsel %vm2312, %v2091, 0
        %v2326 = vsel %vm2312, %v2092, 0
        %v2329 = vsel %vm2312, %v2093, 0
        %v2332 = vsel %vm2312, %v2094, 0
        %v2335 = vsel %vm2312, %v2095, 0
        %v2338 = vsel %vm2312, %v2096, 0
        %v2341 = vsel %vm2312, %v2097, 0
        %v2344 = vsel %vm2312, %v2098, 0
        %v2347 = vsel %vm2312, %v2099, 0
        %v2350 = vsel %vm2312, %v2100, 0
        %v2353 = vsel %vm2312, %v2101, 0
        %v2356 = vsel %vm2312, %v2102, 0
        %v2359 = vsel %vm2312, %v2103, 0
        %v2362 = vsel %vm2312, %v2104, 0
        %v2365 = vsel %vm2312, %v2105, 0
        %v2368 = vsel %vm2312, %v2106, 0
        %v2371 = vsel %vm2312, %v2107, 0
        %v2374 = vsel %vm2312, %v2108, 0
        %v2377 = vsel %vm2312, %v2109, 0
        %v2380 = vsel %vm2312, %v2110, 0
        %v2383 = vsel %vm2312, %v2111, 0
        %v2386 = vsel %vm2312, %v2112, 0
        %v2389 = vsel %vm2312, %v2113, 0
        %v2392 = vsel %vm2312, %v2114, 0
        %v2395 = vsel %vm2312, %v2115, 0
        %v2398 = vsel %vm2312, %v2116, 0
        %v2401 = vsel %vm2312, %v2117, 0
        %v2404 = vsel %vm2312, %v2118, 0
        %v2407 = vsel %vm2312, %v2119, 0
        %2409 = vmatprep.subr.mxu0 %v2085
        %2410 = vmatpush1.msra.mxu0 %v2084
        %2411 = vmatprep.subr.mxu0 0.0
        %2412 = vmatpush1.msra.mxu0 0.0
        %2413 = vmatprep.subr.mxu0 0.0
        %2414 = vmatpush1.msra.mxu0 0.0
        %2415 = vmatprep.subr.mxu0 0.0
        %2416 = vmatpush1.msra.mxu0 0.0
        %2417 = vmatprep.subr.mxu0 0.0
        %2418 = vmatpush1.msra.mxu0 0.0
        %2419 = vmatprep.subr.mxu0 0.0
        %2420 = vmatpush1.msra.mxu0 0.0
        %2421 = vmatprep.subr.mxu0 0.0
        %2422 = vmatpush1.msra.mxu0 0.0
        %2423 = vmatprep.subr.mxu0 0.0
        %2424 = vmatpush1.msra.mxu0 0.0
        %2425 = vmatprep.subr.mxu0 0.0
        %2426 = vmatpush1.msra.mxu0 0.0
        %2427 = vmatprep.subr.mxu0 0.0
        %2428 = vmatpush1.msra.mxu0 0.0
        %2429 = vmatprep.subr.mxu0 0.0
        %2430 = vmatpush1.msra.mxu0 0.0
        %2431 = vmatprep.subr.mxu0 0.0
        %2432 = vmatpush1.msra.mxu0 0.0
        %2433 = vmatprep.subr.mxu0 0.0
        %2434 = vmatpush1.msra.mxu0 0.0
        %2435 = vmatprep.subr.mxu0 0.0
        %2436 = vmatpush1.msra.mxu0 0.0
        %2437 = vmatprep.subr.mxu0 0.0
        %2438 = vmatpush1.msra.mxu0 0.0
        %2439 = vmatprep.subr.mxu0 0.0
        %2440 = vmatpush1.msra.mxu0 0.0
        %2441 = vmatprep.subr.mxu0 0.0
        %2442 = vmatpush1.msra.mxu0 0.0
        %2443 = vmatprep.subr.mxu0 0.0
        %2444 = vmatpush1.msra.mxu0 0.0
        %2445 = vmatprep.subr.mxu0 0.0
        %2446 = vmatpush1.msra.mxu0 0.0
        %2447 = vmatprep.subr.mxu0 0.0
        %2448 = vmatpush1.msra.mxu0 0.0
        %2449 = vmatprep.subr.mxu0 0.0
        %2450 = vmatpush1.msra.mxu0 0.0
        %2451 = vmatprep.subr.mxu0 0.0
        %2452 = vmatpush1.msra.mxu0 0.0
        %2453 = vmatprep.subr.mxu0 0.0
        %2454 = vmatpush1.msra.mxu0 0.0
        %2455 = vmatprep.subr.mxu0 0.0
        %2456 = vmatpush1.msra.mxu0 0.0
        %2457 = vmatprep.subr.mxu0 0.0
        %2458 = vmatpush1.msra.mxu0 0.0
        %2459 = vmatprep.subr.mxu0 0.0
        %2460 = vmatpush1.msra.mxu0 0.0
        %2461 = vmatprep.subr.mxu0 0.0
        %2462 = vmatpush1.msra.mxu0 0.0
        %2463 = vmatprep.subr.mxu0 0.0
        %2464 = vmatpush1.msra.mxu0 0.0
        %2465 = vmatprep.subr.mxu0 0.0
        %2466 = vmatpush1.msra.mxu0 0.0
        %2467 = vmatprep.subr.mxu0 0.0
        %2468 = vmatpush1.msra.mxu0 0.0
        %2469 = vmatprep.subr.mxu0 0.0
        %2470 = vmatpush1.msra.mxu0 0.0
        %2471 = vmatprep.subr.mxu0 0.0
        %2472 = vmatpush1.msra.mxu0 0.0
        %2473 = vmatprep.mubr.f32.mxu0 0.0
        %2474 = vmatmul.mubr.f32.gmra.mrb[0].mxu0 %v2314
        %v2475 = vpop.f32.mrb[0].mxu0
        %v2476 = vadd.f32 %v2155, %v2475
        %v2477 = vpop.f32.mrb[0].mxu0
        %v2478 = vadd.f32 %v2155, %v2477
        %2479 = vmatprep.mubr.f32.mxu0 0.0
        %2480 = vmatmul.mubr.f32.gmra.mrb[0].mxu0 %v2317
        %v2481 = vpop.f32.mrb[0].mxu0
        %v2482 = vadd.f32 %v2160, %v2481
        %v2483 = vpop.f32.mrb[0].mxu0
        %v2484 = vadd.f32 %v2160, %v2483
        %2485 = vmatprep.mubr.f32.mxu0 0.0
        %2486 = vmatmul.mubr.f32.gmra.mrb[0].mxu0 %v2320
        %v2487 = vpop.f32.mrb[0].mxu0
        %v2488 = vadd.f32 %v2165, %v2487
        %v2489 = vpop.f32.mrb[0].mxu0
        %v2490 = vadd.f32 %v2165, %v2489
        %2491 = vmatprep.mubr.f32.mxu0 0.0
        %2492 = vmatmul.mubr.f32.gmra.mrb[0].mxu0 %v2323
        %v2493 = vpop.f32.mrb[0].mxu0
        %v2494 = vadd.f32 %v2170, %v2493
        %v2495 = vpop.f32.mrb[0].mxu0
        %v2496 = vadd.f32 %v2170, %v2495
        %2497 = vmatprep.mubr.f32.mxu0 0.0
        %2498 = vmatmul.mubr.f32.gmra.mrb[0].mxu0 %v2326
        %v2499 = vpop.f32.mrb[0].mxu0
        %v2500 = vadd.f32 %v2175, %v2499
        %v2501 = vpop.f32.mrb[0].mxu0
        %v2502 = vadd.f32 %v2175, %v2501
        %2503 = vmatprep.mubr.f32.mxu0 0.0
        %2504 = vmatmul.mubr.f32.gmra.mrb[0].mxu0 %v2329
        %v2505 = vpop.f32.mrb[0].mxu0
        %v2506 = vadd.f32 %v2180, %v2505
        %v2507 = vpop.f32.mrb[0].mxu0
        %v2508 = vadd.f32 %v2180, %v2507
        %2509 = vmatprep.mubr.f32.mxu0 0.0
        %2510 = vmatmul.mubr.f32.gmra.mrb[0].mxu0 %v2332
        %v2511 = vpop.f32.mrb[0].mxu0
        %v2512 = vadd.f32 %v2185, %v2511
        %v2513 = vpop.f32.mrb[0].mxu0
        %v2514 = vadd.f32 %v2185, %v2513
        %2515 = vmatprep.mubr.f32.mxu0 0.0
        %2516 = vmatmul.mubr.f32.gmra.mrb[0].mxu0 %v2335
        %v2517 = vpop.f32.mrb[0].mxu0
        %v2518 = vadd.f32 %v2190, %v2517
        %v2519 = vpop.f32.mrb[0].mxu0
        %v2520 = vadd.f32 %v2190, %v2519
        %2521 = vmatprep.mubr.f32.mxu0 0.0
        %2522 = vmatmul.mubr.f32.gmra.mrb[0].mxu0 %v2338
        %v2523 = vpop.f32.mrb[0].mxu0
        %v2524 = vadd.f32 %v2195, %v2523
        %v2525 = vpop.f32.mrb[0].mxu0
        %v2526 = vadd.f32 %v2195, %v2525
        %2527 = vmatprep.mubr.f32.mxu0 0.0
        %2528 = vmatmul.mubr.f32.gmra.mrb[0].mxu0 %v2341
        %v2529 = vpop.f32.mrb[0].mxu0
        %v2530 = vadd.f32 %v2200, %v2529
        %v2531 = vpop.f32.mrb[0].mxu0
        %v2532 = vadd.f32 %v2200, %v2531
        %2533 = vmatprep.mubr.f32.mxu0 0.0
        %2534 = vmatmul.mubr.f32.gmra.mrb[0].mxu0 %v2344
        %v2535 = vpop.f32.mrb[0].mxu0
        %v2536 = vadd.f32 %v2205, %v2535
        %v2537 = vpop.f32.mrb[0].mxu0
        %v2538 = vadd.f32 %v2205, %v2537
        %2539 = vmatprep.mubr.f32.mxu0 0.0
        %2540 = vmatmul.mubr.f32.gmra.mrb[0].mxu0 %v2347
        %v2541 = vpop.f32.mrb[0].mxu0
        %v2542 = vadd.f32 %v2210, %v2541
        %v2543 = vpop.f32.mrb[0].mxu0
        %v2544 = vadd.f32 %v2210, %v2543
        %2545 = vmatprep.mubr.f32.mxu0 0.0
        %2546 = vmatmul.mubr.f32.gmra.mrb[0].mxu0 %v2350
        %v2547 = vpop.f32.mrb[0].mxu0
        %v2548 = vadd.f32 %v2215, %v2547
        %v2549 = vpop.f32.mrb[0].mxu0
        %v2550 = vadd.f32 %v2215, %v2549
        %2551 = vmatprep.mubr.f32.mxu0 0.0
        %2552 = vmatmul.mubr.f32.gmra.mrb[0].mxu0 %v2353
        %v2553 = vpop.f32.mrb[0].mxu0
        %v2554 = vadd.f32 %v2220, %v2553
        %v2555 = vpop.f32.mrb[0].mxu0
        %v2556 = vadd.f32 %v2220, %v2555
        %2557 = vmatprep.mubr.f32.mxu0 0.0
        %2558 = vmatmul.mubr.f32.gmra.mrb[0].mxu0 %v2356
        %v2559 = vpop.f32.mrb[0].mxu0
        %v2560 = vadd.f32 %v2225, %v2559
        %v2561 = vpop.f32.mrb[0].mxu0
        %v2562 = vadd.f32 %v2225, %v2561
        %2563 = vmatprep.mubr.f32.mxu0 0.0
        %2564 = vmatmul.mubr.f32.gmra.mrb[0].mxu0 %v2359
        %v2565 = vpop.f32.mrb[0].mxu0
        %v2566 = vadd.f32 %v2230, %v2565
        %v2567 = vpop.f32.mrb[0].mxu0
        %v2568 = vadd.f32 %v2230, %v2567
        %2569 = vmatprep.mubr.f32.mxu0 0.0
        %2570 = vmatmul.mubr.f32.gmra.mrb[0].mxu0 %v2362
        %v2571 = vpop.f32.mrb[0].mxu0
        %v2572 = vadd.f32 %v2235, %v2571
        %v2573 = vpop.f32.mrb[0].mxu0
        %v2574 = vadd.f32 %v2235, %v2573
        %2575 = vmatprep.mubr.f32.mxu0 0.0
        %2576 = vmatmul.mubr.f32.gmra.mrb[0].mxu0 %v2365
        %v2577 = vpop.f32.mrb[0].mxu0
        %v2578 = vadd.f32 %v2240, %v2577
        %v2579 = vpop.f32.mrb[0].mxu0
        %v2580 = vadd.f32 %v2240, %v2579
        %2581 = vmatprep.mubr.f32.mxu0 0.0
        %2582 = vmatmul.mubr.f32.gmra.mrb[0].mxu0 %v2368
        %v2583 = vpop.f32.mrb[0].mxu0
        %v2584 = vadd.f32 %v2245, %v2583
        %v2585 = vpop.f32.mrb[0].mxu0
        %v2586 = vadd.f32 %v2245, %v2585
        %2587 = vmatprep.mubr.f32.mxu0 0.0
        %2588 = vmatmul.mubr.f32.gmra.mrb[0].mxu0 %v2371
        %v2589 = vpop.f32.mrb[0].mxu0
        %v2590 = vadd.f32 %v2250, %v2589
        %v2591 = vpop.f32.mrb[0].mxu0
        %v2592 = vadd.f32 %v2250, %v2591
        %2593 = vmatprep.mubr.f32.mxu0 0.0
        %2594 = vmatmul.mubr.f32.gmra.mrb[0].mxu0 %v2374
        %v2595 = vpop.f32.mrb[0].mxu0
        %v2596 = vadd.f32 %v2255, %v2595
        %v2597 = vpop.f32.mrb[0].mxu0
        %v2598 = vadd.f32 %v2255, %v2597
        %2599 = vmatprep.mubr.f32.mxu0 0.0
        %2600 = vmatmul.mubr.f32.gmra.mrb[0].mxu0 %v2377
        %v2601 = vpop.f32.mrb[0].mxu0
        %v2602 = vadd.f32 %v2260, %v2601
        %v2603 = vpop.f32.mrb[0].mxu0
        %v2604 = vadd.f32 %v2260, %v2603
        %2605 = vmatprep.mubr.f32.mxu0 0.0
        %2606 = vmatmul.mubr.f32.gmra.mrb[0].mxu0 %v2380
        %v2607 = vpop.f32.mrb[0].mxu0
        %v2608 = vadd.f32 %v2265, %v2607
        %v2609 = vpop.f32.mrb[0].mxu0
        %v2610 = vadd.f32 %v2265, %v2609
        %2611 = vmatprep.mubr.f32.mxu0 0.0
        %2612 = vmatmul.mubr.f32.gmra.mrb[0].mxu0 %v2383
        %v2613 = vpop.f32.mrb[0].mxu0
        %v2614 = vadd.f32 %v2270, %v2613
        %v2615 = vpop.f32.mrb[0].mxu0
        %v2616 = vadd.f32 %v2270, %v2615
        %2617 = vmatprep.mubr.f32.mxu0 0.0
        %2618 = vmatmul.mubr.f32.gmra.mrb[0].mxu0 %v2386
        %v2619 = vpop.f32.mrb[0].mxu0
        %v2620 = vadd.f32 %v2275, %v2619
        %v2621 = vpop.f32.mrb[0].mxu0
        %v2622 = vadd.f32 %v2275, %v2621
        %2623 = vmatprep.mubr.f32.mxu0 0.0
        %2624 = vmatmul.mubr.f32.gmra.mrb[0].mxu0 %v2389
        %v2625 = vpop.f32.mrb[0].mxu0
        %v2626 = vadd.f32 %v2280, %v2625
        %v2627 = vpop.f32.mrb[0].mxu0
        %v2628 = vadd.f32 %v2280, %v2627
        %2629 = vmatprep.mubr.f32.mxu0 0.0
        %2630 = vmatmul.mubr.f32.gmra.mrb[0].mxu0 %v2392
        %v2631 = vpop.f32.mrb[0].mxu0
        %v2632 = vadd.f32 %v2285, %v2631
        %v2633 = vpop.f32.mrb[0].mxu0
        %v2634 = vadd.f32 %v2285, %v2633
        %2635 = vmatprep.mubr.f32.mxu0 0.0
        %2636 = vmatmul.mubr.f32.gmra.mrb[0].mxu0 %v2395
        %v2637 = vpop.f32.mrb[0].mxu0
        %v2638 = vadd.f32 %v2290, %v2637
        %v2639 = vpop.f32.mrb[0].mxu0
        %v2640 = vadd.f32 %v2290, %v2639
        %2641 = vmatprep.mubr.f32.mxu0 0.0
        %2642 = vmatmul.mubr.f32.gmra.mrb[0].mxu0 %v2398
        %v2643 = vpop.f32.mrb[0].mxu0
        %v2644 = vadd.f32 %v2295, %v2643
        %v2645 = vpop.f32.mrb[0].mxu0
        %v2646 = vadd.f32 %v2295, %v2645
        %2647 = vmatprep.mubr.f32.mxu0 0.0
        %2648 = vmatmul.mubr.f32.gmra.mrb[0].mxu0 %v2401
        %v2649 = vpop.f32.mrb[0].mxu0
        %v2650 = vadd.f32 %v2300, %v2649
        %v2651 = vpop.f32.mrb[0].mxu0
        %v2652 = vadd.f32 %v2300, %v2651
        %2653 = vmatprep.mubr.f32.mxu0 0.0
        %2654 = vmatmul.mubr.f32.gmra.mrb[0].mxu0 %v2404
        %v2655 = vpop.f32.mrb[0].mxu0
        %v2656 = vadd.f32 %v2305, %v2655
        %v2657 = vpop.f32.mrb[0].mxu0
        %v2658 = vadd.f32 %v2305, %v2657
        %2659 = vmatprep.mubr.f32.mxu0 0.0
        %2660 = vmatmul.mubr.f32.gmra.mrb[0].mxu0 %v2407
        %v2661 = vpop.f32.mrb[0].mxu0
        %v2662 = vadd.f32 %v2310, %v2661
        %v2663 = vpop.f32.mrb[0].mxu0
        %v2664 = vadd.f32 %v2310, %v2663
        %2665 = vdwg.mxu0
        %2666 = vmatprep.subr.mxu0 %v2087
        %2667 = vmatpush1.msra.mxu0 %v2086
        %2668 = vmatprep.subr.mxu0 0.0
        %2669 = vmatpush1.msra.mxu0 0.0
        %2670 = vmatprep.subr.mxu0 0.0
        %2671 = vmatpush1.msra.mxu0 0.0
        %2672 = vmatprep.subr.mxu0 0.0
        %2673 = vmatpush1.msra.mxu0 0.0
        %2674 = vmatprep.subr.mxu0 0.0
        %2675 = vmatpush1.msra.mxu0 0.0
        %2676 = vmatprep.subr.mxu0 0.0
        %2677 = vmatpush1.msra.mxu0 0.0
        %2678 = vmatprep.subr.mxu0 0.0
        %2679 = vmatpush1.msra.mxu0 0.0
        %2680 = vmatprep.subr.mxu0 0.0
        %2681 = vmatpush1.msra.mxu0 0.0
        %2682 = vmatprep.subr.mxu0 0.0
        %2683 = vmatpush1.msra.mxu0 0.0
        %2684 = vmatprep.subr.mxu0 0.0
        %2685 = vmatpush1.msra.mxu0 0.0
        %2686 = vmatprep.subr.mxu0 0.0
        %2687 = vmatpush1.msra.mxu0 0.0
        %2688 = vmatprep.subr.mxu0 0.0
        %2689 = vmatpush1.msra.mxu0 0.0
        %2690 = vmatprep.subr.mxu0 0.0
        %2691 = vmatpush1.msra.mxu0 0.0
        %2692 = vmatprep.subr.mxu0 0.0
        %2693 = vmatpush1.msra.mxu0 0.0
        %2694 = vmatprep.subr.mxu0 0.0
        %2695 = vmatpush1.msra.mxu0 0.0
        %2696 = vmatprep.subr.mxu0 0.0
        %2697 = vmatpush1.msra.mxu0 0.0
        %2698 = vmatprep.subr.mxu0 0.0
        %2699 = vmatpush1.msra.mxu0 0.0
        %2700 = vmatprep.subr.mxu0 0.0
        %2701 = vmatpush1.msra.mxu0 0.0
        %2702 = vmatprep.subr.mxu0 0.0
        %2703 = vmatpush1.msra.mxu0 0.0
        %2704 = vmatprep.subr.mxu0 0.0
        %2705 = vmatpush1.msra.mxu0 0.0
        %2706 = vmatprep.subr.mxu0 0.0
        %2707 = vmatpush1.msra.mxu0 0.0
        %2708 = vmatprep.subr.mxu0 0.0
        %2709 = vmatpush1.msra.mxu0 0.0
        %2710 = vmatprep.subr.mxu0 0.0
        %2711 = vmatpush1.msra.mxu0 0.0
        %2712 = vmatprep.subr.mxu0 0.0
        %2713 = vmatpush1.msra.mxu0 0.0
        %2714 = vmatprep.subr.mxu0 0.0
        %2715 = vmatpush1.msra.mxu0 0.0
        %2716 = vmatprep.subr.mxu0 0.0
        %2717 = vmatpush1.msra.mxu0 0.0
        %2718 = vmatprep.subr.mxu0 0.0
        %2719 = vmatpush1.msra.mxu0 0.0
        %2720 = vmatprep.subr.mxu0 0.0
        %2721 = vmatpush1.msra.mxu0 0.0
        %2722 = vmatprep.subr.mxu0 0.0
        %2723 = vmatpush1.msra.mxu0 0.0
        %2724 = vmatprep.subr.mxu0 0.0
        %2725 = vmatpush1.msra.mxu0 0.0
        %2726 = vmatprep.subr.mxu0 0.0
        %2727 = vmatpush1.msra.mxu0 0.0
        %2728 = vmatprep.subr.mxu0 0.0
        %2729 = vmatpush1.msra.mxu0 0.0
        %2730 = vmatprep.mubr.f32.mxu0 0.0
        %2731 = vmatmul.mubr.f32.gmra.mrb[0].mxu0 %v2314
        %v2732 = vpop.f32.mrb[0].mxu0
        %v2733 = vadd.f32 %v2155, %v2732
        %v2734 = vpop.f32.mrb[0].mxu0
        %v2735 = vadd.f32 %v2155, %v2734
        %2736 = vmatprep.mubr.f32.mxu0 0.0
        %2737 = vmatmul.mubr.f32.gmra.mrb[0].mxu0 %v2317
        %v2738 = vpop.f32.mrb[0].mxu0
        %v2739 = vadd.f32 %v2160, %v2738
        %v2740 = vpop.f32.mrb[0].mxu0
        %v2741 = vadd.f32 %v2160, %v2740
        %2742 = vmatprep.mubr.f32.mxu0 0.0
        %2743 = vmatmul.mubr.f32.gmra.mrb[0].mxu0 %v2320
        %v2744 = vpop.f32.mrb[0].mxu0
        %v2745 = vadd.f32 %v2165, %v2744
        %v2746 = vpop.f32.mrb[0].mxu0
        %v2747 = vadd.f32 %v2165, %v2746
        %2748 = vmatprep.mubr.f32.mxu0 0.0
        %2749 = vmatmul.mubr.f32.gmra.mrb[0].mxu0 %v2323
        %v2750 = vpop.f32.mrb[0].mxu0
        %v2751 = vadd.f32 %v2170, %v2750
        %v2752 = vpop.f32.mrb[0].mxu0
        %v2753 = vadd.f32 %v2170, %v2752
        %2754 = vmatprep.mubr.f32.mxu0 0.0
        %2755 = vmatmul.mubr.f32.gmra.mrb[0].mxu0 %v2326
        %v2756 = vpop.f32.mrb[0].mxu0
        %v2757 = vadd.f32 %v2175, %v2756
        %v2758 = vpop.f32.mrb[0].mxu0
        %v2759 = vadd.f32 %v2175, %v2758
        %2760 = vmatprep.mubr.f32.mxu0 0.0
        %2761 = vmatmul.mubr.f32.gmra.mrb[0].mxu0 %v2329
        %v2762 = vpop.f32.mrb[0].mxu0
        %v2763 = vadd.f32 %v2180, %v2762
        %v2764 = vpop.f32.mrb[0].mxu0
        %v2765 = vadd.f32 %v2180, %v2764
        %2766 = vmatprep.mubr.f32.mxu0 0.0
        %2767 = vmatmul.mubr.f32.gmra.mrb[0].mxu0 %v2332
        %v2768 = vpop.f32.mrb[0].mxu0
        %v2769 = vadd.f32 %v2185, %v2768
        %v2770 = vpop.f32.mrb[0].mxu0
        %v2771 = vadd.f32 %v2185, %v2770
        %2772 = vmatprep.mubr.f32.mxu0 0.0
        %2773 = vmatmul.mubr.f32.gmra.mrb[0].mxu0 %v2335
        %v2774 = vpop.f32.mrb[0].mxu0
        %v2775 = vadd.f32 %v2190, %v2774
        %v2776 = vpop.f32.mrb[0].mxu0
        %v2777 = vadd.f32 %v2190, %v2776
        %2778 = vmatprep.mubr.f32.mxu0 0.0
        %2779 = vmatmul.mubr.f32.gmra.mrb[0].mxu0 %v2338
        %v2780 = vpop.f32.mrb[0].mxu0
        %v2781 = vadd.f32 %v2195, %v2780
        %v2782 = vpop.f32.mrb[0].mxu0
        %v2783 = vadd.f32 %v2195, %v2782
        %2784 = vmatprep.mubr.f32.mxu0 0.0
        %2785 = vmatmul.mubr.f32.gmra.mrb[0].mxu0 %v2341
        %v2786 = vpop.f32.mrb[0].mxu0
        %v2787 = vadd.f32 %v2200, %v2786
        %v2788 = vpop.f32.mrb[0].mxu0
        %v2789 = vadd.f32 %v2200, %v2788
        %2790 = vmatprep.mubr.f32.mxu0 0.0
        %2791 = vmatmul.mubr.f32.gmra.mrb[0].mxu0 %v2344
        %v2792 = vpop.f32.mrb[0].mxu0
        %v2793 = vadd.f32 %v2205, %v2792
        %v2794 = vpop.f32.mrb[0].mxu0
        %v2795 = vadd.f32 %v2205, %v2794
        %2796 = vmatprep.mubr.f32.mxu0 0.0
        %2797 = vmatmul.mubr.f32.gmra.mrb[0].mxu0 %v2347
        %v2798 = vpop.f32.mrb[0].mxu0
        %v2799 = vadd.f32 %v2210, %v2798
        %v2800 = vpop.f32.mrb[0].mxu0
        %v2801 = vadd.f32 %v2210, %v2800
        %2802 = vmatprep.mubr.f32.mxu0 0.0
        %2803 = vmatmul.mubr.f32.gmra.mrb[0].mxu0 %v2350
        %v2804 = vpop.f32.mrb[0].mxu0
        %v2805 = vadd.f32 %v2215, %v2804
        %v2806 = vpop.f32.mrb[0].mxu0
        %v2807 = vadd.f32 %v2215, %v2806
        %2808 = vmatprep.mubr.f32.mxu0 0.0
        %2809 = vmatmul.mubr.f32.gmra.mrb[0].mxu0 %v2353
        %v2810 = vpop.f32.mrb[0].mxu0
        %v2811 = vadd.f32 %v2220, %v2810
        %v2812 = vpop.f32.mrb[0].mxu0
        %v2813 = vadd.f32 %v2220, %v2812
        %2814 = vmatprep.mubr.f32.mxu0 0.0
        %2815 = vmatmul.mubr.f32.gmra.mrb[0].mxu0 %v2356
        %v2816 = vpop.f32.mrb[0].mxu0
        %v2817 = vadd.f32 %v2225, %v2816
        %v2818 = vpop.f32.mrb[0].mxu0
        %v2819 = vadd.f32 %v2225, %v2818
        %2820 = vmatprep.mubr.f32.mxu0 0.0
        %2821 = vmatmul.mubr.f32.gmra.mrb[0].mxu0 %v2359
        %v2822 = vpop.f32.mrb[0].mxu0
        %v2823 = vadd.f32 %v2230, %v2822
        %v2824 = vpop.f32.mrb[0].mxu0
        %v2825 = vadd.f32 %v2230, %v2824
        %2826 = vmatprep.mubr.f32.mxu0 0.0
        %2827 = vmatmul.mubr.f32.gmra.mrb[0].mxu0 %v2362
        %v2828 = vpop.f32.mrb[0].mxu0
        %v2829 = vadd.f32 %v2235, %v2828
        %v2830 = vpop.f32.mrb[0].mxu0
        %v2831 = vadd.f32 %v2235, %v2830
        %2832 = vmatprep.mubr.f32.mxu0 0.0
        %2833 = vmatmul.mubr.f32.gmra.mrb[0].mxu0 %v2365
        %v2834 = vpop.f32.mrb[0].mxu0
        %v2835 = vadd.f32 %v2240, %v2834
        %v2836 = vpop.f32.mrb[0].mxu0
        %v2837 = vadd.f32 %v2240, %v2836
        %2838 = vmatprep.mubr.f32.mxu0 0.0
        %2839 = vmatmul.mubr.f32.gmra.mrb[0].mxu0 %v2368
        %v2840 = vpop.f32.mrb[0].mxu0
        %v2841 = vadd.f32 %v2245, %v2840
        %v2842 = vpop.f32.mrb[0].mxu0
        %v2843 = vadd.f32 %v2245, %v2842
        %2844 = vmatprep.mubr.f32.mxu0 0.0
        %2845 = vmatmul.mubr.f32.gmra.mrb[0].mxu0 %v2371
        %v2846 = vpop.f32.mrb[0].mxu0
        %v2847 = vadd.f32 %v2250, %v2846
        %v2848 = vpop.f32.mrb[0].mxu0
        %v2849 = vadd.f32 %v2250, %v2848
        %2850 = vmatprep.mubr.f32.mxu0 0.0
        %2851 = vmatmul.mubr.f32.gmra.mrb[0].mxu0 %v2374
        %v2852 = vpop.f32.mrb[0].mxu0
        %v2853 = vadd.f32 %v2255, %v2852
        %v2854 = vpop.f32.mrb[0].mxu0
        %v2855 = vadd.f32 %v2255, %v2854
        %2856 = vmatprep.mubr.f32.mxu0 0.0
        %2857 = vmatmul.mubr.f32.gmra.mrb[0].mxu0 %v2377
        %v2858 = vpop.f32.mrb[0].mxu0
        %v2859 = vadd.f32 %v2260, %v2858
        %v2860 = vpop.f32.mrb[0].mxu0
        %v2861 = vadd.f32 %v2260, %v2860
        %2862 = vmatprep.mubr.f32.mxu0 0.0
        %2863 = vmatmul.mubr.f32.gmra.mrb[0].mxu0 %v2380
        %v2864 = vpop.f32.mrb[0].mxu0
        %v2865 = vadd.f32 %v2265, %v2864
        %v2866 = vpop.f32.mrb[0].mxu0
        %v2867 = vadd.f32 %v2265, %v2866
        %2868 = vmatprep.mubr.f32.mxu0 0.0
        %2869 = vmatmul.mubr.f32.gmra.mrb[0].mxu0 %v2383
        %v2870 = vpop.f32.mrb[0].mxu0
        %v2871 = vadd.f32 %v2270, %v2870
        %v2872 = vpop.f32.mrb[0].mxu0
        %v2873 = vadd.f32 %v2270, %v2872
        %2874 = vmatprep.mubr.f32.mxu0 0.0
        %2875 = vmatmul.mubr.f32.gmra.mrb[0].mxu0 %v2386
        %v2876 = vpop.f32.mrb[0].mxu0
        %v2877 = vadd.f32 %v2275, %v2876
        %v2878 = vpop.f32.mrb[0].mxu0
        %v2879 = vadd.f32 %v2275, %v2878
        %2880 = vmatprep.mubr.f32.mxu0 0.0
        %2881 = vmatmul.mubr.f32.gmra.mrb[0].mxu0 %v2389
        %v2882 = vpop.f32.mrb[0].mxu0
        %v2883 = vadd.f32 %v2280, %v2882
        %v2884 = vpop.f32.mrb[0].mxu0
        %v2885 = vadd.f32 %v2280, %v2884
        %2886 = vmatprep.mubr.f32.mxu0 0.0
        %2887 = vmatmul.mubr.f32.gmra.mrb[0].mxu0 %v2392
        %v2888 = vpop.f32.mrb[0].mxu0
        %v2889 = vadd.f32 %v2285, %v2888
        %v2890 = vpop.f32.mrb[0].mxu0
        %v2891 = vadd.f32 %v2285, %v2890
        %2892 = vmatprep.mubr.f32.mxu0 0.0
        %2893 = vmatmul.mubr.f32.gmra.mrb[0].mxu0 %v2395
        %v2894 = vpop.f32.mrb[0].mxu0
        %v2895 = vadd.f32 %v2290, %v2894
        %v2896 = vpop.f32.mrb[0].mxu0
        %v2897 = vadd.f32 %v2290, %v2896
        %2898 = vmatprep.mubr.f32.mxu0 0.0
        %2899 = vmatmul.mubr.f32.gmra.mrb[0].mxu0 %v2398
        %v2900 = vpop.f32.mrb[0].mxu0
        %v2901 = vadd.f32 %v2295, %v2900
        %v2902 = vpop.f32.mrb[0].mxu0
        %v2903 = vadd.f32 %v2295, %v2902
        %2904 = vmatprep.mubr.f32.mxu0 0.0
        %2905 = vmatmul.mubr.f32.gmra.mrb[0].mxu0 %v2401
        %v2906 = vpop.f32.mrb[0].mxu0
        %v2907 = vadd.f32 %v2300, %v2906
        %v2908 = vpop.f32.mrb[0].mxu0
        %v2909 = vadd.f32 %v2300, %v2908
        %2910 = vmatprep.mubr.f32.mxu0 0.0
        %2911 = vmatmul.mubr.f32.gmra.mrb[0].mxu0 %v2404
        %v2912 = vpop.f32.mrb[0].mxu0
        %v2913 = vadd.f32 %v2305, %v2912
        %v2914 = vpop.f32.mrb[0].mxu0
        %v2915 = vadd.f32 %v2305, %v2914
        %2916 = vmatprep.mubr.f32.mxu0 0.0
        %2917 = vmatmul.mubr.f32.gmra.mrb[0].mxu0 %v2407
        %v2918 = vpop.f32.mrb[0].mxu0
        %v2919 = vadd.f32 %v2310, %v2918
        %v2920 = vpop.f32.mrb[0].mxu0
        %v2921 = vadd.f32 %v2310, %v2920
        %2922 = vdwg.mxu0
        %v2923 = vmax.f32 %v2476, 0.0
        %v2924 = vmax.f32 %v2478, 0.0
        %v2925 = vmax.f32 %v2733, 0.0
        %v2926 = vmax.f32 %v2735, 0.0
        %v2927 = vmax.f32 %v2482, 0.0
        %v2928 = vmax.f32 %v2484, 0.0
        %v2929 = vmax.f32 %v2739, 0.0
        %v2930 = vmax.f32 %v2741, 0.0
        %v2931 = vmax.f32 %v2488, 0.0
        %v2932 = vmax.f32 %v2490, 0.0
        %v2933 = vmax.f32 %v2745, 0.0
        %v2934 = vmax.f32 %v2747, 0.0
        %v2935 = vmax.f32 %v2494, 0.0
        %v2936 = vmax.f32 %v2496, 0.0
        %v2937 = vmax.f32 %v2751, 0.0
        %v2938 = vmax.f32 %v2753, 0.0
        %v2939 = vmax.f32 %v2500, 0.0
        %v2940 = vmax.f32 %v2502, 0.0
        %v2941 = vmax.f32 %v2757, 0.0
        %v2942 = vmax.f32 %v2759, 0.0
        %v2943 = vmax.f32 %v2506, 0.0
        %v2944 = vmax.f32 %v2508, 0.0
        %v2945 = vmax.f32 %v2763, 0.0
        %v2946 = vmax.f32 %v2765, 0.0
        %v2947 = vmax.f32 %v2512, 0.0
        %v2948 = vmax.f32 %v2514, 0.0
        %v2949 = vmax.f32 %v2769, 0.0
        %v2950 = vmax.f32 %v2771, 0.0
        %v2951 = vmax.f32 %v2518, 0.0
        %v2952 = vmax.f32 %v2520, 0.0
        %v2953 = vmax.f32 %v2775, 0.0
        %v2954 = vmax.f32 %v2777, 0.0
        %v2955 = vmax.f32 %v2524, 0.0
        %v2956 = vmax.f32 %v2526, 0.0
        %v2957 = vmax.f32 %v2781, 0.0
        %v2958 = vmax.f32 %v2783, 0.0
        %v2959 = vmax.f32 %v2530, 0.0
        %v2960 = vmax.f32 %v2532, 0.0
        %v2961 = vmax.f32 %v2787, 0.0
        %v2962 = vmax.f32 %v2789, 0.0
        %v2963 = vmax.f32 %v2536, 0.0
        %v2964 = vmax.f32 %v2538, 0.0
        %v2965 = vmax.f32 %v2793, 0.0
        %v2966 = vmax.f32 %v2795, 0.0
        %v2967 = vmax.f32 %v2542, 0.0
        %v2968 = vmax.f32 %v2544, 0.0
        %v2969 = vmax.f32 %v2799, 0.0
        %v2970 = vmax.f32 %v2801, 0.0
        %v2971 = vmax.f32 %v2548, 0.0
        %v2972 = vmax.f32 %v2550, 0.0
        %v2973 = vmax.f32 %v2805, 0.0
        %v2974 = vmax.f32 %v2807, 0.0
        %v2975 = vmax.f32 %v2554, 0.0
        %v2976 = vmax.f32 %v2556, 0.0
        %v2977 = vmax.f32 %v2811, 0.0
        %v2978 = vmax.f32 %v2813, 0.0
        %v2979 = vmax.f32 %v2560, 0.0
        %v2980 = vmax.f32 %v2562, 0.0
        %v2981 = vmax.f32 %v2817, 0.0
        %v2982 = vmax.f32 %v2819, 0.0
        %v2983 = vmax.f32 %v2566, 0.0
        %v2984 = vmax.f32 %v2568, 0.0
        %v2985 = vmax.f32 %v2823, 0.0
        %v2986 = vmax.f32 %v2825, 0.0
        %v2987 = vmax.f32 %v2572, 0.0
        %v2988 = vmax.f32 %v2574, 0.0
        %v2989 = vmax.f32 %v2829, 0.0
        %v2990 = vmax.f32 %v2831, 0.0
        %v2991 = vmax.f32 %v2578, 0.0
        %v2992 = vmax.f32 %v2580, 0.0
        %v2993 = vmax.f32 %v2835, 0.0
        %v2994 = vmax.f32 %v2837, 0.0
        %v2995 = vmax.f32 %v2584, 0.0
        %v2996 = vmax.f32 %v2586, 0.0
        %v2997 = vmax.f32 %v2841, 0.0
        %v2998 = vmax.f32 %v2843, 0.0
        %v2999 = vmax.f32 %v2590, 0.0
        %v3000 = vmax.f32 %v2592, 0.0
        %v3001 = vmax.f32 %v2847, 0.0
        %v3002 = vmax.f32 %v2849, 0.0
        %v3003 = vmax.f32 %v2596, 0.0
        %v3004 = vmax.f32 %v2598, 0.0
        %v3005 = vmax.f32 %v2853, 0.0
        %v3006 = vmax.f32 %v2855, 0.0
        %v3007 = vmax.f32 %v2602, 0.0
        %v3008 = vmax.f32 %v2604, 0.0
        %v3009 = vmax.f32 %v2859, 0.0
        %v3010 = vmax.f32 %v2861, 0.0
        %v3011 = vmax.f32 %v2608, 0.0
        %v3012 = vmax.f32 %v2610, 0.0
        %v3013 = vmax.f32 %v2865, 0.0
        %v3014 = vmax.f32 %v2867, 0.0
        %v3015 = vmax.f32 %v2614, 0.0
        %v3016 = vmax.f32 %v2616, 0.0
        %v3017 = vmax.f32 %v2871, 0.0
        %v3018 = vmax.f32 %v2873, 0.0
        %v3019 = vmax.f32 %v2620, 0.0
        %v3020 = vmax.f32 %v2622, 0.0
        %v3021 = vmax.f32 %v2877, 0.0
        %v3022 = vmax.f32 %v2879, 0.0
        %v3023 = vmax.f32 %v2626, 0.0
        %v3024 = vmax.f32 %v2628, 0.0
        %v3025 = vmax.f32 %v2883, 0.0
        %v3026 = vmax.f32 %v2885, 0.0
        %v3027 = vmax.f32 %v2632, 0.0
        %v3028 = vmax.f32 %v2634, 0.0
        %v3029 = vmax.f32 %v2889, 0.0
        %v3030 = vmax.f32 %v2891, 0.0
        %v3031 = vmax.f32 %v2638, 0.0
        %v3032 = vmax.f32 %v2640, 0.0
        %v3033 = vmax.f32 %v2895, 0.0
        %v3034 = vmax.f32 %v2897, 0.0
        %v3035 = vmax.f32 %v2644, 0.0
        %v3036 = vmax.f32 %v2646, 0.0
        %v3037 = vmax.f32 %v2901, 0.0
        %v3038 = vmax.f32 %v2903, 0.0
        %v3039 = vmax.f32 %v2650, 0.0
        %v3040 = vmax.f32 %v2652, 0.0
        %v3041 = vmax.f32 %v2907, 0.0
        %v3042 = vmax.f32 %v2909, 0.0
        %v3043 = vmax.f32 %v2656, 0.0
        %v3044 = vmax.f32 %v2658, 0.0
        %v3045 = vmax.f32 %v2913, 0.0
        %v3046 = vmax.f32 %v2915, 0.0
        %v3047 = vmax.f32 %v2662, 0.0
        %v3048 = vmax.f32 %v2664, 0.0
        %v3049 = vmax.f32 %v2919, 0.0
        %v3050 = vmax.f32 %v2921, 0.0
        %v3051 = vld [vmem:[%s11] sm:$0x3]
        %v3052 = vld [vmem:[#allocation2] sm:$0x1]
        %3054 = vset.pattern.permute.xlu0 0
        %3055 = vperm.xlu0 %3054, %v3052
        %v3056 = vpop.permute.xlu0 %3055
        %v3058 = vlaneseq
        %v3059 = vshrl.u32 %v3058, 7
        %v3060 = vsub.s32 0, %v3059
        %v3061 = vrot.slane %v3056, %v3060
        %v3063 = vlaneseq
        %v3064 = vshrl.u32 %v3063, 7
        %v3065 = vsub.s32 0, %v3064
        %v3066 = vrot.slane %v3051, %v3065
        %v3067 = vlaneseq
        %v3068 = vshrl.u32 %v3067, 7
        %v3069 = vsub.s32 1, %v3068
        %v3070 = vrot.slane %v3051, %v3069
        %3073 = vmatprep.subr.mxu0 %v2924
        %3074 = vmatpush1.msra.mxu0 %v2923
        %3075 = vmatprep.subr.mxu0 %v2928
        %3076 = vmatpush1.msra.mxu0 %v2927
        %3077 = vmatprep.subr.mxu0 %v2932
        %3078 = vmatpush1.msra.mxu0 %v2931
        %3079 = vmatprep.subr.mxu0 %v2936
        %3080 = vmatpush1.msra.mxu0 %v2935
        %3081 = vmatprep.subr.mxu0 %v2940
        %3082 = vmatpush1.msra.mxu0 %v2939
        %3083 = vmatprep.subr.mxu0 %v2944
        %3084 = vmatpush1.msra.mxu0 %v2943
        %3085 = vmatprep.subr.mxu0 %v2948
        %3086 = vmatpush1.msra.mxu0 %v2947
        %3087 = vmatprep.subr.mxu0 %v2952
        %3088 = vmatpush1.msra.mxu0 %v2951
        %3089 = vmatprep.subr.mxu0 %v2956
        %3090 = vmatpush1.msra.mxu0 %v2955
        %3091 = vmatprep.subr.mxu0 %v2960
        %3092 = vmatpush1.msra.mxu0 %v2959
        %3093 = vmatprep.subr.mxu0 %v2964
        %3094 = vmatpush1.msra.mxu0 %v2963
        %3095 = vmatprep.subr.mxu0 %v2968
        %3096 = vmatpush1.msra.mxu0 %v2967
        %3097 = vmatprep.subr.mxu0 %v2972
        %3098 = vmatpush1.msra.mxu0 %v2971
        %3099 = vmatprep.subr.mxu0 %v2976
        %3100 = vmatpush1.msra.mxu0 %v2975
        %3101 = vmatprep.subr.mxu0 %v2980
        %3102 = vmatpush1.msra.mxu0 %v2979
        %3103 = vmatprep.subr.mxu0 %v2984
        %3104 = vmatpush1.msra.mxu0 %v2983
        %3105 = vmatprep.subr.mxu0 %v2988
        %3106 = vmatpush1.msra.mxu0 %v2987
        %3107 = vmatprep.subr.mxu0 %v2992
        %3108 = vmatpush1.msra.mxu0 %v2991
        %3109 = vmatprep.subr.mxu0 %v2996
        %3110 = vmatpush1.msra.mxu0 %v2995
        %3111 = vmatprep.subr.mxu0 %v3000
        %3112 = vmatpush1.msra.mxu0 %v2999
        %3113 = vmatprep.subr.mxu0 %v3004
        %3114 = vmatpush1.msra.mxu0 %v3003
        %3115 = vmatprep.subr.mxu0 %v3008
        %3116 = vmatpush1.msra.mxu0 %v3007
        %3117 = vmatprep.subr.mxu0 %v3012
        %3118 = vmatpush1.msra.mxu0 %v3011
        %3119 = vmatprep.subr.mxu0 %v3016
        %3120 = vmatpush1.msra.mxu0 %v3015
        %3121 = vmatprep.subr.mxu0 %v3020
        %3122 = vmatpush1.msra.mxu0 %v3019
        %3123 = vmatprep.subr.mxu0 %v3024
        %3124 = vmatpush1.msra.mxu0 %v3023
        %3125 = vmatprep.subr.mxu0 %v3028
        %3126 = vmatpush1.msra.mxu0 %v3027
        %3127 = vmatprep.subr.mxu0 %v3032
        %3128 = vmatpush1.msra.mxu0 %v3031
        %3129 = vmatprep.subr.mxu0 %v3036
        %3130 = vmatpush1.msra.mxu0 %v3035
        %3131 = vmatprep.subr.mxu0 %v3040
        %3132 = vmatpush1.msra.mxu0 %v3039
        %3133 = vmatprep.subr.mxu0 %v3044
        %3134 = vmatpush1.msra.mxu0 %v3043
        %3135 = vmatprep.subr.mxu0 %v3048
        %3136 = vmatpush1.msra.mxu0 %v3047
        %3137 = vmatprep.mubr.f32.mxu0 %v3070
        %3138 = vmatmul.mubr.f32.gmra.mrb[0].mxu0 %v3066
        %v3139 = vpop.f32.mrb[0].mxu0
        %v3140 = vadd.f32 %v3061, %v3139
        %v3141 = vpop.f32.mrb[0].mxu0
        %v3142 = vadd.f32 %v3061, %v3141
        %3143 = vdwg.mxu0
        %3144 = vmatprep.subr.mxu0 %v2926
        %3145 = vmatpush1.msra.mxu0 %v2925
        %3146 = vmatprep.subr.mxu0 %v2930
        %3147 = vmatpush1.msra.mxu0 %v2929
        %3148 = vmatprep.subr.mxu0 %v2934
        %3149 = vmatpush1.msra.mxu0 %v2933
        %3150 = vmatprep.subr.mxu0 %v2938
        %3151 = vmatpush1.msra.mxu0 %v2937
        %3152 = vmatprep.subr.mxu0 %v2942
        %3153 = vmatpush1.msra.mxu0 %v2941
        %3154 = vmatprep.subr.mxu0 %v2946
        %3155 = vmatpush1.msra.mxu0 %v2945
        %3156 = vmatprep.subr.mxu0 %v2950
        %3157 = vmatpush1.msra.mxu0 %v2949
        %3158 = vmatprep.subr.mxu0 %v2954
        %3159 = vmatpush1.msra.mxu0 %v2953
        %3160 = vmatprep.subr.mxu0 %v2958
        %3161 = vmatpush1.msra.mxu0 %v2957
        %3162 = vmatprep.subr.mxu0 %v2962
        %3163 = vmatpush1.msra.mxu0 %v2961
        %3164 = vmatprep.subr.mxu0 %v2966
        %3165 = vmatpush1.msra.mxu0 %v2965
        %3166 = vmatprep.subr.mxu0 %v2970
        %3167 = vmatpush1.msra.mxu0 %v2969
        %3168 = vmatprep.subr.mxu0 %v2974
        %3169 = vmatpush1.msra.mxu0 %v2973
        %3170 = vmatprep.subr.mxu0 %v2978
        %3171 = vmatpush1.msra.mxu0 %v2977
        %3172 = vmatprep.subr.mxu0 %v2982
        %3173 = vmatpush1.msra.mxu0 %v2981
        %3174 = vmatprep.subr.mxu0 %v2986
        %3175 = vmatpush1.msra.mxu0 %v2985
        %3176 = vmatprep.subr.mxu0 %v2990
        %3177 = vmatpush1.msra.mxu0 %v2989
        %3178 = vmatprep.subr.mxu0 %v2994
        %3179 = vmatpush1.msra.mxu0 %v2993
        %3180 = vmatprep.subr.mxu0 %v2998
        %3181 = vmatpush1.msra.mxu0 %v2997
        %3182 = vmatprep.subr.mxu0 %v3002
        %3183 = vmatpush1.msra.mxu0 %v3001
        %3184 = vmatprep.subr.mxu0 %v3006
        %3185 = vmatpush1.msra.mxu0 %v3005
        %3186 = vmatprep.subr.mxu0 %v3010
        %3187 = vmatpush1.msra.mxu0 %v3009
        %3188 = vmatprep.subr.mxu0 %v3014
        %3189 = vmatpush1.msra.mxu0 %v3013
        %3190 = vmatprep.subr.mxu0 %v3018
        %3191 = vmatpush1.msra.mxu0 %v3017
        %3192 = vmatprep.subr.mxu0 %v3022
        %3193 = vmatpush1.msra.mxu0 %v3021
        %3194 = vmatprep.subr.mxu0 %v3026
        %3195 = vmatpush1.msra.mxu0 %v3025
        %3196 = vmatprep.subr.mxu0 %v3030
        %3197 = vmatpush1.msra.mxu0 %v3029
        %3198 = vmatprep.subr.mxu0 %v3034
        %3199 = vmatpush1.msra.mxu0 %v3033
        %3200 = vmatprep.subr.mxu0 %v3038
        %3201 = vmatpush1.msra.mxu0 %v3037
        %3202 = vmatprep.subr.mxu0 %v3042
        %3203 = vmatpush1.msra.mxu0 %v3041
        %3204 = vmatprep.subr.mxu0 %v3046
        %3205 = vmatpush1.msra.mxu0 %v3045
        %3206 = vmatprep.subr.mxu0 %v3050
        %3207 = vmatpush1.msra.mxu0 %v3049
        %3208 = vmatprep.mubr.f32.mxu0 %v3070
        %3209 = vmatmul.mubr.f32.gmra.mrb[0].mxu0 %v3066
        %v3210 = vpop.f32.mrb[0].mxu0
        %v3211 = vadd.f32 %v3061, %v3210
        %v3212 = vpop.f32.mrb[0].mxu0
        %v3213 = vadd.f32 %v3061, %v3212
        %3214 = vdwg.mxu0
        %v3219 = vcombine.low %v3140, %v3142
        %v3220 = vcombine.low %v3211, %v3213
        %v3222 = vunpack.c.l.s4 1966171168
        %v3223 = vunpack.c.0.s8 %v3222
        %v3224 = vlaneseq
        %v3225 = vshrl.u32 %v3224, 7
        %v3226 = vsub.s32 %v3223, %v3225
        %v3227 = vrot.slane %v3219, %v3226
        %v3229 = vunpack.c.l.s4 1966171168
        %v3230 = vunpack.c.0.s8 %v3229
        %v3231 = vlaneseq
        %v3232 = vshrl.u32 %v3231, 7
        %v3233 = vsub.s32 %v3230, %v3232
        %v3234 = vrot.slane %v3220, %v3233
        %v3235 = vcombine.low %v3227, %v3234
        %v3237 = vunpack.c.l.s4 1966171168
        %v3238 = vunpack.c.0.s8 %v3237
        %v3239 = vlaneseq
        %v3240 = vshrl.u32 %v3239, 7
        %v3241 = vsub.s32 %v3238, %v3240
        %v3242 = vrot.slane %v3235, %v3241
        %v3244 = vlaneseq
        %vm3245 = vcmp.ge.s32.totalorder %v3244, 0
        %vm3246 = vcmp.lt.s32.totalorder %v3244, 512
        %vm3247 = vmand %vm3245, %vm3246
        %3248 = vst.msk [vmem:[%s436] sm:$0xf] %vm3247, %v3242
        %s3249 = sand.u32 %s315, 1
        %s3250 = scalar_lea.sflag [#allocation4], %s3249
        %s3251 = sand.u32 %s315, 1
        %s3252 = smul.addr %s3251, 4
        %s3253 = scalar_lea.vmem [#allocation3], %s3252
        // Predicated region
        $region73: #{tpu_custom_call.1} parent=71 // pred_check
          %p3254 = pneg %p325
        $region74: #{tpu_custom_call.1} parent=71 // pred_check_branch
          %3256 = sbr.rel (%p3254) target = $region76
        $region75: #{tpu_custom_call.1} parent=71 // pred_region
          %s3257 = smul.u32 4, %s29
          %s3259 = ssub.s32 64, 64
          %3260 = vsyncadd %s3250, %s3259
          %s3261 = smul.addr %s3257, 16
          %s3262 = scalar_lea.hbm %s13, %s3261
          %s3264 = sshll.u32 %s3253, 4
          %s3265 = int_to_ptr.vmem [resolvable:$true] %s3264
          %3267 = dma.vmem_to_hbm [thread:$0]  %s3265, 64, %s3262, %s3250
        $region76: #{tpu_custom_call.1} parent=71 // pred_fallthru
          _
      $region72: #{tpu_custom_call.1} parent=5 // pred_fallthru
        _
      %p3268 = scmp.le.s32.totalorder 2, %s24
      // Predicated region
      $region77: #{tpu_custom_call.1} parent=5 // pred_check
        %p3269 = pneg %p3268
      $region78: #{tpu_custom_call.1} parent=5 // pred_check_branch
        %3271 = sbr.rel (%p3269) target = $region80
      $region79: #{tpu_custom_call.1} parent=5 // pred_region
        %s3272 = ssub.s32 %s24, 2
        // Predicated region
        $region81: #{tpu_custom_call.1} parent=79 // pred_check
          %p3273 = pneg %p331
        $region82: #{tpu_custom_call.1} parent=79 // pred_check_branch
          %3275 = sbr.rel (%p3273) target = $region84
        $region83: #{tpu_custom_call.1} parent=79 // pred_region
          %s3276 = sand.u32 %s316, 1
          %s3277 = scalar_lea.sflag [#allocation4], %s3276
          %s3278 = sand.u32 %s316, 1
          %s3279 = smul.addr %s3278, 4
          %s3280 = scalar_lea.vmem [#allocation3], %s3279
          %3281 = dma.done %s3277, 64
        $region84: #{tpu_custom_call.1} parent=79 // pred_fallthru
          _
      $region80: #{tpu_custom_call.1} parent=5 // pred_fallthru
        _
    $region6: #{tpu_custom_call.1} parent=1 // loop_footer
      %s28 = sadd.s32 1, %s24
    $region7: #{tpu_custom_call.1} parent=1 // loop_footer_branch
      %23 = sbr.rel target = $region3
    $region8: #{tpu_custom_call.1} parent=1 // loop_exit
      _
    %3282 = vsyncpa [#allocation4], 1
    %s3283 = scalar_lea.sflag [#allocation4], 1
    %3284 = vsyncpa %s3283, 1

</llo_original>
